<compile_context>
chip_gen: v6e
topology: v6e:2x2x1
jax: 0.10.0
libtpu: 0.0.40
codegen_flags: <defaults>
</compile_context>

<pallas_src>
import jax
import jax.numpy as jnp
from jax.experimental import pallas as pl
from jax.experimental.pallas import tpu as pltpu

BERT_DIM = 768
HIDDEN = 32                 # hidden_size
GATE = 3 * HIDDEN           # 96
GATE_PAD = 128              # gate dim zero-padded to a full vreg lane width
MLP_HIDDEN = 50
MLP_PAD = 128               # MLP hidden zero-padded to a full vreg lane width
BATCH = 1                   # torch.cat in forward() only works for batch_size == 1
NUM_COMMANDS = 8

_VMEM = pl.BlockSpec(memory_space=pltpu.MemorySpace.VMEM)


# ----------------------------------------------------------------------------
# Fused kernel: 4 GRUs (PyTorch gate order [r|z|n]) + value head + command MLP
# + softmax probs.  Everything fits comfortably in VMEM; no grid.
# ----------------------------------------------------------------------------
def bert_gru_kernel(x_cmd_ref, x_sdi_ref, w_ih_ref, b_ih_ref, b_hh_ref, w_hh_ref,
                    wv_ref, bv_ref, w1s_ref, w1c_ref, b1_ref, w2_ref, b2_ref,
                    value_ref, scores_ref, probs_ref):
    f32 = jnp.float32
    H = HIDDEN

    def gru_gates(gx, gh):
        # PyTorch gate order [r | z | n]; b_hn stays inside the r * (.) term.
        r = jax.nn.sigmoid(gx[:, 0:H] + gh[:, 0:H])
        z = jax.nn.sigmoid(gx[:, H:2 * H] + gh[:, H:2 * H])
        n = jnp.tanh(gx[:, 2 * H:3 * H] + r * gh[:, 2 * H:3 * H])
        return z, n

    # ---- observation / descriptions / inventory GRUs: T == 1, h0 == 0 ------
    # With h0 = 0:  gh = b_hh  and  h1 = (1 - z) * n   (no recurrent matmul, no loop).
    sdi_h = []
    for g in range(3):
        gx = jnp.dot(x_sdi_ref[pl.ds(g, 1), :], w_ih_ref[g],
                     preferred_element_type=f32) + b_ih_ref[pl.ds(g, 1), :]   # (1, 128)
        z, n = gru_gates(gx, b_hh_ref[pl.ds(g, 1), :])
        sdi_h.append((1.0 - z) * n)                                           # (1, H)
    obs_h, desc_h, inv_h = sdi_h

    # ---- commands GRU: hoisted input projection + fully unrolled recurrence -
    T = x_cmd_ref.shape[0]
    gx_cmd = jnp.dot(x_cmd_ref[...], w_ih_ref[3],
                     preferred_element_type=f32) + b_ih_ref[pl.ds(3, 1), :]   # (T, 128)
    b_hh_c = b_hh_ref[pl.ds(3, 1), :]                                         # (1, 128)
    w_hh_c = w_hh_ref[...]                                                    # (H, 128)

    z, n = gru_gates(gx_cmd[0:1, :], b_hh_c)      # step 0: h0 == 0  =>  gh = b_hh
    h = (1.0 - z) * n
    cmd_rows = [h]
    for t in range(1, T):                         # static unroll, T <= 8
        gh = jnp.dot(h, w_hh_c, preferred_element_type=f32) + b_hh_c
        z, n = gru_gates(gx_cmd[t:t + 1, :], gh)
        h = (1.0 - z) * n + z * h
        cmd_rows.append(h)
    cmd_h = jnp.concatenate(cmd_rows, axis=0)     # (T, H), stays in vregs

    # ---- heads --------------------------------------------------------------
    state = jnp.concatenate([obs_h, desc_h, inv_h], axis=1)                   # (1, 3H)
    value_ref[...] = jnp.dot(state, wv_ref[...],
                             preferred_element_type=f32) + bv_ref[...]        # (1, 1)

    # state contribution to linear1 computed once, broadcast-added over the T commands
    state_part = jnp.dot(state, w1s_ref[...],
                         preferred_element_type=f32) + b1_ref[...]            # (1, 128)
    hid = jnp.maximum(
        state_part + jnp.dot(cmd_h, w1c_ref[...], preferred_element_type=f32),
        0.0)                                                                  # (T, 128)
    sc = jnp.dot(hid, w2_ref[...], preferred_element_type=f32) + b2_ref[...]  # (T, 1)
    scores_ref[...] = sc

    # softmax over the command axis
    m = jnp.max(sc, axis=0, keepdims=True)
    e = jnp.exp(sc - m)
    probs_ref[...] = e / jnp.sum(e, axis=0, keepdims=True)


def bert_gru_pallas(pparams, obs_cls, desc_cls, inv_cls, cmd_cls):
    T = cmd_cls.shape[0]
    x_sdi = jnp.concatenate([obs_cls, desc_cls, inv_cls], axis=0).astype(jnp.bfloat16)
    x_cmd = cmd_cls.astype(jnp.bfloat16)
    value, scores, probs = pl.pallas_call(
        bert_gru_kernel,
        out_shape=(jax.ShapeDtypeStruct((1, 1), jnp.float32),   # value
                   jax.ShapeDtypeStruct((T, 1), jnp.float32),   # scores
                   jax.ShapeDtypeStruct((T, 1), jnp.float32)),  # probs
        in_specs=[_VMEM] * 13,
        out_specs=(_VMEM, _VMEM, _VMEM),
    )(x_cmd, x_sdi,
      pparams["w_ih"], pparams["b_ih"], pparams["b_hh"], pparams["w_hh_cmd"],
      pparams["wv"], pparams["bv"],
      pparams["w1_state"], pparams["w1_cmd"], pparams["b1"],
      pparams["w2"], pparams["b2"])
    return value, scores, probs


# ----------------------------------------------------------------------------
# Parameter construction (torch layout) + one-time packing for the kernel.
# ----------------------------------------------------------------------------
def init_params(key):
    ks = jax.random.split(key, 32)
    k = iter(ks)

    def u(shape, scale):
        return jax.random.uniform(next(k), shape, jnp.float32, -scale, scale)

    sH = 1.0 / jnp.sqrt(HIDDEN)
    params = {}
    for name in ("observation", "descriptions", "inventory", "commands"):
        params[name] = dict(
            w_ih=u((3 * HIDDEN, BERT_DIM), sH),
            w_hh=u((3 * HIDDEN, HIDDEN), sH),
            b_ih=u((3 * HIDDEN,), sH),
            b_hh=u((3 * HIDDEN,), sH),
        )
    s3 = 1.0 / jnp.sqrt(3 * HIDDEN)
    s4 = 1.0 / jnp.sqrt(4 * HIDDEN)
    s50 = 1.0 / jnp.sqrt(50.0)
    params["linear_value"] = dict(w=u((1, 3 * HIDDEN), s3), b=u((1,), s3))
    params["linear1_command"] = dict(w=u((50, 4 * HIDDEN), s4), b=u((50,), s4))
    params["linear2_command"] = dict(w=u((1, 50), s50), b=u((1,), s50))
    return params


def prepare_params(params):
    """One-time packing: transpose, zero-pad 3H->128 and MLP 50->128, cast the big
    input-projection weights to bf16.  No per-forward transposes/reshapes remain."""
    def pad_cols(a, n):
        return jnp.pad(a, ((0, 0), (0, n - a.shape[1])))

    def pad_vec(v, n):
        return jnp.pad(v, (0, n - v.shape[0]))

    order = ("observation", "descriptions", "inventory", "commands")
    w_ih = jnp.stack([pad_cols(params[k]["w_ih"].T, GATE_PAD) for k in order]
                     ).astype(jnp.bfloat16)                                     # (4, 768, 128)
    b_ih = jnp.stack([pad_vec(params[k]["b_ih"], GATE_PAD) for k in order])     # (4, 128)
    b_hh = jnp.stack([pad_vec(params[k]["b_hh"], GATE_PAD) for k in order])     # (4, 128)
    w_hh_cmd = pad_cols(params["commands"]["w_hh"].T, GATE_PAD)                 # (32, 128)

    wv = params["linear_value"]["w"].T                                          # (96, 1)
    bv = params["linear_value"]["b"].reshape(1, 1)

    w1 = params["linear1_command"]["w"]                                         # (50, 128)
    w1_state = pad_cols(w1[:, :GATE].T, MLP_PAD)                                # (96, 128)
    w1_cmd = pad_cols(w1[:, GATE:].T, MLP_PAD)                                  # (32, 128)
    b1 = pad_vec(params["linear1_command"]["b"], MLP_PAD).reshape(1, MLP_PAD)   # (1, 128)

    w2 = jnp.pad(params["linear2_command"]["w"].T,
                 ((0, MLP_PAD - MLP_HIDDEN), (0, 0)))                           # (128, 1)
    b2 = params["linear2_command"]["b"].reshape(1, 1)

    return dict(w_ih=w_ih, b_ih=b_ih, b_hh=b_hh, w_hh_cmd=w_hh_cmd,
                wv=wv, bv=bv, w1_state=w1_state, w1_cmd=w1_cmd, b1=b1,
                w2=w2, b2=b2)


# ----------------------------------------------------------------------------
# Full forward (mirrors BERT_GRU.forward for B == 1).
# ----------------------------------------------------------------------------
@jax.jit
def bert_gru_forward(pparams, obs_cls, desc_cls, inv_cls, cmd_cls, sample_key):
    """CLS embeddings in, (scores, index, value) out — shapes match the torch module."""
    value, scores, probs = bert_gru_pallas(pparams, obs_cls, desc_cls, inv_cls, cmd_cls)

    num_commands = cmd_cls.shape[0]
    scores_out = scores.reshape(1, 1, num_commands)   # squeeze().unsqueeze(0).unsqueeze(0)
    value_out = value.reshape(1, BATCH, 1)            # value.unsqueeze(0)
    # multinomial(softmax(scores)) == categorical(scores)  (RNG stream differs from torch)
    idx = jax.random.categorical(sample_key, scores_out[0, 0])
    index_out = idx.reshape(1, 1, 1)
    return scores_out, index_out, value_out, probs


if __name__ == "__main__":
    key = jax.random.PRNGKey(0)
    k_param, k_obs, k_desc, k_inv, k_cmd, k_sample = jax.random.split(key, 6)

    params = init_params(k_param)
    packed = prepare_params(params)          # done exactly once

    # Deterministic stand-ins for DistilBERT [:, 0, :] CLS embeddings.
    obs_cls = jax.random.normal(k_obs, (BATCH, BERT_DIM), jnp.float32)
    desc_cls = jax.random.normal(k_desc, (BATCH, BERT_DIM), jnp.float32)
    inv_cls = jax.random.normal(k_inv, (BATCH, BERT_DIM), jnp.float32)
    cmd_cls = jax.random.normal(k_cmd, (NUM_COMMANDS, BERT_DIM), jnp.float32)

    scores, index, value, probs = bert_gru_forward(
        packed, obs_cls, desc_cls, inv_cls, cmd_cls, k_sample)
    jax.block_until_ready((scores, index, value, probs))

    assert scores.shape == (1, 1, NUM_COMMANDS)
    assert index.shape == (1, 1, 1)
    assert value.shape == (1, BATCH, 1)
    assert jnp.allclose(jnp.sum(probs), 1.0, atol=1e-5)
    print("KERNEL_OK")
</pallas_src>

<mosaic_0001>
module attributes {stable_mosaic.version = 11 : i64} {
  func.func @bert_gru_kernel(%arg0: memref<8x768xbf16, #tpu.memory_space<vmem>>, %arg1: memref<3x768xbf16, #tpu.memory_space<vmem>>, %arg2: memref<4x768x128xbf16, #tpu.memory_space<vmem>>, %arg3: memref<4x128xf32, #tpu.memory_space<vmem>>, %arg4: memref<4x128xf32, #tpu.memory_space<vmem>>, %arg5: memref<32x128xf32, #tpu.memory_space<vmem>>, %arg6: memref<96x1xf32, #tpu.memory_space<vmem>>, %arg7: memref<1x1xf32, #tpu.memory_space<vmem>>, %arg8: memref<96x128xf32, #tpu.memory_space<vmem>>, %arg9: memref<32x128xf32, #tpu.memory_space<vmem>>, %arg10: memref<1x128xf32, #tpu.memory_space<vmem>>, %arg11: memref<128x1xf32, #tpu.memory_space<vmem>>, %arg12: memref<1x1xf32, #tpu.memory_space<vmem>>, %arg13: memref<1x1xf32, #tpu.memory_space<vmem>>, %arg14: memref<8x1xf32, #tpu.memory_space<vmem>>, %arg15: memref<8x1xf32, #tpu.memory_space<vmem>>) attributes {dimension_semantics = [], scalar_prefetch = 0 : i64, scratch_operands = 0 : i64, tpu.core_type = #tpu.core_type<tc>} {
    %c0 = arith.constant 0 : index
    %c0_0 = arith.constant 0 : index
    %0 = vector.load %arg1[%c0, %c0_0] : memref<3x768xbf16, #tpu.memory_space<vmem>>, vector<1x768xbf16>
    %c0_1 = arith.constant 0 : index
    %c0_2 = arith.constant 0 : index
    %c0_3 = arith.constant 0 : index
    %1 = vector.load %arg2[%c0_1, %c0_2, %c0_3] : memref<4x768x128xbf16, #tpu.memory_space<vmem>>, vector<1x768x128xbf16>
    %2 = vector.shape_cast %1 : vector<1x768x128xbf16> to vector<768x128xbf16>
    %cst = arith.constant dense<0.000000e+00> : vector<1x128xf32>
    %3 = tpu.matmul %0, %2, %cst {dimension_numbers = #tpu.dot_dimension_numbers<[1], [0], [0], [1], [0, 0, 1, 1], [], []>} : vector<1x768xbf16>, vector<768x128xbf16>, vector<1x128xf32> -> vector<1x128xf32>
    %c0_4 = arith.constant 0 : index
    %c0_5 = arith.constant 0 : index
    %4 = vector.load %arg3[%c0_4, %c0_5] : memref<4x128xf32, #tpu.memory_space<vmem>>, vector<1x128xf32>
    %5 = arith.addf %3, %4 : vector<1x128xf32>
    %c0_6 = arith.constant 0 : index
    %c0_7 = arith.constant 0 : index
    %6 = vector.load %arg4[%c0_6, %c0_7] : memref<4x128xf32, #tpu.memory_space<vmem>>, vector<1x128xf32>
    %7 = vector.extract_strided_slice %5 {offsets = [0, 0], sizes = [1, 32], strides = [1, 1]} : vector<1x128xf32> to vector<1x32xf32>
    %8 = vector.extract_strided_slice %6 {offsets = [0, 0], sizes = [1, 32], strides = [1, 1]} : vector<1x128xf32> to vector<1x32xf32>
    %9 = arith.addf %7, %8 : vector<1x32xf32>
    %10 = arith.negf %9 : vector<1x32xf32>
    %11 = math.exp %10 : vector<1x32xf32>
    %cst_8 = arith.constant 1.000000e+00 : f32
    %12 = vector.broadcast %cst_8 : f32 to vector<1x32xf32>
    %13 = arith.addf %12, %11 : vector<1x32xf32>
    %14 = arith.divf %12, %13 : vector<1x32xf32>
    %15 = vector.extract_strided_slice %5 {offsets = [0, 32], sizes = [1, 32], strides = [1, 1]} : vector<1x128xf32> to vector<1x32xf32>
    %16 = vector.extract_strided_slice %6 {offsets = [0, 32], sizes = [1, 32], strides = [1, 1]} : vector<1x128xf32> to vector<1x32xf32>
    %17 = arith.addf %15, %16 : vector<1x32xf32>
    %18 = arith.negf %17 : vector<1x32xf32>
    %19 = math.exp %18 : vector<1x32xf32>
    %cst_9 = arith.constant 1.000000e+00 : f32
    %20 = vector.broadcast %cst_9 : f32 to vector<1x32xf32>
    %21 = arith.addf %20, %19 : vector<1x32xf32>
    %22 = arith.divf %20, %21 : vector<1x32xf32>
    %23 = vector.extract_strided_slice %5 {offsets = [0, 64], sizes = [1, 32], strides = [1, 1]} : vector<1x128xf32> to vector<1x32xf32>
    %24 = vector.extract_strided_slice %6 {offsets = [0, 64], sizes = [1, 32], strides = [1, 1]} : vector<1x128xf32> to vector<1x32xf32>
    %25 = arith.mulf %14, %24 : vector<1x32xf32>
    %26 = arith.addf %23, %25 : vector<1x32xf32>
    %27 = math.tanh %26 : vector<1x32xf32>
    %cst_10 = arith.constant 1.000000e+00 : f32
    %28 = vector.broadcast %cst_10 : f32 to vector<1x32xf32>
    %29 = arith.subf %28, %22 : vector<1x32xf32>
    %30 = arith.mulf %29, %27 : vector<1x32xf32>
    %c1 = arith.constant 1 : index
    %c0_11 = arith.constant 0 : index
    %31 = vector.load %arg1[%c1, %c0_11] : memref<3x768xbf16, #tpu.memory_space<vmem>>, vector<1x768xbf16>
    %c1_12 = arith.constant 1 : index
    %c0_13 = arith.constant 0 : index
    %c0_14 = arith.constant 0 : index
    %32 = vector.load %arg2[%c1_12, %c0_13, %c0_14] : memref<4x768x128xbf16, #tpu.memory_space<vmem>>, vector<1x768x128xbf16>
    %33 = vector.shape_cast %32 : vector<1x768x128xbf16> to vector<768x128xbf16>
    %cst_15 = arith.constant dense<0.000000e+00> : vector<1x128xf32>
    %34 = tpu.matmul %31, %33, %cst_15 {dimension_numbers = #tpu.dot_dimension_numbers<[1], [0], [0], [1], [0, 0, 1, 1], [], []>} : vector<1x768xbf16>, vector<768x128xbf16>, vector<1x128xf32> -> vector<1x128xf32>
    %c1_16 = arith.constant 1 : index
    %c0_17 = arith.constant 0 : index
    %35 = vector.load %arg3[%c1_16, %c0_17] : memref<4x128xf32, #tpu.memory_space<vmem>>, vector<1x128xf32>
    %36 = arith.addf %34, %35 : vector<1x128xf32>
    %c1_18 = arith.constant 1 : index
    %c0_19 = arith.constant 0 : index
    %37 = vector.load %arg4[%c1_18, %c0_19] : memref<4x128xf32, #tpu.memory_space<vmem>>, vector<1x128xf32>
    %38 = vector.extract_strided_slice %36 {offsets = [0, 0], sizes = [1, 32], strides = [1, 1]} : vector<1x128xf32> to vector<1x32xf32>
    %39 = vector.extract_strided_slice %37 {offsets = [0, 0], sizes = [1, 32], strides = [1, 1]} : vector<1x128xf32> to vector<1x32xf32>
    %40 = arith.addf %38, %39 : vector<1x32xf32>
    %41 = arith.negf %40 : vector<1x32xf32>
    %42 = math.exp %41 : vector<1x32xf32>
    %cst_20 = arith.constant 1.000000e+00 : f32
    %43 = vector.broadcast %cst_20 : f32 to vector<1x32xf32>
    %44 = arith.addf %43, %42 : vector<1x32xf32>
    %45 = arith.divf %43, %44 : vector<1x32xf32>
    %46 = vector.extract_strided_slice %36 {offsets = [0, 32], sizes = [1, 32], strides = [1, 1]} : vector<1x128xf32> to vector<1x32xf32>
    %47 = vector.extract_strided_slice %37 {offsets = [0, 32], sizes = [1, 32], strides = [1, 1]} : vector<1x128xf32> to vector<1x32xf32>
    %48 = arith.addf %46, %47 : vector<1x32xf32>
    %49 = arith.negf %48 : vector<1x32xf32>
    %50 = math.exp %49 : vector<1x32xf32>
    %cst_21 = arith.constant 1.000000e+00 : f32
    %51 = vector.broadcast %cst_21 : f32 to vector<1x32xf32>
    %52 = arith.addf %51, %50 : vector<1x32xf32>
    %53 = arith.divf %51, %52 : vector<1x32xf32>
    %54 = vector.extract_strided_slice %36 {offsets = [0, 64], sizes = [1, 32], strides = [1, 1]} : vector<1x128xf32> to vector<1x32xf32>
    %55 = vector.extract_strided_slice %37 {offsets = [0, 64], sizes = [1, 32], strides = [1, 1]} : vector<1x128xf32> to vector<1x32xf32>
    %56 = arith.mulf %45, %55 : vector<1x32xf32>
    %57 = arith.addf %54, %56 : vector<1x32xf32>
    %58 = math.tanh %57 : vector<1x32xf32>
    %cst_22 = arith.constant 1.000000e+00 : f32
    %59 = vector.broadcast %cst_22 : f32 to vector<1x32xf32>
    %60 = arith.subf %59, %53 : vector<1x32xf32>
    %61 = arith.mulf %60, %58 : vector<1x32xf32>
    %c2 = arith.constant 2 : index
    %c0_23 = arith.constant 0 : index
    %62 = vector.load %arg1[%c2, %c0_23] : memref<3x768xbf16, #tpu.memory_space<vmem>>, vector<1x768xbf16>
    %c2_24 = arith.constant 2 : index
    %c0_25 = arith.constant 0 : index
    %c0_26 = arith.constant 0 : index
    %63 = vector.load %arg2[%c2_24, %c0_25, %c0_26] : memref<4x768x128xbf16, #tpu.memory_space<vmem>>, vector<1x768x128xbf16>
    %64 = vector.shape_cast %63 : vector<1x768x128xbf16> to vector<768x128xbf16>
    %cst_27 = arith.constant dense<0.000000e+00> : vector<1x128xf32>
    %65 = tpu.matmul %62, %64, %cst_27 {dimension_numbers = #tpu.dot_dimension_numbers<[1], [0], [0], [1], [0, 0, 1, 1], [], []>} : vector<1x768xbf16>, vector<768x128xbf16>, vector<1x128xf32> -> vector<1x128xf32>
    %c2_28 = arith.constant 2 : index
    %c0_29 = arith.constant 0 : index
    %66 = vector.load %arg3[%c2_28, %c0_29] : memref<4x128xf32, #tpu.memory_space<vmem>>, vector<1x128xf32>
    %67 = arith.addf %65, %66 : vector<1x128xf32>
    %c2_30 = arith.constant 2 : index
    %c0_31 = arith.constant 0 : index
    %68 = vector.load %arg4[%c2_30, %c0_31] : memref<4x128xf32, #tpu.memory_space<vmem>>, vector<1x128xf32>
    %69 = vector.extract_strided_slice %67 {offsets = [0, 0], sizes = [1, 32], strides = [1, 1]} : vector<1x128xf32> to vector<1x32xf32>
    %70 = vector.extract_strided_slice %68 {offsets = [0, 0], sizes = [1, 32], strides = [1, 1]} : vector<1x128xf32> to vector<1x32xf32>
    %71 = arith.addf %69, %70 : vector<1x32xf32>
    %72 = arith.negf %71 : vector<1x32xf32>
    %73 = math.exp %72 : vector<1x32xf32>
    %cst_32 = arith.constant 1.000000e+00 : f32
    %74 = vector.broadcast %cst_32 : f32 to vector<1x32xf32>
    %75 = arith.addf %74, %73 : vector<1x32xf32>
    %76 = arith.divf %74, %75 : vector<1x32xf32>
    %77 = vector.extract_strided_slice %67 {offsets = [0, 32], sizes = [1, 32], strides = [1, 1]} : vector<1x128xf32> to vector<1x32xf32>
    %78 = vector.extract_strided_slice %68 {offsets = [0, 32], sizes = [1, 32], strides = [1, 1]} : vector<1x128xf32> to vector<1x32xf32>
    %79 = arith.addf %77, %78 : vector<1x32xf32>
    %80 = arith.negf %79 : vector<1x32xf32>
    %81 = math.exp %80 : vector<1x32xf32>
    %cst_33 = arith.constant 1.000000e+00 : f32
    %82 = vector.broadcast %cst_33 : f32 to vector<1x32xf32>
    %83 = arith.addf %82, %81 : vector<1x32xf32>
    %84 = arith.divf %82, %83 : vector<1x32xf32>
    %85 = vector.extract_strided_slice %67 {offsets = [0, 64], sizes = [1, 32], strides = [1, 1]} : vector<1x128xf32> to vector<1x32xf32>
    %86 = vector.extract_strided_slice %68 {offsets = [0, 64], sizes = [1, 32], strides = [1, 1]} : vector<1x128xf32> to vector<1x32xf32>
    %87 = arith.mulf %76, %86 : vector<1x32xf32>
    %88 = arith.addf %85, %87 : vector<1x32xf32>
    %89 = math.tanh %88 : vector<1x32xf32>
    %cst_34 = arith.constant 1.000000e+00 : f32
    %90 = vector.broadcast %cst_34 : f32 to vector<1x32xf32>
    %91 = arith.subf %90, %84 : vector<1x32xf32>
    %92 = arith.mulf %91, %89 : vector<1x32xf32>
    %c0_35 = arith.constant 0 : index
    %c0_36 = arith.constant 0 : index
    %93 = vector.load %arg0[%c0_35, %c0_36] : memref<8x768xbf16, #tpu.memory_space<vmem>>, vector<8x768xbf16>
    %c3 = arith.constant 3 : index
    %c0_37 = arith.constant 0 : index
    %c0_38 = arith.constant 0 : index
    %94 = vector.load %arg2[%c3, %c0_37, %c0_38] : memref<4x768x128xbf16, #tpu.memory_space<vmem>>, vector<1x768x128xbf16>
    %95 = vector.shape_cast %94 : vector<1x768x128xbf16> to vector<768x128xbf16>
    %cst_39 = arith.constant dense<0.000000e+00> : vector<8x128xf32>
    %96 = tpu.matmul %93, %95, %cst_39 {dimension_numbers = #tpu.dot_dimension_numbers<[1], [0], [0], [1], [0, 0, 1, 1], [], []>} : vector<8x768xbf16>, vector<768x128xbf16>, vector<8x128xf32> -> vector<8x128xf32>
    %c3_40 = arith.constant 3 : index
    %c0_41 = arith.constant 0 : index
    %97 = vector.load %arg3[%c3_40, %c0_41] : memref<4x128xf32, #tpu.memory_space<vmem>>, vector<1x128xf32>
    %98 = vector.broadcast %97 : vector<1x128xf32> to vector<8x128xf32>
    %99 = arith.addf %96, %98 : vector<8x128xf32>
    %c3_42 = arith.constant 3 : index
    %c0_43 = arith.constant 0 : index
    %100 = vector.load %arg4[%c3_42, %c0_43] : memref<4x128xf32, #tpu.memory_space<vmem>>, vector<1x128xf32>
    %c0_44 = arith.constant 0 : index
    %c0_45 = arith.constant 0 : index
    %101 = vector.load %arg5[%c0_44, %c0_45] : memref<32x128xf32, #tpu.memory_space<vmem>>, vector<32x128xf32>
    %102 = vector.extract_strided_slice %99 {offsets = [0, 0], sizes = [1, 128], strides = [1, 1]} : vector<8x128xf32> to vector<1x128xf32>
    %103 = vector.extract_strided_slice %102 {offsets = [0, 0], sizes = [1, 32], strides = [1, 1]} : vector<1x128xf32> to vector<1x32xf32>
    %104 = vector.extract_strided_slice %100 {offsets = [0, 0], sizes = [1, 32], strides = [1, 1]} : vector<1x128xf32> to vector<1x32xf32>
    %105 = arith.addf %103, %104 : vector<1x32xf32>
    %106 = arith.negf %105 : vector<1x32xf32>
    %107 = math.exp %106 : vector<1x32xf32>
    %cst_46 = arith.constant 1.000000e+00 : f32
    %108 = vector.broadcast %cst_46 : f32 to vector<1x32xf32>
    %109 = arith.addf %108, %107 : vector<1x32xf32>
    %110 = arith.divf %108, %109 : vector<1x32xf32>
    %111 = vector.extract_strided_slice %102 {offsets = [0, 32], sizes = [1, 32], strides = [1, 1]} : vector<1x128xf32> to vector<1x32xf32>
    %112 = vector.extract_strided_slice %100 {offsets = [0, 32], sizes = [1, 32], strides = [1, 1]} : vector<1x128xf32> to vector<1x32xf32>
    %113 = arith.addf %111, %112 : vector<1x32xf32>
    %114 = arith.negf %113 : vector<1x32xf32>
    %115 = math.exp %114 : vector<1x32xf32>
    %cst_47 = arith.constant 1.000000e+00 : f32
    %116 = vector.broadcast %cst_47 : f32 to vector<1x32xf32>
    %117 = arith.addf %116, %115 : vector<1x32xf32>
    %118 = arith.divf %116, %117 : vector<1x32xf32>
    %119 = vector.extract_strided_slice %102 {offsets = [0, 64], sizes = [1, 32], strides = [1, 1]} : vector<1x128xf32> to vector<1x32xf32>
    %120 = vector.extract_strided_slice %100 {offsets = [0, 64], sizes = [1, 32], strides = [1, 1]} : vector<1x128xf32> to vector<1x32xf32>
    %121 = arith.mulf %110, %120 : vector<1x32xf32>
    %122 = arith.addf %119, %121 : vector<1x32xf32>
    %123 = math.tanh %122 : vector<1x32xf32>
    %cst_48 = arith.constant 1.000000e+00 : f32
    %124 = vector.broadcast %cst_48 : f32 to vector<1x32xf32>
    %125 = arith.subf %124, %118 : vector<1x32xf32>
    %126 = arith.mulf %125, %123 : vector<1x32xf32>
    %cst_49 = arith.constant dense<0.000000e+00> : vector<1x128xf32>
    %127 = tpu.matmul %126, %101, %cst_49 {dimension_numbers = #tpu.dot_dimension_numbers<[1], [0], [0], [1], [0, 0, 1, 1], [], []>} : vector<1x32xf32>, vector<32x128xf32>, vector<1x128xf32> -> vector<1x128xf32>
    %128 = arith.addf %127, %100 : vector<1x128xf32>
    %129 = vector.extract_strided_slice %99 {offsets = [1, 0], sizes = [1, 128], strides = [1, 1]} : vector<8x128xf32> to vector<1x128xf32>
    %130 = vector.extract_strided_slice %129 {offsets = [0, 0], sizes = [1, 32], strides = [1, 1]} : vector<1x128xf32> to vector<1x32xf32>
    %131 = vector.extract_strided_slice %128 {offsets = [0, 0], sizes = [1, 32], strides = [1, 1]} : vector<1x128xf32> to vector<1x32xf32>
    %132 = arith.addf %130, %131 : vector<1x32xf32>
    %133 = arith.negf %132 : vector<1x32xf32>
    %134 = math.exp %133 : vector<1x32xf32>
    %cst_50 = arith.constant 1.000000e+00 : f32
    %135 = vector.broadcast %cst_50 : f32 to vector<1x32xf32>
    %136 = arith.addf %135, %134 : vector<1x32xf32>
    %137 = arith.divf %135, %136 : vector<1x32xf32>
    %138 = vector.extract_strided_slice %129 {offsets = [0, 32], sizes = [1, 32], strides = [1, 1]} : vector<1x128xf32> to vector<1x32xf32>
    %139 = vector.extract_strided_slice %128 {offsets = [0, 32], sizes = [1, 32], strides = [1, 1]} : vector<1x128xf32> to vector<1x32xf32>
    %140 = arith.addf %138, %139 : vector<1x32xf32>
    %141 = arith.negf %140 : vector<1x32xf32>
    %142 = math.exp %141 : vector<1x32xf32>
    %cst_51 = arith.constant 1.000000e+00 : f32
    %143 = vector.broadcast %cst_51 : f32 to vector<1x32xf32>
    %144 = arith.addf %143, %142 : vector<1x32xf32>
    %145 = arith.divf %143, %144 : vector<1x32xf32>
    %146 = vector.extract_strided_slice %129 {offsets = [0, 64], sizes = [1, 32], strides = [1, 1]} : vector<1x128xf32> to vector<1x32xf32>
    %147 = vector.extract_strided_slice %128 {offsets = [0, 64], sizes = [1, 32], strides = [1, 1]} : vector<1x128xf32> to vector<1x32xf32>
    %148 = arith.mulf %137, %147 : vector<1x32xf32>
    %149 = arith.addf %146, %148 : vector<1x32xf32>
    %150 = math.tanh %149 : vector<1x32xf32>
    %cst_52 = arith.constant 1.000000e+00 : f32
    %151 = vector.broadcast %cst_52 : f32 to vector<1x32xf32>
    %152 = arith.subf %151, %145 : vector<1x32xf32>
    %153 = arith.mulf %152, %150 : vector<1x32xf32>
    %154 = arith.mulf %145, %126 : vector<1x32xf32>
    %155 = arith.addf %153, %154 : vector<1x32xf32>
    %cst_53 = arith.constant dense<0.000000e+00> : vector<1x128xf32>
    %156 = tpu.matmul %155, %101, %cst_53 {dimension_numbers = #tpu.dot_dimension_numbers<[1], [0], [0], [1], [0, 0, 1, 1], [], []>} : vector<1x32xf32>, vector<32x128xf32>, vector<1x128xf32> -> vector<1x128xf32>
    %157 = arith.addf %156, %100 : vector<1x128xf32>
    %158 = vector.extract_strided_slice %99 {offsets = [2, 0], sizes = [1, 128], strides = [1, 1]} : vector<8x128xf32> to vector<1x128xf32>
    %159 = vector.extract_strided_slice %158 {offsets = [0, 0], sizes = [1, 32], strides = [1, 1]} : vector<1x128xf32> to vector<1x32xf32>
    %160 = vector.extract_strided_slice %157 {offsets = [0, 0], sizes = [1, 32], strides = [1, 1]} : vector<1x128xf32> to vector<1x32xf32>
    %161 = arith.addf %159, %160 : vector<1x32xf32>
    %162 = arith.negf %161 : vector<1x32xf32>
    %163 = math.exp %162 : vector<1x32xf32>
    %cst_54 = arith.constant 1.000000e+00 : f32
    %164 = vector.broadcast %cst_54 : f32 to vector<1x32xf32>
    %165 = arith.addf %164, %163 : vector<1x32xf32>
    %166 = arith.divf %164, %165 : vector<1x32xf32>
    %167 = vector.extract_strided_slice %158 {offsets = [0, 32], sizes = [1, 32], strides = [1, 1]} : vector<1x128xf32> to vector<1x32xf32>
    %168 = vector.extract_strided_slice %157 {offsets = [0, 32], sizes = [1, 32], strides = [1, 1]} : vector<1x128xf32> to vector<1x32xf32>
    %169 = arith.addf %167, %168 : vector<1x32xf32>
    %170 = arith.negf %169 : vector<1x32xf32>
    %171 = math.exp %170 : vector<1x32xf32>
    %cst_55 = arith.constant 1.000000e+00 : f32
    %172 = vector.broadcast %cst_55 : f32 to vector<1x32xf32>
    %173 = arith.addf %172, %171 : vector<1x32xf32>
    %174 = arith.divf %172, %173 : vector<1x32xf32>
    %175 = vector.extract_strided_slice %158 {offsets = [0, 64], sizes = [1, 32], strides = [1, 1]} : vector<1x128xf32> to vector<1x32xf32>
    %176 = vector.extract_strided_slice %157 {offsets = [0, 64], sizes = [1, 32], strides = [1, 1]} : vector<1x128xf32> to vector<1x32xf32>
    %177 = arith.mulf %166, %176 : vector<1x32xf32>
    %178 = arith.addf %175, %177 : vector<1x32xf32>
    %179 = math.tanh %178 : vector<1x32xf32>
    %cst_56 = arith.constant 1.000000e+00 : f32
    %180 = vector.broadcast %cst_56 : f32 to vector<1x32xf32>
    %181 = arith.subf %180, %174 : vector<1x32xf32>
    %182 = arith.mulf %181, %179 : vector<1x32xf32>
    %183 = arith.mulf %174, %155 : vector<1x32xf32>
    %184 = arith.addf %182, %183 : vector<1x32xf32>
    %cst_57 = arith.constant dense<0.000000e+00> : vector<1x128xf32>
    %185 = tpu.matmul %184, %101, %cst_57 {dimension_numbers = #tpu.dot_dimension_numbers<[1], [0], [0], [1], [0, 0, 1, 1], [], []>} : vector<1x32xf32>, vector<32x128xf32>, vector<1x128xf32> -> vector<1x128xf32>
    %186 = arith.addf %185, %100 : vector<1x128xf32>
    %187 = vector.extract_strided_slice %99 {offsets = [3, 0], sizes = [1, 128], strides = [1, 1]} : vector<8x128xf32> to vector<1x128xf32>
    %188 = vector.extract_strided_slice %187 {offsets = [0, 0], sizes = [1, 32], strides = [1, 1]} : vector<1x128xf32> to vector<1x32xf32>
    %189 = vector.extract_strided_slice %186 {offsets = [0, 0], sizes = [1, 32], strides = [1, 1]} : vector<1x128xf32> to vector<1x32xf32>
    %190 = arith.addf %188, %189 : vector<1x32xf32>
    %191 = arith.negf %190 : vector<1x32xf32>
    %192 = math.exp %191 : vector<1x32xf32>
    %cst_58 = arith.constant 1.000000e+00 : f32
    %193 = vector.broadcast %cst_58 : f32 to vector<1x32xf32>
    %194 = arith.addf %193, %192 : vector<1x32xf32>
    %195 = arith.divf %193, %194 : vector<1x32xf32>
    %196 = vector.extract_strided_slice %187 {offsets = [0, 32], sizes = [1, 32], strides = [1, 1]} : vector<1x128xf32> to vector<1x32xf32>
    %197 = vector.extract_strided_slice %186 {offsets = [0, 32], sizes = [1, 32], strides = [1, 1]} : vector<1x128xf32> to vector<1x32xf32>
    %198 = arith.addf %196, %197 : vector<1x32xf32>
    %199 = arith.negf %198 : vector<1x32xf32>
    %200 = math.exp %199 : vector<1x32xf32>
    %cst_59 = arith.constant 1.000000e+00 : f32
    %201 = vector.broadcast %cst_59 : f32 to vector<1x32xf32>
    %202 = arith.addf %201, %200 : vector<1x32xf32>
    %203 = arith.divf %201, %202 : vector<1x32xf32>
    %204 = vector.extract_strided_slice %187 {offsets = [0, 64], sizes = [1, 32], strides = [1, 1]} : vector<1x128xf32> to vector<1x32xf32>
    %205 = vector.extract_strided_slice %186 {offsets = [0, 64], sizes = [1, 32], strides = [1, 1]} : vector<1x128xf32> to vector<1x32xf32>
    %206 = arith.mulf %195, %205 : vector<1x32xf32>
    %207 = arith.addf %204, %206 : vector<1x32xf32>
    %208 = math.tanh %207 : vector<1x32xf32>
    %cst_60 = arith.constant 1.000000e+00 : f32
    %209 = vector.broadcast %cst_60 : f32 to vector<1x32xf32>
    %210 = arith.subf %209, %203 : vector<1x32xf32>
    %211 = arith.mulf %210, %208 : vector<1x32xf32>
    %212 = arith.mulf %203, %184 : vector<1x32xf32>
    %213 = arith.addf %211, %212 : vector<1x32xf32>
    %cst_61 = arith.constant dense<0.000000e+00> : vector<1x128xf32>
    %214 = tpu.matmul %213, %101, %cst_61 {dimension_numbers = #tpu.dot_dimension_numbers<[1], [0], [0], [1], [0, 0, 1, 1], [], []>} : vector<1x32xf32>, vector<32x128xf32>, vector<1x128xf32> -> vector<1x128xf32>
    %215 = arith.addf %214, %100 : vector<1x128xf32>
    %216 = vector.extract_strided_slice %99 {offsets = [4, 0], sizes = [1, 128], strides = [1, 1]} : vector<8x128xf32> to vector<1x128xf32>
    %217 = vector.extract_strided_slice %216 {offsets = [0, 0], sizes = [1, 32], strides = [1, 1]} : vector<1x128xf32> to vector<1x32xf32>
    %218 = vector.extract_strided_slice %215 {offsets = [0, 0], sizes = [1, 32], strides = [1, 1]} : vector<1x128xf32> to vector<1x32xf32>
    %219 = arith.addf %217, %218 : vector<1x32xf32>
    %220 = arith.negf %219 : vector<1x32xf32>
    %221 = math.exp %220 : vector<1x32xf32>
    %cst_62 = arith.constant 1.000000e+00 : f32
    %222 = vector.broadcast %cst_62 : f32 to vector<1x32xf32>
    %223 = arith.addf %222, %221 : vector<1x32xf32>
    %224 = arith.divf %222, %223 : vector<1x32xf32>
    %225 = vector.extract_strided_slice %216 {offsets = [0, 32], sizes = [1, 32], strides = [1, 1]} : vector<1x128xf32> to vector<1x32xf32>
    %226 = vector.extract_strided_slice %215 {offsets = [0, 32], sizes = [1, 32], strides = [1, 1]} : vector<1x128xf32> to vector<1x32xf32>
    %227 = arith.addf %225, %226 : vector<1x32xf32>
    %228 = arith.negf %227 : vector<1x32xf32>
    %229 = math.exp %228 : vector<1x32xf32>
    %cst_63 = arith.constant 1.000000e+00 : f32
    %230 = vector.broadcast %cst_63 : f32 to vector<1x32xf32>
    %231 = arith.addf %230, %229 : vector<1x32xf32>
    %232 = arith.divf %230, %231 : vector<1x32xf32>
    %233 = vector.extract_strided_slice %216 {offsets = [0, 64], sizes = [1, 32], strides = [1, 1]} : vector<1x128xf32> to vector<1x32xf32>
    %234 = vector.extract_strided_slice %215 {offsets = [0, 64], sizes = [1, 32], strides = [1, 1]} : vector<1x128xf32> to vector<1x32xf32>
    %235 = arith.mulf %224, %234 : vector<1x32xf32>
    %236 = arith.addf %233, %235 : vector<1x32xf32>
    %237 = math.tanh %236 : vector<1x32xf32>
    %cst_64 = arith.constant 1.000000e+00 : f32
    %238 = vector.broadcast %cst_64 : f32 to vector<1x32xf32>
    %239 = arith.subf %238, %232 : vector<1x32xf32>
    %240 = arith.mulf %239, %237 : vector<1x32xf32>
    %241 = arith.mulf %232, %213 : vector<1x32xf32>
    %242 = arith.addf %240, %241 : vector<1x32xf32>
    %cst_65 = arith.constant dense<0.000000e+00> : vector<1x128xf32>
    %243 = tpu.matmul %242, %101, %cst_65 {dimension_numbers = #tpu.dot_dimension_numbers<[1], [0], [0], [1], [0, 0, 1, 1], [], []>} : vector<1x32xf32>, vector<32x128xf32>, vector<1x128xf32> -> vector<1x128xf32>
    %244 = arith.addf %243, %100 : vector<1x128xf32>
    %245 = vector.extract_strided_slice %99 {offsets = [5, 0], sizes = [1, 128], strides = [1, 1]} : vector<8x128xf32> to vector<1x128xf32>
    %246 = vector.extract_strided_slice %245 {offsets = [0, 0], sizes = [1, 32], strides = [1, 1]} : vector<1x128xf32> to vector<1x32xf32>
    %247 = vector.extract_strided_slice %244 {offsets = [0, 0], sizes = [1, 32], strides = [1, 1]} : vector<1x128xf32> to vector<1x32xf32>
    %248 = arith.addf %246, %247 : vector<1x32xf32>
    %249 = arith.negf %248 : vector<1x32xf32>
    %250 = math.exp %249 : vector<1x32xf32>
    %cst_66 = arith.constant 1.000000e+00 : f32
    %251 = vector.broadcast %cst_66 : f32 to vector<1x32xf32>
    %252 = arith.addf %251, %250 : vector<1x32xf32>
    %253 = arith.divf %251, %252 : vector<1x32xf32>
    %254 = vector.extract_strided_slice %245 {offsets = [0, 32], sizes = [1, 32], strides = [1, 1]} : vector<1x128xf32> to vector<1x32xf32>
    %255 = vector.extract_strided_slice %244 {offsets = [0, 32], sizes = [1, 32], strides = [1, 1]} : vector<1x128xf32> to vector<1x32xf32>
    %256 = arith.addf %254, %255 : vector<1x32xf32>
    %257 = arith.negf %256 : vector<1x32xf32>
    %258 = math.exp %257 : vector<1x32xf32>
    %cst_67 = arith.constant 1.000000e+00 : f32
    %259 = vector.broadcast %cst_67 : f32 to vector<1x32xf32>
    %260 = arith.addf %259, %258 : vector<1x32xf32>
    %261 = arith.divf %259, %260 : vector<1x32xf32>
    %262 = vector.extract_strided_slice %245 {offsets = [0, 64], sizes = [1, 32], strides = [1, 1]} : vector<1x128xf32> to vector<1x32xf32>
    %263 = vector.extract_strided_slice %244 {offsets = [0, 64], sizes = [1, 32], strides = [1, 1]} : vector<1x128xf32> to vector<1x32xf32>
    %264 = arith.mulf %253, %263 : vector<1x32xf32>
    %265 = arith.addf %262, %264 : vector<1x32xf32>
    %266 = math.tanh %265 : vector<1x32xf32>
    %cst_68 = arith.constant 1.000000e+00 : f32
    %267 = vector.broadcast %cst_68 : f32 to vector<1x32xf32>
    %268 = arith.subf %267, %261 : vector<1x32xf32>
    %269 = arith.mulf %268, %266 : vector<1x32xf32>
    %270 = arith.mulf %261, %242 : vector<1x32xf32>
    %271 = arith.addf %269, %270 : vector<1x32xf32>
    %cst_69 = arith.constant dense<0.000000e+00> : vector<1x128xf32>
    %272 = tpu.matmul %271, %101, %cst_69 {dimension_numbers = #tpu.dot_dimension_numbers<[1], [0], [0], [1], [0, 0, 1, 1], [], []>} : vector<1x32xf32>, vector<32x128xf32>, vector<1x128xf32> -> vector<1x128xf32>
    %273 = arith.addf %272, %100 : vector<1x128xf32>
    %274 = vector.extract_strided_slice %99 {offsets = [6, 0], sizes = [1, 128], strides = [1, 1]} : vector<8x128xf32> to vector<1x128xf32>
    %275 = vector.extract_strided_slice %274 {offsets = [0, 0], sizes = [1, 32], strides = [1, 1]} : vector<1x128xf32> to vector<1x32xf32>
    %276 = vector.extract_strided_slice %273 {offsets = [0, 0], sizes = [1, 32], strides = [1, 1]} : vector<1x128xf32> to vector<1x32xf32>
    %277 = arith.addf %275, %276 : vector<1x32xf32>
    %278 = arith.negf %277 : vector<1x32xf32>
    %279 = math.exp %278 : vector<1x32xf32>
    %cst_70 = arith.constant 1.000000e+00 : f32
    %280 = vector.broadcast %cst_70 : f32 to vector<1x32xf32>
    %281 = arith.addf %280, %279 : vector<1x32xf32>
    %282 = arith.divf %280, %281 : vector<1x32xf32>
    %283 = vector.extract_strided_slice %274 {offsets = [0, 32], sizes = [1, 32], strides = [1, 1]} : vector<1x128xf32> to vector<1x32xf32>
    %284 = vector.extract_strided_slice %273 {offsets = [0, 32], sizes = [1, 32], strides = [1, 1]} : vector<1x128xf32> to vector<1x32xf32>
    %285 = arith.addf %283, %284 : vector<1x32xf32>
    %286 = arith.negf %285 : vector<1x32xf32>
    %287 = math.exp %286 : vector<1x32xf32>
    %cst_71 = arith.constant 1.000000e+00 : f32
    %288 = vector.broadcast %cst_71 : f32 to vector<1x32xf32>
    %289 = arith.addf %288, %287 : vector<1x32xf32>
    %290 = arith.divf %288, %289 : vector<1x32xf32>
    %291 = vector.extract_strided_slice %274 {offsets = [0, 64], sizes = [1, 32], strides = [1, 1]} : vector<1x128xf32> to vector<1x32xf32>
    %292 = vector.extract_strided_slice %273 {offsets = [0, 64], sizes = [1, 32], strides = [1, 1]} : vector<1x128xf32> to vector<1x32xf32>
    %293 = arith.mulf %282, %292 : vector<1x32xf32>
    %294 = arith.addf %291, %293 : vector<1x32xf32>
    %295 = math.tanh %294 : vector<1x32xf32>
    %cst_72 = arith.constant 1.000000e+00 : f32
    %296 = vector.broadcast %cst_72 : f32 to vector<1x32xf32>
    %297 = arith.subf %296, %290 : vector<1x32xf32>
    %298 = arith.mulf %297, %295 : vector<1x32xf32>
    %299 = arith.mulf %290, %271 : vector<1x32xf32>
    %300 = arith.addf %298, %299 : vector<1x32xf32>
    %cst_73 = arith.constant dense<0.000000e+00> : vector<1x128xf32>
    %301 = tpu.matmul %300, %101, %cst_73 {dimension_numbers = #tpu.dot_dimension_numbers<[1], [0], [0], [1], [0, 0, 1, 1], [], []>} : vector<1x32xf32>, vector<32x128xf32>, vector<1x128xf32> -> vector<1x128xf32>
    %302 = arith.addf %301, %100 : vector<1x128xf32>
    %303 = vector.extract_strided_slice %99 {offsets = [7, 0], sizes = [1, 128], strides = [1, 1]} : vector<8x128xf32> to vector<1x128xf32>
    %304 = vector.extract_strided_slice %303 {offsets = [0, 0], sizes = [1, 32], strides = [1, 1]} : vector<1x128xf32> to vector<1x32xf32>
    %305 = vector.extract_strided_slice %302 {offsets = [0, 0], sizes = [1, 32], strides = [1, 1]} : vector<1x128xf32> to vector<1x32xf32>
    %306 = arith.addf %304, %305 : vector<1x32xf32>
    %307 = arith.negf %306 : vector<1x32xf32>
    %308 = math.exp %307 : vector<1x32xf32>
    %cst_74 = arith.constant 1.000000e+00 : f32
    %309 = vector.broadcast %cst_74 : f32 to vector<1x32xf32>
    %310 = arith.addf %309, %308 : vector<1x32xf32>
    %311 = arith.divf %309, %310 : vector<1x32xf32>
    %312 = vector.extract_strided_slice %303 {offsets = [0, 32], sizes = [1, 32], strides = [1, 1]} : vector<1x128xf32> to vector<1x32xf32>
    %313 = vector.extract_strided_slice %302 {offsets = [0, 32], sizes = [1, 32], strides = [1, 1]} : vector<1x128xf32> to vector<1x32xf32>
    %314 = arith.addf %312, %313 : vector<1x32xf32>
    %315 = arith.negf %314 : vector<1x32xf32>
    %316 = math.exp %315 : vector<1x32xf32>
    %cst_75 = arith.constant 1.000000e+00 : f32
    %317 = vector.broadcast %cst_75 : f32 to vector<1x32xf32>
    %318 = arith.addf %317, %316 : vector<1x32xf32>
    %319 = arith.divf %317, %318 : vector<1x32xf32>
    %320 = vector.extract_strided_slice %303 {offsets = [0, 64], sizes = [1, 32], strides = [1, 1]} : vector<1x128xf32> to vector<1x32xf32>
    %321 = vector.extract_strided_slice %302 {offsets = [0, 64], sizes = [1, 32], strides = [1, 1]} : vector<1x128xf32> to vector<1x32xf32>
    %322 = arith.mulf %311, %321 : vector<1x32xf32>
    %323 = arith.addf %320, %322 : vector<1x32xf32>
    %324 = math.tanh %323 : vector<1x32xf32>
    %cst_76 = arith.constant 1.000000e+00 : f32
    %325 = vector.broadcast %cst_76 : f32 to vector<1x32xf32>
    %326 = arith.subf %325, %319 : vector<1x32xf32>
    %327 = arith.mulf %326, %324 : vector<1x32xf32>
    %328 = arith.mulf %319, %300 : vector<1x32xf32>
    %329 = arith.addf %327, %328 : vector<1x32xf32>
    %330 = tpu.concatenate %126, %155, %184, %213, %242, %271, %300, %329 in 0 : vector<1x32xf32>, vector<1x32xf32>, vector<1x32xf32>, vector<1x32xf32>, vector<1x32xf32>, vector<1x32xf32>, vector<1x32xf32>, vector<1x32xf32> -> vector<8x32xf32>
    %331 = tpu.concatenate %30, %61, %92 in 1 : vector<1x32xf32>, vector<1x32xf32>, vector<1x32xf32> -> vector<1x96xf32>
    %c0_77 = arith.constant 0 : index
    %c0_78 = arith.constant 0 : index
    %332 = vector.load %arg6[%c0_77, %c0_78] : memref<96x1xf32, #tpu.memory_space<vmem>>, vector<96x1xf32>
    %cst_79 = arith.constant dense<0.000000e+00> : vector<1x1xf32>
    %333 = tpu.matmul %331, %332, %cst_79 {dimension_numbers = #tpu.dot_dimension_numbers<[1], [0], [0], [1], [0, 0, 1, 1], [], []>} : vector<1x96xf32>, vector<96x1xf32>, vector<1x1xf32> -> vector<1x1xf32>
    %c0_80 = arith.constant 0 : index
    %c0_81 = arith.constant 0 : index
    %334 = vector.load %arg7[%c0_80, %c0_81] : memref<1x1xf32, #tpu.memory_space<vmem>>, vector<1x1xf32>
    %335 = arith.addf %333, %334 : vector<1x1xf32>
    %c0_82 = arith.constant 0 : index
    %c0_83 = arith.constant 0 : index
    %336 = vector.load %arg13[%c0_82, %c0_83] : memref<1x1xf32, #tpu.memory_space<vmem>>, vector<1x1xf32>
    tpu.vector_store %arg13[%c0_82, %c0_83], %335 {strides = array<i32>} : memref<1x1xf32, #tpu.memory_space<vmem>>, vector<1x1xf32>,
    %c0_84 = arith.constant 0 : index
    %c0_85 = arith.constant 0 : index
    %337 = vector.load %arg8[%c0_84, %c0_85] : memref<96x128xf32, #tpu.memory_space<vmem>>, vector<96x128xf32>
    %cst_86 = arith.constant dense<0.000000e+00> : vector<1x128xf32>
    %338 = tpu.matmul %331, %337, %cst_86 {dimension_numbers = #tpu.dot_dimension_numbers<[1], [0], [0], [1], [0, 0, 1, 1], [], []>} : vector<1x96xf32>, vector<96x128xf32>, vector<1x128xf32> -> vector<1x128xf32>
    %c0_87 = arith.constant 0 : index
    %c0_88 = arith.constant 0 : index
    %339 = vector.load %arg10[%c0_87, %c0_88] : memref<1x128xf32, #tpu.memory_space<vmem>>, vector<1x128xf32>
    %340 = arith.addf %338, %339 : vector<1x128xf32>
    %c0_89 = arith.constant 0 : index
    %c0_90 = arith.constant 0 : index
    %341 = vector.load %arg9[%c0_89, %c0_90] : memref<32x128xf32, #tpu.memory_space<vmem>>, vector<32x128xf32>
    %cst_91 = arith.constant dense<0.000000e+00> : vector<8x128xf32>
    %342 = tpu.matmul %330, %341, %cst_91 {dimension_numbers = #tpu.dot_dimension_numbers<[1], [0], [0], [1], [0, 0, 1, 1], [], []>} : vector<8x32xf32>, vector<32x128xf32>, vector<8x128xf32> -> vector<8x128xf32>
    %343 = vector.broadcast %340 : vector<1x128xf32> to vector<8x128xf32>
    %344 = arith.addf %343, %342 : vector<8x128xf32>
    %cst_92 = arith.constant 0.000000e+00 : f32
    %345 = vector.broadcast %cst_92 : f32 to vector<8x128xf32>
    %346 = arith.maximumf %344, %345 : vector<8x128xf32>
    %c0_93 = arith.constant 0 : index
    %c0_94 = arith.constant 0 : index
    %347 = vector.load %arg11[%c0_93, %c0_94] : memref<128x1xf32, #tpu.memory_space<vmem>>, vector<128x1xf32>
    %cst_95 = arith.constant dense<0.000000e+00> : vector<8x1xf32>
    %348 = tpu.matmul %346, %347, %cst_95 {dimension_numbers = #tpu.dot_dimension_numbers<[1], [0], [0], [1], [0, 0, 1, 1], [], []>} : vector<8x128xf32>, vector<128x1xf32>, vector<8x1xf32> -> vector<8x1xf32>
    %c0_96 = arith.constant 0 : index
    %c0_97 = arith.constant 0 : index
    %349 = vector.load %arg12[%c0_96, %c0_97] : memref<1x1xf32, #tpu.memory_space<vmem>>, vector<1x1xf32>
    %350 = vector.broadcast %349 : vector<1x1xf32> to vector<8x1xf32>
    %351 = arith.addf %348, %350 : vector<8x1xf32>
    %c0_98 = arith.constant 0 : index
    %c0_99 = arith.constant 0 : index
    %352 = vector.load %arg14[%c0_98, %c0_99] : memref<8x1xf32, #tpu.memory_space<vmem>>, vector<8x1xf32>
    tpu.vector_store %arg14[%c0_98, %c0_99], %351 {strides = array<i32>} : memref<8x1xf32, #tpu.memory_space<vmem>>, vector<8x1xf32>,
    %cst_100 = arith.constant dense<0xFF800000> : vector<1xf32>
    %353 = vector.multi_reduction <maximumf>, %351, %cst_100 [0] : vector<8x1xf32> to vector<1xf32>
    %354 = vector.shape_cast %353 : vector<1xf32> to vector<1x1xf32>
    %355 = vector.broadcast %354 : vector<1x1xf32> to vector<8x1xf32>
    %356 = arith.subf %351, %355 : vector<8x1xf32>
    %357 = math.exp %356 : vector<8x1xf32>
    %cst_101 = arith.constant dense<0.000000e+00> : vector<1xf32>
    %358 = vector.multi_reduction <add>, %357, %cst_101 [0] : vector<8x1xf32> to vector<1xf32>
    %359 = vector.shape_cast %358 : vector<1xf32> to vector<1x1xf32>
    %360 = vector.broadcast %359 : vector<1x1xf32> to vector<8x1xf32>
    %361 = arith.divf %357, %360 : vector<8x1xf32>
    %c0_102 = arith.constant 0 : index
    %c0_103 = arith.constant 0 : index
    %362 = vector.load %arg15[%c0_102, %c0_103] : memref<8x1xf32, #tpu.memory_space<vmem>>, vector<8x1xf32>
    tpu.vector_store %arg15[%c0_102, %c0_103], %361 {strides = array<i32>} : memref<8x1xf32, #tpu.memory_space<vmem>>, vector<8x1xf32>,
    return
  }
}

</mosaic_0001>

<llo_original>
// kernel: bert_gru_forward.1
$region0: #{bert_gru_forward.1}
  #allocation0 [shape = 'u32[]', space=smem, size = 0x4, offset = 0x4, fixed_abs, tag = 'smem constant byte address 0x4 - core index']
  #allocation1 [shape = 'u32[144,128]{1,0:T(1,128)}', space=vmem, size = 0x12000, scoped, tag = 'internal scratch']
  #allocation2 [shape = 'f32[1,1]{1,0:T(1,128)S(1)}', space=vmem, size = 0x200, scoped, tag = 'scoped memory for bert_gru_forward.1']
  #allocation3 [shape = 'f32[1,1]{1,0:T(1,128)S(1)}', space=vmem, size = 0x200, scoped, tag = 'scoped memory for bert_gru_forward.1']
  %s0 = inlined_call_operand.vmem [shape: bf16[8,768], index: 0, kind: input, shape index: {}]
  %s1 = inlined_call_operand.vmem [shape: bf16[3,768], index: 1, kind: input, shape index: {}]
  %s2 = inlined_call_operand.hbm [shape: bf16[4,768,128], index: 2, kind: input, shape index: {}]
  %s3 = inlined_call_operand.vmem [shape: f32[4,128], index: 3, kind: input, shape index: {}]
  %s4 = inlined_call_operand.vmem [shape: f32[4,128], index: 4, kind: input, shape index: {}]
  %s5 = inlined_call_operand.vmem [shape: f32[32,128], index: 5, kind: input, shape index: {}]
  %s6 = inlined_call_operand.vmem [shape: f32[96,1], index: 6, kind: input, shape index: {}]
  %s7 = inlined_call_operand.<no memory space> [shape: f32[1,1], index: 7, kind: input, shape index: {}]
  %s8 = inlined_call_operand.vmem [shape: f32[96,128], index: 8, kind: input, shape index: {}]
  %s9 = inlined_call_operand.vmem [shape: f32[32,128], index: 9, kind: input, shape index: {}]
  %s10 = inlined_call_operand.vmem [shape: f32[1,128], index: 10, kind: input, shape index: {}]
  %s11 = inlined_call_operand.vmem [shape: f32[128,1], index: 11, kind: input, shape index: {}]
  %s12 = inlined_call_operand.<no memory space> [shape: f32[1,1], index: 12, kind: input, shape index: {}]
  %s13 = inlined_call_operand.hbm [shape: f32[1,1], index: 13, kind: output, shape index: {0}]
  %s14 = inlined_call_operand.vmem [shape: f32[8,1], index: 14, kind: output, shape index: {1}]
  %s15 = inlined_call_operand.vmem [shape: f32[8,1], index: 15, kind: output, shape index: {2}]
  %16 = xla_tuple %s13, %s14, %s15
  %s17 = sld [smem:[#allocation0]]
  $region82: #{bert_gru_forward.1} parent=0
    _
  %s19 = ssub.s32 1, %s17
  %s20 = scalar_select 0, %s19, %s17
  %v21 = vstv %s7
  %22 = vst [vmem:[#allocation2] sm:$0x1] %v21
  %v23 = vstv %s12
  %24 = vst [vmem:[#allocation3] sm:$0x1] %v23
  $region1: #{bert_gru_forward.1} parent=0
    #allocation4 [shape = 'u8[786432]{0}', space=vmem, size = 0xc0000, scoped, tag = 'input window, operand 2, single buffered']
    #allocation5 [shape = 's32[1]{0}', space=sflag, size = 0x4, scoped, tag = 'scoped memory for bert_gru_forward.1']
    #allocation6 [shape = 's32[1]{0}', space=sflag, size = 0x4, scoped, tag = 'scoped memory for bert_gru_forward.1']
    #allocation7 [shape = 'u8[512]{0}', space=vmem, size = 0x400, scoped, tag = 'output window, operand 0, single buffered']
    %25 = vsyncpa [#allocation5], 0
    %26 = vsyncpa [#allocation6], 0
    // Predicated region
    $region2: #{bert_gru_forward.1} parent=1 // pred_check
      _
    $region3: #{bert_gru_forward.1} parent=1 // pred_check_branch
      %28 = sbr.rel (0) target = $region5
    $region4: #{bert_gru_forward.1} parent=1 // pred_region
      _
    $region5: #{bert_gru_forward.1} parent=1 // pred_fallthru
      _
    // Predicated region
    $region6: #{bert_gru_forward.1} parent=1 // pred_check
      _
    $region7: #{bert_gru_forward.1} parent=1 // pred_check_branch
      %30 = sbr.rel (0) target = $region9
    $region8: #{bert_gru_forward.1} parent=1 // pred_region
      _
    $region9: #{bert_gru_forward.1} parent=1 // pred_fallthru
      _
    // Predicated region
    $region10: #{bert_gru_forward.1} parent=1 // pred_check
      _
    $region11: #{bert_gru_forward.1} parent=1 // pred_check_branch
      %32 = sbr.rel (0) target = $region13
    $region12: #{bert_gru_forward.1} parent=1 // pred_region
      %s34 = ssub.s32 24576, 24576
      %35 = vsyncadd [#allocation5], %s34
      %s36 = sshll.u32 [#allocation4], 4
      %s37 = int_to_ptr.vmem [resolvable:$true] %s36
      %42 = dma.hbm_to_vmem [thread:$0]  %s2, 24576, %s37, [#allocation5], 64, 64, 4
    $region13: #{bert_gru_forward.1} parent=1 // pred_fallthru
      _
    // Predicated region
    $region14: #{bert_gru_forward.1} parent=1 // pred_check
      _
    $region15: #{bert_gru_forward.1} parent=1 // pred_check_branch
      %44 = sbr.rel (0) target = $region17
    $region16: #{bert_gru_forward.1} parent=1 // pred_region
      _
    $region17: #{bert_gru_forward.1} parent=1 // pred_fallthru
      _
    // Predicated region
    $region18: #{bert_gru_forward.1} parent=1 // pred_check
      _
    $region19: #{bert_gru_forward.1} parent=1 // pred_check_branch
      %46 = sbr.rel (0) target = $region21
    $region20: #{bert_gru_forward.1} parent=1 // pred_region
      _
    $region21: #{bert_gru_forward.1} parent=1 // pred_fallthru
      _
    // Predicated region
    $region22: #{bert_gru_forward.1} parent=1 // pred_check
      _
    $region23: #{bert_gru_forward.1} parent=1 // pred_check_branch
      %48 = sbr.rel (0) target = $region25
    $region24: #{bert_gru_forward.1} parent=1 // pred_region
      _
    $region25: #{bert_gru_forward.1} parent=1 // pred_fallthru
      _
    // Predicated region
    $region26: #{bert_gru_forward.1} parent=1 // pred_check
      _
    $region27: #{bert_gru_forward.1} parent=1 // pred_check_branch
      %50 = sbr.rel (0) target = $region29
    $region28: #{bert_gru_forward.1} parent=1 // pred_region
      _
    $region29: #{bert_gru_forward.1} parent=1 // pred_fallthru
      _
    // Predicated region
    $region30: #{bert_gru_forward.1} parent=1 // pred_check
      _
    $region31: #{bert_gru_forward.1} parent=1 // pred_check_branch
      %52 = sbr.rel (0) target = $region33
    $region32: #{bert_gru_forward.1} parent=1 // pred_region
      _
    $region33: #{bert_gru_forward.1} parent=1 // pred_fallthru
      _
    // Predicated region
    $region34: #{bert_gru_forward.1} parent=1 // pred_check
      _
    $region35: #{bert_gru_forward.1} parent=1 // pred_check_branch
      %54 = sbr.rel (0) target = $region37
    $region36: #{bert_gru_forward.1} parent=1 // pred_region
      _
    $region37: #{bert_gru_forward.1} parent=1 // pred_fallthru
      _
    // Predicated region
    $region38: #{bert_gru_forward.1} parent=1 // pred_check
      _
    $region39: #{bert_gru_forward.1} parent=1 // pred_check_branch
      %56 = sbr.rel (0) target = $region41
    $region40: #{bert_gru_forward.1} parent=1 // pred_region
      _
    $region41: #{bert_gru_forward.1} parent=1 // pred_fallthru
      _
    // Predicated region
    $region42: #{bert_gru_forward.1} parent=1 // pred_check
      _
    $region43: #{bert_gru_forward.1} parent=1 // pred_check_branch
      %58 = sbr.rel (0) target = $region45
    $region44: #{bert_gru_forward.1} parent=1 // pred_region
      _
    $region45: #{bert_gru_forward.1} parent=1 // pred_fallthru
      _
    // Predicated region
    $region46: #{bert_gru_forward.1} parent=1 // pred_check
      _
    $region47: #{bert_gru_forward.1} parent=1 // pred_check_branch
      %60 = sbr.rel (0) target = $region49
    $region48: #{bert_gru_forward.1} parent=1 // pred_region
      _
    $region49: #{bert_gru_forward.1} parent=1 // pred_fallthru
      _
    // Predicated region
    $region50: #{bert_gru_forward.1} parent=1 // pred_check
      _
    $region51: #{bert_gru_forward.1} parent=1 // pred_check_branch
      %62 = sbr.rel (0) target = $region53
    $region52: #{bert_gru_forward.1} parent=1 // pred_region
      _
    $region53: #{bert_gru_forward.1} parent=1 // pred_fallthru
      _
    // Predicated region
    $region54: #{bert_gru_forward.1} parent=1 // pred_check
      _
    $region55: #{bert_gru_forward.1} parent=1 // pred_check_branch
      %64 = sbr.rel (0) target = $region57
    $region56: #{bert_gru_forward.1} parent=1 // pred_region
      %65 = dma.done [#allocation5], 24576
    $region57: #{bert_gru_forward.1} parent=1 // pred_fallthru
      _
    %v67 = vld [vmem:[%s1] sm:$0x55]
    %v68 = vld [vmem:[%s1 + $0x8] sm:$0x5]
    %v69 = vld [vmem:[#allocation4] sm:$0xf]
    %v70 = vld [vmem:[#allocation4 + $0x4] sm:$0xf]
    %v71 = vld [vmem:[#allocation4 + $0x8] sm:$0xf]
    %v72 = vld [vmem:[#allocation4 + $0xc] sm:$0xf]
    %v73 = vld [vmem:[#allocation4 + $0x10] sm:$0xf]
    %v74 = vld [vmem:[#allocation4 + $0x14] sm:$0xf]
    %v75 = vld [vmem:[#allocation4 + $0x18] sm:$0xf]
    %v76 = vld [vmem:[#allocation4 + $0x1c] sm:$0xf]
    %v77 = vld [vmem:[#allocation4 + $0x20] sm:$0xf]
    %v78 = vld [vmem:[#allocation4 + $0x24] sm:$0xf]
    %v79 = vld [vmem:[#allocation4 + $0x28] sm:$0xf]
    %v80 = vld [vmem:[#allocation4 + $0x2c] sm:$0xf]
    %v81 = vld [vmem:[#allocation4 + $0x30] sm:$0xf]
    %v82 = vld [vmem:[#allocation4 + $0x34] sm:$0xf]
    %v83 = vld [vmem:[#allocation4 + $0x38] sm:$0xf]
    %v84 = vld [vmem:[#allocation4 + $0x3c] sm:$0xf]
    %v85 = vld [vmem:[#allocation4 + $0x40] sm:$0xf]
    %v86 = vld [vmem:[#allocation4 + $0x44] sm:$0xf]
    %v87 = vld [vmem:[#allocation4 + $0x48] sm:$0xf]
    %v88 = vld [vmem:[#allocation4 + $0x4c] sm:$0xf]
    %v89 = vld [vmem:[#allocation4 + $0x50] sm:$0xf]
    %v90 = vld [vmem:[#allocation4 + $0x54] sm:$0xf]
    %v91 = vld [vmem:[#allocation4 + $0x58] sm:$0xf]
    %v92 = vld [vmem:[#allocation4 + $0x5c] sm:$0xf]
    %v93 = vld [vmem:[#allocation4 + $0x60] sm:$0xf]
    %v94 = vld [vmem:[#allocation4 + $0x64] sm:$0xf]
    %v95 = vld [vmem:[#allocation4 + $0x68] sm:$0xf]
    %v96 = vld [vmem:[#allocation4 + $0x6c] sm:$0xf]
    %v97 = vld [vmem:[#allocation4 + $0x70] sm:$0xf]
    %v98 = vld [vmem:[#allocation4 + $0x74] sm:$0xf]
    %v99 = vld [vmem:[#allocation4 + $0x78] sm:$0xf]
    %v100 = vld [vmem:[#allocation4 + $0x7c] sm:$0xf]
    %v101 = vld [vmem:[#allocation4 + $0x80] sm:$0xf]
    %v102 = vld [vmem:[#allocation4 + $0x84] sm:$0xf]
    %v103 = vld [vmem:[#allocation4 + $0x88] sm:$0xf]
    %v104 = vld [vmem:[#allocation4 + $0x8c] sm:$0xf]
    %v105 = vld [vmem:[#allocation4 + $0x90] sm:$0xf]
    %v106 = vld [vmem:[#allocation4 + $0x94] sm:$0xf]
    %v107 = vld [vmem:[#allocation4 + $0x98] sm:$0xf]
    %v108 = vld [vmem:[#allocation4 + $0x9c] sm:$0xf]
    %v109 = vld [vmem:[#allocation4 + $0xa0] sm:$0xf]
    %v110 = vld [vmem:[#allocation4 + $0xa4] sm:$0xf]
    %v111 = vld [vmem:[#allocation4 + $0xa8] sm:$0xf]
    %v112 = vld [vmem:[#allocation4 + $0xac] sm:$0xf]
    %v113 = vld [vmem:[#allocation4 + $0xb0] sm:$0xf]
    %v114 = vld [vmem:[#allocation4 + $0xb4] sm:$0xf]
    %v115 = vld [vmem:[#allocation4 + $0xb8] sm:$0xf]
    %v116 = vld [vmem:[#allocation4 + $0xbc] sm:$0xf]
    %v117 = vld [vmem:[#allocation4 + $0xc0] sm:$0xf]
    %v118 = vld [vmem:[#allocation4 + $0xc4] sm:$0xf]
    %v119 = vld [vmem:[#allocation4 + $0xc8] sm:$0xf]
    %v120 = vld [vmem:[#allocation4 + $0xcc] sm:$0xf]
    %v121 = vld [vmem:[#allocation4 + $0xd0] sm:$0xf]
    %v122 = vld [vmem:[#allocation4 + $0xd4] sm:$0xf]
    %v123 = vld [vmem:[#allocation4 + $0xd8] sm:$0xf]
    %v124 = vld [vmem:[#allocation4 + $0xdc] sm:$0xf]
    %v125 = vld [vmem:[#allocation4 + $0xe0] sm:$0xf]
    %v126 = vld [vmem:[#allocation4 + $0xe4] sm:$0xf]
    %v127 = vld [vmem:[#allocation4 + $0xe8] sm:$0xf]
    %v128 = vld [vmem:[#allocation4 + $0xec] sm:$0xf]
    %v129 = vld [vmem:[#allocation4 + $0xf0] sm:$0xf]
    %v130 = vld [vmem:[#allocation4 + $0xf4] sm:$0xf]
    %v131 = vld [vmem:[#allocation4 + $0xf8] sm:$0xf]
    %v132 = vld [vmem:[#allocation4 + $0xfc] sm:$0xf]
    %v133 = vld [vmem:[#allocation4 + $0x100] sm:$0xf]
    %v134 = vld [vmem:[#allocation4 + $0x104] sm:$0xf]
    %v135 = vld [vmem:[#allocation4 + $0x108] sm:$0xf]
    %v136 = vld [vmem:[#allocation4 + $0x10c] sm:$0xf]
    %v137 = vld [vmem:[#allocation4 + $0x110] sm:$0xf]
    %v138 = vld [vmem:[#allocation4 + $0x114] sm:$0xf]
    %v139 = vld [vmem:[#allocation4 + $0x118] sm:$0xf]
    %v140 = vld [vmem:[#allocation4 + $0x11c] sm:$0xf]
    %v141 = vld [vmem:[#allocation4 + $0x120] sm:$0xf]
    %v142 = vld [vmem:[#allocation4 + $0x124] sm:$0xf]
    %v143 = vld [vmem:[#allocation4 + $0x128] sm:$0xf]
    %v144 = vld [vmem:[#allocation4 + $0x12c] sm:$0xf]
    %v145 = vld [vmem:[#allocation4 + $0x130] sm:$0xf]
    %v146 = vld [vmem:[#allocation4 + $0x134] sm:$0xf]
    %v147 = vld [vmem:[#allocation4 + $0x138] sm:$0xf]
    %v148 = vld [vmem:[#allocation4 + $0x13c] sm:$0xf]
    %v149 = vld [vmem:[#allocation4 + $0x140] sm:$0xf]
    %v150 = vld [vmem:[#allocation4 + $0x144] sm:$0xf]
    %v151 = vld [vmem:[#allocation4 + $0x148] sm:$0xf]
    %v152 = vld [vmem:[#allocation4 + $0x14c] sm:$0xf]
    %v153 = vld [vmem:[#allocation4 + $0x150] sm:$0xf]
    %v154 = vld [vmem:[#allocation4 + $0x154] sm:$0xf]
    %v155 = vld [vmem:[#allocation4 + $0x158] sm:$0xf]
    %v156 = vld [vmem:[#allocation4 + $0x15c] sm:$0xf]
    %v157 = vld [vmem:[#allocation4 + $0x160] sm:$0xf]
    %v158 = vld [vmem:[#allocation4 + $0x164] sm:$0xf]
    %v159 = vld [vmem:[#allocation4 + $0x168] sm:$0xf]
    %v160 = vld [vmem:[#allocation4 + $0x16c] sm:$0xf]
    %v161 = vld [vmem:[#allocation4 + $0x170] sm:$0xf]
    %v162 = vld [vmem:[#allocation4 + $0x174] sm:$0xf]
    %v163 = vld [vmem:[#allocation4 + $0x178] sm:$0xf]
    %v164 = vld [vmem:[#allocation4 + $0x17c] sm:$0xf]
    %v165 = vld [vmem:[%s3] sm:$0x1]
    %v168 = vcombine.high %v67, %v67
    %v170 = vunpack.c.l.s4 1983009808
    %v171 = vunpack.c.0.s8 %v170
    %v172 = vlaneseq
    %v173 = vshrl.u32 %v172, 7
    %v174 = vsub.s32 %v171, %v173
    %v175 = vrot.slane %v67, %v174
    %v177 = vunpack.c.l.s4 1983009808
    %v178 = vunpack.c.0.s8 %v177
    %v179 = vlaneseq
    %v180 = vshrl.u32 %v179, 7
    %v181 = vsub.s32 %v178, %v180
    %v182 = vrot.slane %v168, %v181
    %v183 = vcombine.high %v175, %v175
    %v184 = vcombine.high %v182, %v182
    %v186 = vunpack.c.l.s4 1983009808
    %v187 = vunpack.c.0.s8 %v186
    %v188 = vlaneseq
    %v189 = vshrl.u32 %v188, 7
    %v190 = vsub.s32 %v187, %v189
    %v191 = vrot.slane %v68, %v190
    %v192 = vcombine.high %v191, %v191
    %v295 = vunpack.c.l.b16 %v69
    %v296 = vunpack.c.l.b16 %v70
    %v297 = vunpack.c.l.b16 %v71
    %v298 = vunpack.c.l.b16 %v72
    %v299 = vunpack.c.l.b16 %v73
    %v300 = vunpack.c.l.b16 %v74
    %v301 = vunpack.c.l.b16 %v75
    %v302 = vunpack.c.l.b16 %v76
    %v303 = vunpack.c.l.b16 %v77
    %v304 = vunpack.c.l.b16 %v78
    %v305 = vunpack.c.l.b16 %v79
    %v306 = vunpack.c.l.b16 %v80
    %v307 = vunpack.c.l.b16 %v81
    %v308 = vunpack.c.l.b16 %v82
    %v309 = vunpack.c.l.b16 %v83
    %v310 = vunpack.c.l.b16 %v84
    %v311 = vunpack.c.l.b16 %v85
    %v312 = vunpack.c.l.b16 %v86
    %v313 = vunpack.c.l.b16 %v87
    %v314 = vunpack.c.l.b16 %v88
    %v315 = vunpack.c.l.b16 %v89
    %v316 = vunpack.c.l.b16 %v90
    %v317 = vunpack.c.l.b16 %v91
    %v318 = vunpack.c.l.b16 %v92
    %v319 = vunpack.c.l.b16 %v93
    %v320 = vunpack.c.l.b16 %v94
    %v321 = vunpack.c.l.b16 %v95
    %v322 = vunpack.c.l.b16 %v96
    %v323 = vunpack.c.l.b16 %v97
    %v324 = vunpack.c.l.b16 %v98
    %v325 = vunpack.c.l.b16 %v99
    %v326 = vunpack.c.l.b16 %v100
    %v327 = vunpack.c.l.b16 %v101
    %v328 = vunpack.c.l.b16 %v102
    %v329 = vunpack.c.l.b16 %v103
    %v330 = vunpack.c.l.b16 %v104
    %v331 = vunpack.c.l.b16 %v105
    %v332 = vunpack.c.l.b16 %v106
    %v333 = vunpack.c.l.b16 %v107
    %v334 = vunpack.c.l.b16 %v108
    %v335 = vunpack.c.l.b16 %v109
    %v336 = vunpack.c.l.b16 %v110
    %v337 = vunpack.c.l.b16 %v111
    %v338 = vunpack.c.l.b16 %v112
    %v339 = vunpack.c.l.b16 %v113
    %v340 = vunpack.c.l.b16 %v114
    %v341 = vunpack.c.l.b16 %v115
    %v342 = vunpack.c.l.b16 %v116
    %v343 = vunpack.c.l.b16 %v117
    %v344 = vunpack.c.l.b16 %v118
    %v345 = vunpack.c.l.b16 %v119
    %v346 = vunpack.c.l.b16 %v120
    %v347 = vunpack.c.l.b16 %v121
    %v348 = vunpack.c.l.b16 %v122
    %v349 = vunpack.c.l.b16 %v123
    %v350 = vunpack.c.l.b16 %v124
    %v351 = vunpack.c.l.b16 %v125
    %v352 = vunpack.c.l.b16 %v126
    %v353 = vunpack.c.l.b16 %v127
    %v354 = vunpack.c.l.b16 %v128
    %v355 = vunpack.c.l.b16 %v129
    %v356 = vunpack.c.l.b16 %v130
    %v357 = vunpack.c.l.b16 %v131
    %v358 = vunpack.c.l.b16 %v132
    %v359 = vunpack.c.l.b16 %v133
    %v360 = vunpack.c.l.b16 %v134
    %v361 = vunpack.c.l.b16 %v135
    %v362 = vunpack.c.l.b16 %v136
    %v363 = vunpack.c.l.b16 %v137
    %v364 = vunpack.c.l.b16 %v138
    %v365 = vunpack.c.l.b16 %v139
    %v366 = vunpack.c.l.b16 %v140
    %v367 = vunpack.c.l.b16 %v141
    %v368 = vunpack.c.l.b16 %v142
    %v369 = vunpack.c.l.b16 %v143
    %v370 = vunpack.c.l.b16 %v144
    %v371 = vunpack.c.l.b16 %v145
    %v372 = vunpack.c.l.b16 %v146
    %v373 = vunpack.c.l.b16 %v147
    %v374 = vunpack.c.l.b16 %v148
    %v375 = vunpack.c.l.b16 %v149
    %v376 = vunpack.c.l.b16 %v150
    %v377 = vunpack.c.l.b16 %v151
    %v378 = vunpack.c.l.b16 %v152
    %v379 = vunpack.c.l.b16 %v153
    %v380 = vunpack.c.l.b16 %v154
    %v381 = vunpack.c.l.b16 %v155
    %v382 = vunpack.c.l.b16 %v156
    %v383 = vunpack.c.l.b16 %v157
    %v384 = vunpack.c.l.b16 %v158
    %v385 = vunpack.c.l.b16 %v159
    %v386 = vunpack.c.l.b16 %v160
    %v387 = vunpack.c.l.b16 %v161
    %v388 = vunpack.c.l.b16 %v162
    %v389 = vunpack.c.l.b16 %v163
    %v390 = vunpack.c.l.b16 %v164
    %v391 = vpack.c.b16 %v296, %v295
    %v392 = vpack.c.b16 %v298, %v297
    %v393 = vpack.c.b16 %v300, %v299
    %v394 = vpack.c.b16 %v302, %v301
    %v395 = vpack.c.b16 %v304, %v303
    %v396 = vpack.c.b16 %v306, %v305
    %v397 = vpack.c.b16 %v308, %v307
    %v398 = vpack.c.b16 %v310, %v309
    %v399 = vpack.c.b16 %v312, %v311
    %v400 = vpack.c.b16 %v314, %v313
    %v401 = vpack.c.b16 %v316, %v315
    %v402 = vpack.c.b16 %v318, %v317
    %v403 = vpack.c.b16 %v320, %v319
    %v404 = vpack.c.b16 %v322, %v321
    %v405 = vpack.c.b16 %v324, %v323
    %v406 = vpack.c.b16 %v326, %v325
    %v407 = vpack.c.b16 %v328, %v327
    %v408 = vpack.c.b16 %v330, %v329
    %v409 = vpack.c.b16 %v332, %v331
    %v410 = vpack.c.b16 %v334, %v333
    %v411 = vpack.c.b16 %v336, %v335
    %v412 = vpack.c.b16 %v338, %v337
    %v413 = vpack.c.b16 %v340, %v339
    %v414 = vpack.c.b16 %v342, %v341
    %v415 = vpack.c.b16 %v344, %v343
    %v416 = vpack.c.b16 %v346, %v345
    %v417 = vpack.c.b16 %v348, %v347
    %v418 = vpack.c.b16 %v350, %v349
    %v419 = vpack.c.b16 %v352, %v351
    %v420 = vpack.c.b16 %v354, %v353
    %v421 = vpack.c.b16 %v356, %v355
    %v422 = vpack.c.b16 %v358, %v357
    %v423 = vpack.c.b16 %v360, %v359
    %v424 = vpack.c.b16 %v362, %v361
    %v425 = vpack.c.b16 %v364, %v363
    %v426 = vpack.c.b16 %v366, %v365
    %v427 = vpack.c.b16 %v368, %v367
    %v428 = vpack.c.b16 %v370, %v369
    %v429 = vpack.c.b16 %v372, %v371
    %v430 = vpack.c.b16 %v374, %v373
    %v431 = vpack.c.b16 %v376, %v375
    %v432 = vpack.c.b16 %v378, %v377
    %v433 = vpack.c.b16 %v380, %v379
    %v434 = vpack.c.b16 %v382, %v381
    %v435 = vpack.c.b16 %v384, %v383
    %v436 = vpack.c.b16 %v386, %v385
    %v437 = vpack.c.b16 %v388, %v387
    %v438 = vpack.c.b16 %v390, %v389
    %487 = vmatprep.subr.bf16.mxu0 0
    %488 = vmatpush1.bf16.msra.mxu0 %v398
    %489 = vmatprep.subr.bf16.mxu0 0
    %490 = vmatpush1.bf16.msra.mxu0 %v397
    %491 = vmatprep.subr.bf16.mxu0 0
    %492 = vmatpush1.bf16.msra.mxu0 %v396
    %493 = vmatprep.subr.bf16.mxu0 0
    %494 = vmatpush1.bf16.msra.mxu0 %v395
    %495 = vmatprep.subr.bf16.mxu0 0
    %496 = vmatpush1.bf16.msra.mxu0 %v394
    %497 = vmatprep.subr.bf16.mxu0 0
    %498 = vmatpush1.bf16.msra.mxu0 %v393
    %499 = vmatprep.subr.bf16.mxu0 0
    %500 = vmatpush1.bf16.msra.mxu0 %v392
    %501 = vmatprep.subr.bf16.mxu0 0
    %502 = vmatpush1.bf16.msra.mxu0 %v391
    %503 = vmatprep.subr.bf16.mxu0 0
    %504 = vmatpush2.bf16.msra.mxu0 %v406
    %505 = vmatprep.subr.bf16.mxu0 0
    %506 = vmatpush2.bf16.msra.mxu0 %v405
    %507 = vmatprep.subr.bf16.mxu0 0
    %508 = vmatpush2.bf16.msra.mxu0 %v404
    %509 = vmatprep.subr.bf16.mxu0 0
    %510 = vmatpush2.bf16.msra.mxu0 %v403
    %511 = vmatprep.subr.bf16.mxu0 0
    %512 = vmatpush2.bf16.msra.mxu0 %v402
    %513 = vmatprep.subr.bf16.mxu0 0
    %514 = vmatpush2.bf16.msra.mxu0 %v401
    %515 = vmatprep.subr.bf16.mxu0 0
    %516 = vmatpush2.bf16.msra.mxu0 %v400
    %517 = vmatprep.subr.bf16.mxu0 0
    %518 = vmatpush2.bf16.msra.mxu0 %v399
    %519 = vmatprep.mubr.bf16.mxu0 %v183
    %520 = vmatmul.mubr.bf16.gmra.mxu0 %v175
    %v521 = vpop.f32.mrf.mxu0
    %v522 = vadd.f32 %v165, %v521
    %v523 = vpop.f32.mrf.mxu0
    %v524 = vpop.f32.mrf.mxu0
    %v525 = vpop.f32.mrf.mxu0
    %526 = vdwg.mxu0
    %527 = vmatprep.subr.bf16.mxu0 0
    %528 = vmatpush1.bf16.msra.mxu0 %v414
    %529 = vmatprep.subr.bf16.mxu0 0
    %530 = vmatpush1.bf16.msra.mxu0 %v413
    %531 = vmatprep.subr.bf16.mxu0 0
    %532 = vmatpush1.bf16.msra.mxu0 %v412
    %533 = vmatprep.subr.bf16.mxu0 0
    %534 = vmatpush1.bf16.msra.mxu0 %v411
    %535 = vmatprep.subr.bf16.mxu0 0
    %536 = vmatpush1.bf16.msra.mxu0 %v410
    %537 = vmatprep.subr.bf16.mxu0 0
    %538 = vmatpush1.bf16.msra.mxu0 %v409
    %539 = vmatprep.subr.bf16.mxu0 0
    %540 = vmatpush1.bf16.msra.mxu0 %v408
    %541 = vmatprep.subr.bf16.mxu0 0
    %542 = vmatpush1.bf16.msra.mxu0 %v407
    %543 = vmatprep.subr.bf16.mxu0 0
    %544 = vmatpush2.bf16.msra.mxu0 %v422
    %545 = vmatprep.subr.bf16.mxu0 0
    %546 = vmatpush2.bf16.msra.mxu0 %v421
    %547 = vmatprep.subr.bf16.mxu0 0
    %548 = vmatpush2.bf16.msra.mxu0 %v420
    %549 = vmatprep.subr.bf16.mxu0 0
    %550 = vmatpush2.bf16.msra.mxu0 %v419
    %551 = vmatprep.subr.bf16.mxu0 0
    %552 = vmatpush2.bf16.msra.mxu0 %v418
    %553 = vmatprep.subr.bf16.mxu0 0
    %554 = vmatpush2.bf16.msra.mxu0 %v417
    %555 = vmatprep.subr.bf16.mxu0 0
    %556 = vmatpush2.bf16.msra.mxu0 %v416
    %557 = vmatprep.subr.bf16.mxu0 0
    %558 = vmatpush2.bf16.msra.mxu0 %v415
    %559 = vmatprep.mubr.bf16.mxu0 %v184
    %560 = vmatmul.mubr.bf16.gmra.mxu0 %v182
    %v561 = vpop.f32.mrf.mxu0
    %v562 = vadd.f32 %v522, %v561
    %v563 = vpop.f32.mrf.mxu0
    %v564 = vpop.f32.mrf.mxu0
    %v565 = vpop.f32.mrf.mxu0
    %566 = vdwg.mxu0
    %567 = vmatprep.subr.bf16.mxu0 0
    %568 = vmatpush1.bf16.msra.mxu0 %v430
    %569 = vmatprep.subr.bf16.mxu0 0
    %570 = vmatpush1.bf16.msra.mxu0 %v429
    %571 = vmatprep.subr.bf16.mxu0 0
    %572 = vmatpush1.bf16.msra.mxu0 %v428
    %573 = vmatprep.subr.bf16.mxu0 0
    %574 = vmatpush1.bf16.msra.mxu0 %v427
    %575 = vmatprep.subr.bf16.mxu0 0
    %576 = vmatpush1.bf16.msra.mxu0 %v426
    %577 = vmatprep.subr.bf16.mxu0 0
    %578 = vmatpush1.bf16.msra.mxu0 %v425
    %579 = vmatprep.subr.bf16.mxu0 0
    %580 = vmatpush1.bf16.msra.mxu0 %v424
    %581 = vmatprep.subr.bf16.mxu0 0
    %582 = vmatpush1.bf16.msra.mxu0 %v423
    %583 = vmatprep.subr.bf16.mxu0 0
    %584 = vmatpush2.bf16.msra.mxu0 %v438
    %585 = vmatprep.subr.bf16.mxu0 0
    %586 = vmatpush2.bf16.msra.mxu0 %v437
    %587 = vmatprep.subr.bf16.mxu0 0
    %588 = vmatpush2.bf16.msra.mxu0 %v436
    %589 = vmatprep.subr.bf16.mxu0 0
    %590 = vmatpush2.bf16.msra.mxu0 %v435
    %591 = vmatprep.subr.bf16.mxu0 0
    %592 = vmatpush2.bf16.msra.mxu0 %v434
    %593 = vmatprep.subr.bf16.mxu0 0
    %594 = vmatpush2.bf16.msra.mxu0 %v433
    %595 = vmatprep.subr.bf16.mxu0 0
    %596 = vmatpush2.bf16.msra.mxu0 %v432
    %597 = vmatprep.subr.bf16.mxu0 0
    %598 = vmatpush2.bf16.msra.mxu0 %v431
    %599 = vmatprep.mubr.bf16.mxu0 %v192
    %600 = vmatmul.mubr.bf16.gmra.mxu0 %v191
    %v601 = vpop.f32.mrf.mxu0
    %v602 = vadd.f32 %v562, %v601
    %v603 = vpop.f32.mrf.mxu0
    %v604 = vpop.f32.mrf.mxu0
    %v605 = vpop.f32.mrf.mxu0
    %606 = vdwg.mxu0
    %v607 = vld [vmem:[%s4] sm:$0x1]
    %v608 = vadd.f32 %v602, %v607
    %v609 = vxor.u32 %v608, 2147483648
    %v610 = vmul.f32 %v609, 1.442695
    %v611 = vpow.pop %v610
    %v612 = vadd.f32 %v611, 1.0
    %v613 = vrcp.pop %v612
    %v614 = vmul.f32 1.0, %v613
    %616 = vrot.lane.b32.xlu0 %v607, 64
    %v617 = vpop.permute.xlu0 %616
    %v619 = vmul.f32 %v614, %v617
    %621 = vrot.lane.b32.xlu0 %v619, 64
    %v622 = vpop.permute.xlu0 %621
    %v624 = vadd.f32 %v602, %v622
    %v625 = vtanh.pop %v624
    %v626 = vsub.f32 1.0, %v614
    %628 = vrot.lane.b32.xlu0 %v625, 96
    %v629 = vpop.permute.xlu0 %628
    %v631 = vmul.f32 %v626, %v629
    %v632 = vld [vmem:[%s1] sm:$0x55]
    %v633 = vld [vmem:[%s1 + $0x8] sm:$0x5]
    %s634 = scalar_lea.vmem [#allocation4], 384
    %v635 = vld [vmem:[%s634] sm:$0xf]
    %v636 = vld [vmem:[%s634 + $0x4] sm:$0xf]
    %v637 = vld [vmem:[%s634 + $0x8] sm:$0xf]
    %v638 = vld [vmem:[%s634 + $0xc] sm:$0xf]
    %v639 = vld [vmem:[%s634 + $0x10] sm:$0xf]
    %v640 = vld [vmem:[%s634 + $0x14] sm:$0xf]
    %v641 = vld [vmem:[%s634 + $0x18] sm:$0xf]
    %v642 = vld [vmem:[%s634 + $0x1c] sm:$0xf]
    %v643 = vld [vmem:[%s634 + $0x20] sm:$0xf]
    %v644 = vld [vmem:[%s634 + $0x24] sm:$0xf]
    %v645 = vld [vmem:[%s634 + $0x28] sm:$0xf]
    %v646 = vld [vmem:[%s634 + $0x2c] sm:$0xf]
    %v647 = vld [vmem:[%s634 + $0x30] sm:$0xf]
    %v648 = vld [vmem:[%s634 + $0x34] sm:$0xf]
    %v649 = vld [vmem:[%s634 + $0x38] sm:$0xf]
    %v650 = vld [vmem:[%s634 + $0x3c] sm:$0xf]
    %v651 = vld [vmem:[%s634 + $0x40] sm:$0xf]
    %v652 = vld [vmem:[%s634 + $0x44] sm:$0xf]
    %v653 = vld [vmem:[%s634 + $0x48] sm:$0xf]
    %v654 = vld [vmem:[%s634 + $0x4c] sm:$0xf]
    %v655 = vld [vmem:[%s634 + $0x50] sm:$0xf]
    %v656 = vld [vmem:[%s634 + $0x54] sm:$0xf]
    %v657 = vld [vmem:[%s634 + $0x58] sm:$0xf]
    %v658 = vld [vmem:[%s634 + $0x5c] sm:$0xf]
    %v659 = vld [vmem:[%s634 + $0x60] sm:$0xf]
    %v660 = vld [vmem:[%s634 + $0x64] sm:$0xf]
    %v661 = vld [vmem:[%s634 + $0x68] sm:$0xf]
    %v662 = vld [vmem:[%s634 + $0x6c] sm:$0xf]
    %v663 = vld [vmem:[%s634 + $0x70] sm:$0xf]
    %v664 = vld [vmem:[%s634 + $0x74] sm:$0xf]
    %v665 = vld [vmem:[%s634 + $0x78] sm:$0xf]
    %v666 = vld [vmem:[%s634 + $0x7c] sm:$0xf]
    %v667 = vld [vmem:[%s634 + $0x80] sm:$0xf]
    %v668 = vld [vmem:[%s634 + $0x84] sm:$0xf]
    %v669 = vld [vmem:[%s634 + $0x88] sm:$0xf]
    %v670 = vld [vmem:[%s634 + $0x8c] sm:$0xf]
    %v671 = vld [vmem:[%s634 + $0x90] sm:$0xf]
    %v672 = vld [vmem:[%s634 + $0x94] sm:$0xf]
    %v673 = vld [vmem:[%s634 + $0x98] sm:$0xf]
    %v674 = vld [vmem:[%s634 + $0x9c] sm:$0xf]
    %v675 = vld [vmem:[%s634 + $0xa0] sm:$0xf]
    %v676 = vld [vmem:[%s634 + $0xa4] sm:$0xf]
    %v677 = vld [vmem:[%s634 + $0xa8] sm:$0xf]
    %v678 = vld [vmem:[%s634 + $0xac] sm:$0xf]
    %v679 = vld [vmem:[%s634 + $0xb0] sm:$0xf]
    %v680 = vld [vmem:[%s634 + $0xb4] sm:$0xf]
    %v681 = vld [vmem:[%s634 + $0xb8] sm:$0xf]
    %v682 = vld [vmem:[%s634 + $0xbc] sm:$0xf]
    %v683 = vld [vmem:[%s634 + $0xc0] sm:$0xf]
    %v684 = vld [vmem:[%s634 + $0xc4] sm:$0xf]
    %v685 = vld [vmem:[%s634 + $0xc8] sm:$0xf]
    %v686 = vld [vmem:[%s634 + $0xcc] sm:$0xf]
    %v687 = vld [vmem:[%s634 + $0xd0] sm:$0xf]
    %v688 = vld [vmem:[%s634 + $0xd4] sm:$0xf]
    %v689 = vld [vmem:[%s634 + $0xd8] sm:$0xf]
    %v690 = vld [vmem:[%s634 + $0xdc] sm:$0xf]
    %v691 = vld [vmem:[%s634 + $0xe0] sm:$0xf]
    %v692 = vld [vmem:[%s634 + $0xe4] sm:$0xf]
    %v693 = vld [vmem:[%s634 + $0xe8] sm:$0xf]
    %v694 = vld [vmem:[%s634 + $0xec] sm:$0xf]
    %v695 = vld [vmem:[%s634 + $0xf0] sm:$0xf]
    %v696 = vld [vmem:[%s634 + $0xf4] sm:$0xf]
    %v697 = vld [vmem:[%s634 + $0xf8] sm:$0xf]
    %v698 = vld [vmem:[%s634 + $0xfc] sm:$0xf]
    %v699 = vld [vmem:[%s634 + $0x100] sm:$0xf]
    %v700 = vld [vmem:[%s634 + $0x104] sm:$0xf]
    %v701 = vld [vmem:[%s634 + $0x108] sm:$0xf]
    %v702 = vld [vmem:[%s634 + $0x10c] sm:$0xf]
    %v703 = vld [vmem:[%s634 + $0x110] sm:$0xf]
    %v704 = vld [vmem:[%s634 + $0x114] sm:$0xf]
    %v705 = vld [vmem:[%s634 + $0x118] sm:$0xf]
    %v706 = vld [vmem:[%s634 + $0x11c] sm:$0xf]
    %v707 = vld [vmem:[%s634 + $0x120] sm:$0xf]
    %v708 = vld [vmem:[%s634 + $0x124] sm:$0xf]
    %v709 = vld [vmem:[%s634 + $0x128] sm:$0xf]
    %v710 = vld [vmem:[%s634 + $0x12c] sm:$0xf]
    %v711 = vld [vmem:[%s634 + $0x130] sm:$0xf]
    %v712 = vld [vmem:[%s634 + $0x134] sm:$0xf]
    %v713 = vld [vmem:[%s634 + $0x138] sm:$0xf]
    %v714 = vld [vmem:[%s634 + $0x13c] sm:$0xf]
    %v715 = vld [vmem:[%s634 + $0x140] sm:$0xf]
    %v716 = vld [vmem:[%s634 + $0x144] sm:$0xf]
    %v717 = vld [vmem:[%s634 + $0x148] sm:$0xf]
    %v718 = vld [vmem:[%s634 + $0x14c] sm:$0xf]
    %v719 = vld [vmem:[%s634 + $0x150] sm:$0xf]
    %v720 = vld [vmem:[%s634 + $0x154] sm:$0xf]
    %v721 = vld [vmem:[%s634 + $0x158] sm:$0xf]
    %v722 = vld [vmem:[%s634 + $0x15c] sm:$0xf]
    %v723 = vld [vmem:[%s634 + $0x160] sm:$0xf]
    %v724 = vld [vmem:[%s634 + $0x164] sm:$0xf]
    %v725 = vld [vmem:[%s634 + $0x168] sm:$0xf]
    %v726 = vld [vmem:[%s634 + $0x16c] sm:$0xf]
    %v727 = vld [vmem:[%s634 + $0x170] sm:$0xf]
    %v728 = vld [vmem:[%s634 + $0x174] sm:$0xf]
    %v729 = vld [vmem:[%s634 + $0x178] sm:$0xf]
    %v730 = vld [vmem:[%s634 + $0x17c] sm:$0xf]
    %v731 = vld [vmem:[%s3 + $0x1] sm:$0x1]
    %v734 = vcombine.high %v632, %v632
    %v736 = vunpack.c.l.s4 1983009808
    %v737 = vunpack.c.0.s8 %v736
    %v738 = vlaneseq
    %v739 = vshrl.u32 %v738, 7
    %v740 = vsub.s32 %v737, %v739
    %v741 = vrot.slane %v632, %v740
    %v743 = vunpack.c.l.s4 1983009808
    %v744 = vunpack.c.0.s8 %v743
    %v745 = vlaneseq
    %v746 = vshrl.u32 %v745, 7
    %v747 = vsub.s32 %v744, %v746
    %v748 = vrot.slane %v734, %v747
    %v749 = vcombine.high %v741, %v741
    %v750 = vcombine.high %v748, %v748
    %v752 = vunpack.c.l.s4 1983009808
    %v753 = vunpack.c.0.s8 %v752
    %v754 = vlaneseq
    %v755 = vshrl.u32 %v754, 7
    %v756 = vsub.s32 %v753, %v755
    %v757 = vrot.slane %v633, %v756
    %v758 = vcombine.high %v757, %v757
    %v760 = vshrl.u32 %v741, 16
    %v763 = vshrl.u32 %v749, 16
    %v766 = vshrl.u32 %v748, 16
    %v769 = vshrl.u32 %v750, 16
    %v772 = vshrl.u32 %v757, 16
    %v775 = vshrl.u32 %v758, 16
    %v879 = vunpack.c.l.b16 %v635
    %v880 = vunpack.c.l.b16 %v636
    %v881 = vunpack.c.l.b16 %v637
    %v882 = vunpack.c.l.b16 %v638
    %v883 = vunpack.c.l.b16 %v639
    %v884 = vunpack.c.l.b16 %v640
    %v885 = vunpack.c.l.b16 %v641
    %v886 = vunpack.c.l.b16 %v642
    %v887 = vunpack.c.l.b16 %v643
    %v888 = vunpack.c.l.b16 %v644
    %v889 = vunpack.c.l.b16 %v645
    %v890 = vunpack.c.l.b16 %v646
    %v891 = vunpack.c.l.b16 %v647
    %v892 = vunpack.c.l.b16 %v648
    %v893 = vunpack.c.l.b16 %v649
    %v894 = vunpack.c.l.b16 %v650
    %v895 = vunpack.c.l.b16 %v651
    %v896 = vunpack.c.l.b16 %v652
    %v897 = vunpack.c.l.b16 %v653
    %v898 = vunpack.c.l.b16 %v654
    %v899 = vunpack.c.l.b16 %v655
    %v900 = vunpack.c.l.b16 %v656
    %v901 = vunpack.c.l.b16 %v657
    %v902 = vunpack.c.l.b16 %v658
    %v903 = vunpack.c.l.b16 %v659
    %v904 = vunpack.c.l.b16 %v660
    %v905 = vunpack.c.l.b16 %v661
    %v906 = vunpack.c.l.b16 %v662
    %v907 = vunpack.c.l.b16 %v663
    %v908 = vunpack.c.l.b16 %v664
    %v909 = vunpack.c.l.b16 %v665
    %v910 = vunpack.c.l.b16 %v666
    %v911 = vunpack.c.l.b16 %v667
    %v912 = vunpack.c.l.b16 %v668
    %v913 = vunpack.c.l.b16 %v669
    %v914 = vunpack.c.l.b16 %v670
    %v915 = vunpack.c.l.b16 %v671
    %v916 = vunpack.c.l.b16 %v672
    %v917 = vunpack.c.l.b16 %v673
    %v918 = vunpack.c.l.b16 %v674
    %v919 = vunpack.c.l.b16 %v675
    %v920 = vunpack.c.l.b16 %v676
    %v921 = vunpack.c.l.b16 %v677
    %v922 = vunpack.c.l.b16 %v678
    %v923 = vunpack.c.l.b16 %v679
    %v924 = vunpack.c.l.b16 %v680
    %v925 = vunpack.c.l.b16 %v681
    %v926 = vunpack.c.l.b16 %v682
    %v927 = vunpack.c.l.b16 %v683
    %v928 = vunpack.c.l.b16 %v684
    %v929 = vunpack.c.l.b16 %v685
    %v930 = vunpack.c.l.b16 %v686
    %v931 = vunpack.c.l.b16 %v687
    %v932 = vunpack.c.l.b16 %v688
    %v933 = vunpack.c.l.b16 %v689
    %v934 = vunpack.c.l.b16 %v690
    %v935 = vunpack.c.l.b16 %v691
    %v936 = vunpack.c.l.b16 %v692
    %v937 = vunpack.c.l.b16 %v693
    %v938 = vunpack.c.l.b16 %v694
    %v939 = vunpack.c.l.b16 %v695
    %v940 = vunpack.c.l.b16 %v696
    %v941 = vunpack.c.l.b16 %v697
    %v942 = vunpack.c.l.b16 %v698
    %v943 = vunpack.c.l.b16 %v699
    %v944 = vunpack.c.l.b16 %v700
    %v945 = vunpack.c.l.b16 %v701
    %v946 = vunpack.c.l.b16 %v702
    %v947 = vunpack.c.l.b16 %v703
    %v948 = vunpack.c.l.b16 %v704
    %v949 = vunpack.c.l.b16 %v705
    %v950 = vunpack.c.l.b16 %v706
    %v951 = vunpack.c.l.b16 %v707
    %v952 = vunpack.c.l.b16 %v708
    %v953 = vunpack.c.l.b16 %v709
    %v954 = vunpack.c.l.b16 %v710
    %v955 = vunpack.c.l.b16 %v711
    %v956 = vunpack.c.l.b16 %v712
    %v957 = vunpack.c.l.b16 %v713
    %v958 = vunpack.c.l.b16 %v714
    %v959 = vunpack.c.l.b16 %v715
    %v960 = vunpack.c.l.b16 %v716
    %v961 = vunpack.c.l.b16 %v717
    %v962 = vunpack.c.l.b16 %v718
    %v963 = vunpack.c.l.b16 %v719
    %v964 = vunpack.c.l.b16 %v720
    %v965 = vunpack.c.l.b16 %v721
    %v966 = vunpack.c.l.b16 %v722
    %v967 = vunpack.c.l.b16 %v723
    %v968 = vunpack.c.l.b16 %v724
    %v969 = vunpack.c.l.b16 %v725
    %v970 = vunpack.c.l.b16 %v726
    %v971 = vunpack.c.l.b16 %v727
    %v972 = vunpack.c.l.b16 %v728
    %v973 = vunpack.c.l.b16 %v729
    %v974 = vunpack.c.l.b16 %v730
    %v975 = vpack.c.b16 %v880, %v879
    %v976 = vpack.c.b16 %v882, %v881
    %v977 = vpack.c.b16 %v884, %v883
    %v978 = vpack.c.b16 %v886, %v885
    %v979 = vpack.c.b16 %v888, %v887
    %v980 = vpack.c.b16 %v890, %v889
    %v981 = vpack.c.b16 %v892, %v891
    %v982 = vpack.c.b16 %v894, %v893
    %v983 = vpack.c.b16 %v896, %v895
    %v984 = vpack.c.b16 %v898, %v897
    %v985 = vpack.c.b16 %v900, %v899
    %v986 = vpack.c.b16 %v902, %v901
    %v987 = vpack.c.b16 %v904, %v903
    %v988 = vpack.c.b16 %v906, %v905
    %v989 = vpack.c.b16 %v908, %v907
    %v990 = vpack.c.b16 %v910, %v909
    %v991 = vpack.c.b16 %v912, %v911
    %v992 = vpack.c.b16 %v914, %v913
    %v993 = vpack.c.b16 %v916, %v915
    %v994 = vpack.c.b16 %v918, %v917
    %v995 = vpack.c.b16 %v920, %v919
    %v996 = vpack.c.b16 %v922, %v921
    %v997 = vpack.c.b16 %v924, %v923
    %v998 = vpack.c.b16 %v926, %v925
    %v999 = vpack.c.b16 %v928, %v927
    %v1000 = vpack.c.b16 %v930, %v929
    %v1001 = vpack.c.b16 %v932, %v931
    %v1002 = vpack.c.b16 %v934, %v933
    %v1003 = vpack.c.b16 %v936, %v935
    %v1004 = vpack.c.b16 %v938, %v937
    %v1005 = vpack.c.b16 %v940, %v939
    %v1006 = vpack.c.b16 %v942, %v941
    %v1007 = vpack.c.b16 %v944, %v943
    %v1008 = vpack.c.b16 %v946, %v945
    %v1009 = vpack.c.b16 %v948, %v947
    %v1010 = vpack.c.b16 %v950, %v949
    %v1011 = vpack.c.b16 %v952, %v951
    %v1012 = vpack.c.b16 %v954, %v953
    %v1013 = vpack.c.b16 %v956, %v955
    %v1014 = vpack.c.b16 %v958, %v957
    %v1015 = vpack.c.b16 %v960, %v959
    %v1016 = vpack.c.b16 %v962, %v961
    %v1017 = vpack.c.b16 %v964, %v963
    %v1018 = vpack.c.b16 %v966, %v965
    %v1019 = vpack.c.b16 %v968, %v967
    %v1020 = vpack.c.b16 %v970, %v969
    %v1021 = vpack.c.b16 %v972, %v971
    %v1022 = vpack.c.b16 %v974, %v973
    %1071 = vmatprep.subr.bf16.mxu0 0
    %1072 = vmatpush1.bf16.msra.mxu0 %v982
    %1073 = vmatprep.subr.bf16.mxu0 0
    %1074 = vmatpush1.bf16.msra.mxu0 %v981
    %1075 = vmatprep.subr.bf16.mxu0 0
    %1076 = vmatpush1.bf16.msra.mxu0 %v980
    %1077 = vmatprep.subr.bf16.mxu0 0
    %1078 = vmatpush1.bf16.msra.mxu0 %v979
    %1079 = vmatprep.subr.bf16.mxu0 0
    %1080 = vmatpush1.bf16.msra.mxu0 %v978
    %1081 = vmatprep.subr.bf16.mxu0 0
    %1082 = vmatpush1.bf16.msra.mxu0 %v977
    %1083 = vmatprep.subr.bf16.mxu0 0
    %1084 = vmatpush1.bf16.msra.mxu0 %v976
    %1085 = vmatprep.subr.bf16.mxu0 0
    %1086 = vmatpush1.bf16.msra.mxu0 %v975
    %1087 = vmatprep.subr.bf16.mxu0 0
    %1088 = vmatpush2.bf16.msra.mxu0 %v990
    %1089 = vmatprep.subr.bf16.mxu0 0
    %1090 = vmatpush2.bf16.msra.mxu0 %v989
    %1091 = vmatprep.subr.bf16.mxu0 0
    %1092 = vmatpush2.bf16.msra.mxu0 %v988
    %1093 = vmatprep.subr.bf16.mxu0 0
    %1094 = vmatpush2.bf16.msra.mxu0 %v987
    %1095 = vmatprep.subr.bf16.mxu0 0
    %1096 = vmatpush2.bf16.msra.mxu0 %v986
    %1097 = vmatprep.subr.bf16.mxu0 0
    %1098 = vmatpush2.bf16.msra.mxu0 %v985
    %1099 = vmatprep.subr.bf16.mxu0 0
    %1100 = vmatpush2.bf16.msra.mxu0 %v984
    %1101 = vmatprep.subr.bf16.mxu0 0
    %1102 = vmatpush2.bf16.msra.mxu0 %v983
    %1103 = vmatprep.mubr.bf16.mxu0 %v763
    %1104 = vmatmul.mubr.bf16.gmra.mxu0 %v760
    %v1105 = vpop.f32.mrf.mxu0
    %v1106 = vadd.f32 %v731, %v1105
    %v1107 = vpop.f32.mrf.mxu0
    %v1108 = vpop.f32.mrf.mxu0
    %v1109 = vpop.f32.mrf.mxu0
    %1110 = vdwg.mxu0
    %1111 = vmatprep.subr.bf16.mxu0 0
    %1112 = vmatpush1.bf16.msra.mxu0 %v998
    %1113 = vmatprep.subr.bf16.mxu0 0
    %1114 = vmatpush1.bf16.msra.mxu0 %v997
    %1115 = vmatprep.subr.bf16.mxu0 0
    %1116 = vmatpush1.bf16.msra.mxu0 %v996
    %1117 = vmatprep.subr.bf16.mxu0 0
    %1118 = vmatpush1.bf16.msra.mxu0 %v995
    %1119 = vmatprep.subr.bf16.mxu0 0
    %1120 = vmatpush1.bf16.msra.mxu0 %v994
    %1121 = vmatprep.subr.bf16.mxu0 0
    %1122 = vmatpush1.bf16.msra.mxu0 %v993
    %1123 = vmatprep.subr.bf16.mxu0 0
    %1124 = vmatpush1.bf16.msra.mxu0 %v992
    %1125 = vmatprep.subr.bf16.mxu0 0
    %1126 = vmatpush1.bf16.msra.mxu0 %v991
    %1127 = vmatprep.subr.bf16.mxu0 0
    %1128 = vmatpush2.bf16.msra.mxu0 %v1006
    %1129 = vmatprep.subr.bf16.mxu0 0
    %1130 = vmatpush2.bf16.msra.mxu0 %v1005
    %1131 = vmatprep.subr.bf16.mxu0 0
    %1132 = vmatpush2.bf16.msra.mxu0 %v1004
    %1133 = vmatprep.subr.bf16.mxu0 0
    %1134 = vmatpush2.bf16.msra.mxu0 %v1003
    %1135 = vmatprep.subr.bf16.mxu0 0
    %1136 = vmatpush2.bf16.msra.mxu0 %v1002
    %1137 = vmatprep.subr.bf16.mxu0 0
    %1138 = vmatpush2.bf16.msra.mxu0 %v1001
    %1139 = vmatprep.subr.bf16.mxu0 0
    %1140 = vmatpush2.bf16.msra.mxu0 %v1000
    %1141 = vmatprep.subr.bf16.mxu0 0
    %1142 = vmatpush2.bf16.msra.mxu0 %v999
    %1143 = vmatprep.mubr.bf16.mxu0 %v769
    %1144 = vmatmul.mubr.bf16.gmra.mxu0 %v766
    %v1145 = vpop.f32.mrf.mxu0
    %v1146 = vadd.f32 %v1106, %v1145
    %v1147 = vpop.f32.mrf.mxu0
    %v1148 = vpop.f32.mrf.mxu0
    %v1149 = vpop.f32.mrf.mxu0
    %1150 = vdwg.mxu0
    %1151 = vmatprep.subr.bf16.mxu0 0
    %1152 = vmatpush1.bf16.msra.mxu0 %v1014
    %1153 = vmatprep.subr.bf16.mxu0 0
    %1154 = vmatpush1.bf16.msra.mxu0 %v1013
    %1155 = vmatprep.subr.bf16.mxu0 0
    %1156 = vmatpush1.bf16.msra.mxu0 %v1012
    %1157 = vmatprep.subr.bf16.mxu0 0
    %1158 = vmatpush1.bf16.msra.mxu0 %v1011
    %1159 = vmatprep.subr.bf16.mxu0 0
    %1160 = vmatpush1.bf16.msra.mxu0 %v1010
    %1161 = vmatprep.subr.bf16.mxu0 0
    %1162 = vmatpush1.bf16.msra.mxu0 %v1009
    %1163 = vmatprep.subr.bf16.mxu0 0
    %1164 = vmatpush1.bf16.msra.mxu0 %v1008
    %1165 = vmatprep.subr.bf16.mxu0 0
    %1166 = vmatpush1.bf16.msra.mxu0 %v1007
    %1167 = vmatprep.subr.bf16.mxu0 0
    %1168 = vmatpush2.bf16.msra.mxu0 %v1022
    %1169 = vmatprep.subr.bf16.mxu0 0
    %1170 = vmatpush2.bf16.msra.mxu0 %v1021
    %1171 = vmatprep.subr.bf16.mxu0 0
    %1172 = vmatpush2.bf16.msra.mxu0 %v1020
    %1173 = vmatprep.subr.bf16.mxu0 0
    %1174 = vmatpush2.bf16.msra.mxu0 %v1019
    %1175 = vmatprep.subr.bf16.mxu0 0
    %1176 = vmatpush2.bf16.msra.mxu0 %v1018
    %1177 = vmatprep.subr.bf16.mxu0 0
    %1178 = vmatpush2.bf16.msra.mxu0 %v1017
    %1179 = vmatprep.subr.bf16.mxu0 0
    %1180 = vmatpush2.bf16.msra.mxu0 %v1016
    %1181 = vmatprep.subr.bf16.mxu0 0
    %1182 = vmatpush2.bf16.msra.mxu0 %v1015
    %1183 = vmatprep.mubr.bf16.mxu0 %v775
    %1184 = vmatmul.mubr.bf16.gmra.mxu0 %v772
    %v1185 = vpop.f32.mrf.mxu0
    %v1186 = vadd.f32 %v1146, %v1185
    %v1187 = vpop.f32.mrf.mxu0
    %v1188 = vpop.f32.mrf.mxu0
    %v1189 = vpop.f32.mrf.mxu0
    %1190 = vdwg.mxu0
    %v1191 = vld [vmem:[%s4 + $0x1] sm:$0x1]
    %v1192 = vadd.f32 %v1186, %v1191
    %v1193 = vxor.u32 %v1192, 2147483648
    %v1194 = vmul.f32 %v1193, 1.442695
    %v1195 = vpow.pop %v1194
    %v1196 = vadd.f32 %v1195, 1.0
    %v1197 = vrcp.pop %v1196
    %v1198 = vmul.f32 1.0, %v1197
    %1200 = vrot.lane.b32.xlu0 %v1191, 64
    %v1201 = vpop.permute.xlu0 %1200
    %v1203 = vmul.f32 %v1198, %v1201
    %1205 = vrot.lane.b32.xlu0 %v1203, 64
    %v1206 = vpop.permute.xlu0 %1205
    %v1208 = vadd.f32 %v1186, %v1206
    %v1209 = vtanh.pop %v1208
    %v1210 = vsub.f32 1.0, %v1198
    %1212 = vrot.lane.b32.xlu0 %v1209, 96
    %v1213 = vpop.permute.xlu0 %1212
    %v1215 = vmul.f32 %v1210, %v1213
    %v1216 = vld [vmem:[%s1] sm:$0xaa]
    %v1217 = vld [vmem:[%s1 + $0x8] sm:$0xa]
    %s1218 = scalar_lea.vmem [#allocation4], 768
    %v1219 = vld [vmem:[%s1218] sm:$0xf]
    %v1220 = vld [vmem:[%s1218 + $0x4] sm:$0xf]
    %v1221 = vld [vmem:[%s1218 + $0x8] sm:$0xf]
    %v1222 = vld [vmem:[%s1218 + $0xc] sm:$0xf]
    %v1223 = vld [vmem:[%s1218 + $0x10] sm:$0xf]
    %v1224 = vld [vmem:[%s1218 + $0x14] sm:$0xf]
    %v1225 = vld [vmem:[%s1218 + $0x18] sm:$0xf]
    %v1226 = vld [vmem:[%s1218 + $0x1c] sm:$0xf]
    %v1227 = vld [vmem:[%s1218 + $0x20] sm:$0xf]
    %v1228 = vld [vmem:[%s1218 + $0x24] sm:$0xf]
    %v1229 = vld [vmem:[%s1218 + $0x28] sm:$0xf]
    %v1230 = vld [vmem:[%s1218 + $0x2c] sm:$0xf]
    %v1231 = vld [vmem:[%s1218 + $0x30] sm:$0xf]
    %v1232 = vld [vmem:[%s1218 + $0x34] sm:$0xf]
    %v1233 = vld [vmem:[%s1218 + $0x38] sm:$0xf]
    %v1234 = vld [vmem:[%s1218 + $0x3c] sm:$0xf]
    %v1235 = vld [vmem:[%s1218 + $0x40] sm:$0xf]
    %v1236 = vld [vmem:[%s1218 + $0x44] sm:$0xf]
    %v1237 = vld [vmem:[%s1218 + $0x48] sm:$0xf]
    %v1238 = vld [vmem:[%s1218 + $0x4c] sm:$0xf]
    %v1239 = vld [vmem:[%s1218 + $0x50] sm:$0xf]
    %v1240 = vld [vmem:[%s1218 + $0x54] sm:$0xf]
    %v1241 = vld [vmem:[%s1218 + $0x58] sm:$0xf]
    %v1242 = vld [vmem:[%s1218 + $0x5c] sm:$0xf]
    %v1243 = vld [vmem:[%s1218 + $0x60] sm:$0xf]
    %v1244 = vld [vmem:[%s1218 + $0x64] sm:$0xf]
    %v1245 = vld [vmem:[%s1218 + $0x68] sm:$0xf]
    %v1246 = vld [vmem:[%s1218 + $0x6c] sm:$0xf]
    %v1247 = vld [vmem:[%s1218 + $0x70] sm:$0xf]
    %v1248 = vld [vmem:[%s1218 + $0x74] sm:$0xf]
    %v1249 = vld [vmem:[%s1218 + $0x78] sm:$0xf]
    %v1250 = vld [vmem:[%s1218 + $0x7c] sm:$0xf]
    %v1251 = vld [vmem:[%s1218 + $0x80] sm:$0xf]
    %v1252 = vld [vmem:[%s1218 + $0x84] sm:$0xf]
    %v1253 = vld [vmem:[%s1218 + $0x88] sm:$0xf]
    %v1254 = vld [vmem:[%s1218 + $0x8c] sm:$0xf]
    %v1255 = vld [vmem:[%s1218 + $0x90] sm:$0xf]
    %v1256 = vld [vmem:[%s1218 + $0x94] sm:$0xf]
    %v1257 = vld [vmem:[%s1218 + $0x98] sm:$0xf]
    %v1258 = vld [vmem:[%s1218 + $0x9c] sm:$0xf]
    %v1259 = vld [vmem:[%s1218 + $0xa0] sm:$0xf]
    %v1260 = vld [vmem:[%s1218 + $0xa4] sm:$0xf]
    %v1261 = vld [vmem:[%s1218 + $0xa8] sm:$0xf]
    %v1262 = vld [vmem:[%s1218 + $0xac] sm:$0xf]
    %v1263 = vld [vmem:[%s1218 + $0xb0] sm:$0xf]
    %v1264 = vld [vmem:[%s1218 + $0xb4] sm:$0xf]
    %v1265 = vld [vmem:[%s1218 + $0xb8] sm:$0xf]
    %v1266 = vld [vmem:[%s1218 + $0xbc] sm:$0xf]
    %v1267 = vld [vmem:[%s1218 + $0xc0] sm:$0xf]
    %v1268 = vld [vmem:[%s1218 + $0xc4] sm:$0xf]
    %v1269 = vld [vmem:[%s1218 + $0xc8] sm:$0xf]
    %v1270 = vld [vmem:[%s1218 + $0xcc] sm:$0xf]
    %v1271 = vld [vmem:[%s1218 + $0xd0] sm:$0xf]
    %v1272 = vld [vmem:[%s1218 + $0xd4] sm:$0xf]
    %v1273 = vld [vmem:[%s1218 + $0xd8] sm:$0xf]
    %v1274 = vld [vmem:[%s1218 + $0xdc] sm:$0xf]
    %v1275 = vld [vmem:[%s1218 + $0xe0] sm:$0xf]
    %v1276 = vld [vmem:[%s1218 + $0xe4] sm:$0xf]
    %v1277 = vld [vmem:[%s1218 + $0xe8] sm:$0xf]
    %v1278 = vld [vmem:[%s1218 + $0xec] sm:$0xf]
    %v1279 = vld [vmem:[%s1218 + $0xf0] sm:$0xf]
    %v1280 = vld [vmem:[%s1218 + $0xf4] sm:$0xf]
    %v1281 = vld [vmem:[%s1218 + $0xf8] sm:$0xf]
    %v1282 = vld [vmem:[%s1218 + $0xfc] sm:$0xf]
    %v1283 = vld [vmem:[%s1218 + $0x100] sm:$0xf]
    %v1284 = vld [vmem:[%s1218 + $0x104] sm:$0xf]
    %v1285 = vld [vmem:[%s1218 + $0x108] sm:$0xf]
    %v1286 = vld [vmem:[%s1218 + $0x10c] sm:$0xf]
    %v1287 = vld [vmem:[%s1218 + $0x110] sm:$0xf]
    %v1288 = vld [vmem:[%s1218 + $0x114] sm:$0xf]
    %v1289 = vld [vmem:[%s1218 + $0x118] sm:$0xf]
    %v1290 = vld [vmem:[%s1218 + $0x11c] sm:$0xf]
    %v1291 = vld [vmem:[%s1218 + $0x120] sm:$0xf]
    %v1292 = vld [vmem:[%s1218 + $0x124] sm:$0xf]
    %v1293 = vld [vmem:[%s1218 + $0x128] sm:$0xf]
    %v1294 = vld [vmem:[%s1218 + $0x12c] sm:$0xf]
    %v1295 = vld [vmem:[%s1218 + $0x130] sm:$0xf]
    %v1296 = vld [vmem:[%s1218 + $0x134] sm:$0xf]
    %v1297 = vld [vmem:[%s1218 + $0x138] sm:$0xf]
    %v1298 = vld [vmem:[%s1218 + $0x13c] sm:$0xf]
    %v1299 = vld [vmem:[%s1218 + $0x140] sm:$0xf]
    %v1300 = vld [vmem:[%s1218 + $0x144] sm:$0xf]
    %v1301 = vld [vmem:[%s1218 + $0x148] sm:$0xf]
    %v1302 = vld [vmem:[%s1218 + $0x14c] sm:$0xf]
    %v1303 = vld [vmem:[%s1218 + $0x150] sm:$0xf]
    %v1304 = vld [vmem:[%s1218 + $0x154] sm:$0xf]
    %v1305 = vld [vmem:[%s1218 + $0x158] sm:$0xf]
    %v1306 = vld [vmem:[%s1218 + $0x15c] sm:$0xf]
    %v1307 = vld [vmem:[%s1218 + $0x160] sm:$0xf]
    %v1308 = vld [vmem:[%s1218 + $0x164] sm:$0xf]
    %v1309 = vld [vmem:[%s1218 + $0x168] sm:$0xf]
    %v1310 = vld [vmem:[%s1218 + $0x16c] sm:$0xf]
    %v1311 = vld [vmem:[%s1218 + $0x170] sm:$0xf]
    %v1312 = vld [vmem:[%s1218 + $0x174] sm:$0xf]
    %v1313 = vld [vmem:[%s1218 + $0x178] sm:$0xf]
    %v1314 = vld [vmem:[%s1218 + $0x17c] sm:$0xf]
    %v1315 = vld [vmem:[%s3 + $0x2] sm:$0x1]
    %v1318 = vcombine.high %v1216, %v1216
    %v1320 = vunpack.c.l.s4 1983009808
    %v1321 = vunpack.c.0.s8 %v1320
    %v1322 = vlaneseq
    %v1323 = vshrl.u32 %v1322, 7
    %v1324 = vsub.s32 %v1321, %v1323
    %v1325 = vrot.slane %v1216, %v1324
    %v1327 = vunpack.c.l.s4 1983009808
    %v1328 = vunpack.c.0.s8 %v1327
    %v1329 = vlaneseq
    %v1330 = vshrl.u32 %v1329, 7
    %v1331 = vsub.s32 %v1328, %v1330
    %v1332 = vrot.slane %v1318, %v1331
    %v1333 = vcombine.high %v1325, %v1325
    %v1334 = vcombine.high %v1332, %v1332
    %v1336 = vunpack.c.l.s4 1983009808
    %v1337 = vunpack.c.0.s8 %v1336
    %v1338 = vlaneseq
    %v1339 = vshrl.u32 %v1338, 7
    %v1340 = vsub.s32 %v1337, %v1339
    %v1341 = vrot.slane %v1217, %v1340
    %v1342 = vcombine.high %v1341, %v1341
    %v1343 = vrot.slane %v1325, 1
    %v1344 = vrot.slane %v1333, 1
    %v1345 = vrot.slane %v1332, 1
    %v1346 = vrot.slane %v1334, 1
    %v1347 = vrot.slane %v1341, 1
    %v1348 = vrot.slane %v1342, 1
    %v1451 = vunpack.c.l.b16 %v1219
    %v1452 = vunpack.c.l.b16 %v1220
    %v1453 = vunpack.c.l.b16 %v1221
    %v1454 = vunpack.c.l.b16 %v1222
    %v1455 = vunpack.c.l.b16 %v1223
    %v1456 = vunpack.c.l.b16 %v1224
    %v1457 = vunpack.c.l.b16 %v1225
    %v1458 = vunpack.c.l.b16 %v1226
    %v1459 = vunpack.c.l.b16 %v1227
    %v1460 = vunpack.c.l.b16 %v1228
    %v1461 = vunpack.c.l.b16 %v1229
    %v1462 = vunpack.c.l.b16 %v1230
    %v1463 = vunpack.c.l.b16 %v1231
    %v1464 = vunpack.c.l.b16 %v1232
    %v1465 = vunpack.c.l.b16 %v1233
    %v1466 = vunpack.c.l.b16 %v1234
    %v1467 = vunpack.c.l.b16 %v1235
    %v1468 = vunpack.c.l.b16 %v1236
    %v1469 = vunpack.c.l.b16 %v1237
    %v1470 = vunpack.c.l.b16 %v1238
    %v1471 = vunpack.c.l.b16 %v1239
    %v1472 = vunpack.c.l.b16 %v1240
    %v1473 = vunpack.c.l.b16 %v1241
    %v1474 = vunpack.c.l.b16 %v1242
    %v1475 = vunpack.c.l.b16 %v1243
    %v1476 = vunpack.c.l.b16 %v1244
    %v1477 = vunpack.c.l.b16 %v1245
    %v1478 = vunpack.c.l.b16 %v1246
    %v1479 = vunpack.c.l.b16 %v1247
    %v1480 = vunpack.c.l.b16 %v1248
    %v1481 = vunpack.c.l.b16 %v1249
    %v1482 = vunpack.c.l.b16 %v1250
    %v1483 = vunpack.c.l.b16 %v1251
    %v1484 = vunpack.c.l.b16 %v1252
    %v1485 = vunpack.c.l.b16 %v1253
    %v1486 = vunpack.c.l.b16 %v1254
    %v1487 = vunpack.c.l.b16 %v1255
    %v1488 = vunpack.c.l.b16 %v1256
    %v1489 = vunpack.c.l.b16 %v1257
    %v1490 = vunpack.c.l.b16 %v1258
    %v1491 = vunpack.c.l.b16 %v1259
    %v1492 = vunpack.c.l.b16 %v1260
    %v1493 = vunpack.c.l.b16 %v1261
    %v1494 = vunpack.c.l.b16 %v1262
    %v1495 = vunpack.c.l.b16 %v1263
    %v1496 = vunpack.c.l.b16 %v1264
    %v1497 = vunpack.c.l.b16 %v1265
    %v1498 = vunpack.c.l.b16 %v1266
    %v1499 = vunpack.c.l.b16 %v1267
    %v1500 = vunpack.c.l.b16 %v1268
    %v1501 = vunpack.c.l.b16 %v1269
    %v1502 = vunpack.c.l.b16 %v1270
    %v1503 = vunpack.c.l.b16 %v1271
    %v1504 = vunpack.c.l.b16 %v1272
    %v1505 = vunpack.c.l.b16 %v1273
    %v1506 = vunpack.c.l.b16 %v1274
    %v1507 = vunpack.c.l.b16 %v1275
    %v1508 = vunpack.c.l.b16 %v1276
    %v1509 = vunpack.c.l.b16 %v1277
    %v1510 = vunpack.c.l.b16 %v1278
    %v1511 = vunpack.c.l.b16 %v1279
    %v1512 = vunpack.c.l.b16 %v1280
    %v1513 = vunpack.c.l.b16 %v1281
    %v1514 = vunpack.c.l.b16 %v1282
    %v1515 = vunpack.c.l.b16 %v1283
    %v1516 = vunpack.c.l.b16 %v1284
    %v1517 = vunpack.c.l.b16 %v1285
    %v1518 = vunpack.c.l.b16 %v1286
    %v1519 = vunpack.c.l.b16 %v1287
    %v1520 = vunpack.c.l.b16 %v1288
    %v1521 = vunpack.c.l.b16 %v1289
    %v1522 = vunpack.c.l.b16 %v1290
    %v1523 = vunpack.c.l.b16 %v1291
    %v1524 = vunpack.c.l.b16 %v1292
    %v1525 = vunpack.c.l.b16 %v1293
    %v1526 = vunpack.c.l.b16 %v1294
    %v1527 = vunpack.c.l.b16 %v1295
    %v1528 = vunpack.c.l.b16 %v1296
    %v1529 = vunpack.c.l.b16 %v1297
    %v1530 = vunpack.c.l.b16 %v1298
    %v1531 = vunpack.c.l.b16 %v1299
    %v1532 = vunpack.c.l.b16 %v1300
    %v1533 = vunpack.c.l.b16 %v1301
    %v1534 = vunpack.c.l.b16 %v1302
    %v1535 = vunpack.c.l.b16 %v1303
    %v1536 = vunpack.c.l.b16 %v1304
    %v1537 = vunpack.c.l.b16 %v1305
    %v1538 = vunpack.c.l.b16 %v1306
    %v1539 = vunpack.c.l.b16 %v1307
    %v1540 = vunpack.c.l.b16 %v1308
    %v1541 = vunpack.c.l.b16 %v1309
    %v1542 = vunpack.c.l.b16 %v1310
    %v1543 = vunpack.c.l.b16 %v1311
    %v1544 = vunpack.c.l.b16 %v1312
    %v1545 = vunpack.c.l.b16 %v1313
    %v1546 = vunpack.c.l.b16 %v1314
    %v1547 = vpack.c.b16 %v1452, %v1451
    %v1548 = vpack.c.b16 %v1454, %v1453
    %v1549 = vpack.c.b16 %v1456, %v1455
    %v1550 = vpack.c.b16 %v1458, %v1457
    %v1551 = vpack.c.b16 %v1460, %v1459
    %v1552 = vpack.c.b16 %v1462, %v1461
    %v1553 = vpack.c.b16 %v1464, %v1463
    %v1554 = vpack.c.b16 %v1466, %v1465
    %v1555 = vpack.c.b16 %v1468, %v1467
    %v1556 = vpack.c.b16 %v1470, %v1469
    %v1557 = vpack.c.b16 %v1472, %v1471
    %v1558 = vpack.c.b16 %v1474, %v1473
    %v1559 = vpack.c.b16 %v1476, %v1475
    %v1560 = vpack.c.b16 %v1478, %v1477
    %v1561 = vpack.c.b16 %v1480, %v1479
    %v1562 = vpack.c.b16 %v1482, %v1481
    %v1563 = vpack.c.b16 %v1484, %v1483
    %v1564 = vpack.c.b16 %v1486, %v1485
    %v1565 = vpack.c.b16 %v1488, %v1487
    %v1566 = vpack.c.b16 %v1490, %v1489
    %v1567 = vpack.c.b16 %v1492, %v1491
    %v1568 = vpack.c.b16 %v1494, %v1493
    %v1569 = vpack.c.b16 %v1496, %v1495
    %v1570 = vpack.c.b16 %v1498, %v1497
    %v1571 = vpack.c.b16 %v1500, %v1499
    %v1572 = vpack.c.b16 %v1502, %v1501
    %v1573 = vpack.c.b16 %v1504, %v1503
    %v1574 = vpack.c.b16 %v1506, %v1505
    %v1575 = vpack.c.b16 %v1508, %v1507
    %v1576 = vpack.c.b16 %v1510, %v1509
    %v1577 = vpack.c.b16 %v1512, %v1511
    %v1578 = vpack.c.b16 %v1514, %v1513
    %v1579 = vpack.c.b16 %v1516, %v1515
    %v1580 = vpack.c.b16 %v1518, %v1517
    %v1581 = vpack.c.b16 %v1520, %v1519
    %v1582 = vpack.c.b16 %v1522, %v1521
    %v1583 = vpack.c.b16 %v1524, %v1523
    %v1584 = vpack.c.b16 %v1526, %v1525
    %v1585 = vpack.c.b16 %v1528, %v1527
    %v1586 = vpack.c.b16 %v1530, %v1529
    %v1587 = vpack.c.b16 %v1532, %v1531
    %v1588 = vpack.c.b16 %v1534, %v1533
    %v1589 = vpack.c.b16 %v1536, %v1535
    %v1590 = vpack.c.b16 %v1538, %v1537
    %v1591 = vpack.c.b16 %v1540, %v1539
    %v1592 = vpack.c.b16 %v1542, %v1541
    %v1593 = vpack.c.b16 %v1544, %v1543
    %v1594 = vpack.c.b16 %v1546, %v1545
    %1643 = vmatprep.subr.bf16.mxu0 0
    %1644 = vmatpush1.bf16.msra.mxu0 %v1554
    %1645 = vmatprep.subr.bf16.mxu0 0
    %1646 = vmatpush1.bf16.msra.mxu0 %v1553
    %1647 = vmatprep.subr.bf16.mxu0 0
    %1648 = vmatpush1.bf16.msra.mxu0 %v1552
    %1649 = vmatprep.subr.bf16.mxu0 0
    %1650 = vmatpush1.bf16.msra.mxu0 %v1551
    %1651 = vmatprep.subr.bf16.mxu0 0
    %1652 = vmatpush1.bf16.msra.mxu0 %v1550
    %1653 = vmatprep.subr.bf16.mxu0 0
    %1654 = vmatpush1.bf16.msra.mxu0 %v1549
    %1655 = vmatprep.subr.bf16.mxu0 0
    %1656 = vmatpush1.bf16.msra.mxu0 %v1548
    %1657 = vmatprep.subr.bf16.mxu0 0
    %1658 = vmatpush1.bf16.msra.mxu0 %v1547
    %1659 = vmatprep.subr.bf16.mxu0 0
    %1660 = vmatpush2.bf16.msra.mxu0 %v1562
    %1661 = vmatprep.subr.bf16.mxu0 0
    %1662 = vmatpush2.bf16.msra.mxu0 %v1561
    %1663 = vmatprep.subr.bf16.mxu0 0
    %1664 = vmatpush2.bf16.msra.mxu0 %v1560
    %1665 = vmatprep.subr.bf16.mxu0 0
    %1666 = vmatpush2.bf16.msra.mxu0 %v1559
    %1667 = vmatprep.subr.bf16.mxu0 0
    %1668 = vmatpush2.bf16.msra.mxu0 %v1558
    %1669 = vmatprep.subr.bf16.mxu0 0
    %1670 = vmatpush2.bf16.msra.mxu0 %v1557
    %1671 = vmatprep.subr.bf16.mxu0 0
    %1672 = vmatpush2.bf16.msra.mxu0 %v1556
    %1673 = vmatprep.subr.bf16.mxu0 0
    %1674 = vmatpush2.bf16.msra.mxu0 %v1555
    %1675 = vmatprep.mubr.bf16.mxu0 %v1344
    %1676 = vmatmul.mubr.bf16.gmra.mxu0 %v1343
    %v1677 = vpop.f32.mrf.mxu0
    %v1678 = vadd.f32 %v1315, %v1677
    %v1679 = vpop.f32.mrf.mxu0
    %v1680 = vpop.f32.mrf.mxu0
    %v1681 = vpop.f32.mrf.mxu0
    %1682 = vdwg.mxu0
    %1683 = vmatprep.subr.bf16.mxu0 0
    %1684 = vmatpush1.bf16.msra.mxu0 %v1570
    %1685 = vmatprep.subr.bf16.mxu0 0
    %1686 = vmatpush1.bf16.msra.mxu0 %v1569
    %1687 = vmatprep.subr.bf16.mxu0 0
    %1688 = vmatpush1.bf16.msra.mxu0 %v1568
    %1689 = vmatprep.subr.bf16.mxu0 0
    %1690 = vmatpush1.bf16.msra.mxu0 %v1567
    %1691 = vmatprep.subr.bf16.mxu0 0
    %1692 = vmatpush1.bf16.msra.mxu0 %v1566
    %1693 = vmatprep.subr.bf16.mxu0 0
    %1694 = vmatpush1.bf16.msra.mxu0 %v1565
    %1695 = vmatprep.subr.bf16.mxu0 0
    %1696 = vmatpush1.bf16.msra.mxu0 %v1564
    %1697 = vmatprep.subr.bf16.mxu0 0
    %1698 = vmatpush1.bf16.msra.mxu0 %v1563
    %1699 = vmatprep.subr.bf16.mxu0 0
    %1700 = vmatpush2.bf16.msra.mxu0 %v1578
    %1701 = vmatprep.subr.bf16.mxu0 0
    %1702 = vmatpush2.bf16.msra.mxu0 %v1577
    %1703 = vmatprep.subr.bf16.mxu0 0
    %1704 = vmatpush2.bf16.msra.mxu0 %v1576
    %1705 = vmatprep.subr.bf16.mxu0 0
    %1706 = vmatpush2.bf16.msra.mxu0 %v1575
    %1707 = vmatprep.subr.bf16.mxu0 0
    %1708 = vmatpush2.bf16.msra.mxu0 %v1574
    %1709 = vmatprep.subr.bf16.mxu0 0
    %1710 = vmatpush2.bf16.msra.mxu0 %v1573
    %1711 = vmatprep.subr.bf16.mxu0 0
    %1712 = vmatpush2.bf16.msra.mxu0 %v1572
    %1713 = vmatprep.subr.bf16.mxu0 0
    %1714 = vmatpush2.bf16.msra.mxu0 %v1571
    %1715 = vmatprep.mubr.bf16.mxu0 %v1346
    %1716 = vmatmul.mubr.bf16.gmra.mxu0 %v1345
    %v1717 = vpop.f32.mrf.mxu0
    %v1718 = vadd.f32 %v1678, %v1717
    %v1719 = vpop.f32.mrf.mxu0
    %v1720 = vpop.f32.mrf.mxu0
    %v1721 = vpop.f32.mrf.mxu0
    %1722 = vdwg.mxu0
    %1723 = vmatprep.subr.bf16.mxu0 0
    %1724 = vmatpush1.bf16.msra.mxu0 %v1586
    %1725 = vmatprep.subr.bf16.mxu0 0
    %1726 = vmatpush1.bf16.msra.mxu0 %v1585
    %1727 = vmatprep.subr.bf16.mxu0 0
    %1728 = vmatpush1.bf16.msra.mxu0 %v1584
    %1729 = vmatprep.subr.bf16.mxu0 0
    %1730 = vmatpush1.bf16.msra.mxu0 %v1583
    %1731 = vmatprep.subr.bf16.mxu0 0
    %1732 = vmatpush1.bf16.msra.mxu0 %v1582
    %1733 = vmatprep.subr.bf16.mxu0 0
    %1734 = vmatpush1.bf16.msra.mxu0 %v1581
    %1735 = vmatprep.subr.bf16.mxu0 0
    %1736 = vmatpush1.bf16.msra.mxu0 %v1580
    %1737 = vmatprep.subr.bf16.mxu0 0
    %1738 = vmatpush1.bf16.msra.mxu0 %v1579
    %1739 = vmatprep.subr.bf16.mxu0 0
    %1740 = vmatpush2.bf16.msra.mxu0 %v1594
    %1741 = vmatprep.subr.bf16.mxu0 0
    %1742 = vmatpush2.bf16.msra.mxu0 %v1593
    %1743 = vmatprep.subr.bf16.mxu0 0
    %1744 = vmatpush2.bf16.msra.mxu0 %v1592
    %1745 = vmatprep.subr.bf16.mxu0 0
    %1746 = vmatpush2.bf16.msra.mxu0 %v1591
    %1747 = vmatprep.subr.bf16.mxu0 0
    %1748 = vmatpush2.bf16.msra.mxu0 %v1590
    %1749 = vmatprep.subr.bf16.mxu0 0
    %1750 = vmatpush2.bf16.msra.mxu0 %v1589
    %1751 = vmatprep.subr.bf16.mxu0 0
    %1752 = vmatpush2.bf16.msra.mxu0 %v1588
    %1753 = vmatprep.subr.bf16.mxu0 0
    %1754 = vmatpush2.bf16.msra.mxu0 %v1587
    %1755 = vmatprep.mubr.bf16.mxu0 %v1348
    %1756 = vmatmul.mubr.bf16.gmra.mxu0 %v1347
    %v1757 = vpop.f32.mrf.mxu0
    %v1758 = vadd.f32 %v1718, %v1757
    %v1759 = vpop.f32.mrf.mxu0
    %v1760 = vpop.f32.mrf.mxu0
    %v1761 = vpop.f32.mrf.mxu0
    %1762 = vdwg.mxu0
    %v1763 = vld [vmem:[%s4 + $0x2] sm:$0x1]
    %v1764 = vadd.f32 %v1758, %v1763
    %v1765 = vxor.u32 %v1764, 2147483648
    %v1766 = vmul.f32 %v1765, 1.442695
    %v1767 = vpow.pop %v1766
    %v1768 = vadd.f32 %v1767, 1.0
    %v1769 = vrcp.pop %v1768
    %v1770 = vmul.f32 1.0, %v1769
    %1772 = vrot.lane.b32.xlu0 %v1763, 64
    %v1773 = vpop.permute.xlu0 %1772
    %v1775 = vmul.f32 %v1770, %v1773
    %1777 = vrot.lane.b32.xlu0 %v1775, 64
    %v1778 = vpop.permute.xlu0 %1777
    %v1780 = vadd.f32 %v1758, %v1778
    %v1781 = vtanh.pop %v1780
    %v1782 = vsub.f32 1.0, %v1770
    %1784 = vrot.lane.b32.xlu0 %v1781, 96
    %v1785 = vpop.permute.xlu0 %1784
    %v1787 = vmul.f32 %v1782, %v1785
    %v1788 = vld [vmem:[%s0] sm:$0xff]
    %v1789 = vld [vmem:[%s0 + $0x8] sm:$0xff]
    %v1790 = vld [vmem:[%s0 + $0x10] sm:$0xff]
    %s1791 = scalar_lea.vmem [#allocation4], 1152
    %v1792 = vld [vmem:[%s1791] sm:$0xf]
    %v1793 = vld [vmem:[%s1791 + $0x4] sm:$0xf]
    %v1794 = vld [vmem:[%s1791 + $0x8] sm:$0xf]
    %v1795 = vld [vmem:[%s1791 + $0xc] sm:$0xf]
    %v1796 = vld [vmem:[%s1791 + $0x10] sm:$0xf]
    %v1797 = vld [vmem:[%s1791 + $0x14] sm:$0xf]
    %v1798 = vld [vmem:[%s1791 + $0x18] sm:$0xf]
    %v1799 = vld [vmem:[%s1791 + $0x1c] sm:$0xf]
    %v1800 = vld [vmem:[%s1791 + $0x20] sm:$0xf]
    %v1801 = vld [vmem:[%s1791 + $0x24] sm:$0xf]
    %v1802 = vld [vmem:[%s1791 + $0x28] sm:$0xf]
    %v1803 = vld [vmem:[%s1791 + $0x2c] sm:$0xf]
    %v1804 = vld [vmem:[%s1791 + $0x30] sm:$0xf]
    %v1805 = vld [vmem:[%s1791 + $0x34] sm:$0xf]
    %v1806 = vld [vmem:[%s1791 + $0x38] sm:$0xf]
    %v1807 = vld [vmem:[%s1791 + $0x3c] sm:$0xf]
    %v1808 = vld [vmem:[%s1791 + $0x40] sm:$0xf]
    %v1809 = vld [vmem:[%s1791 + $0x44] sm:$0xf]
    %v1810 = vld [vmem:[%s1791 + $0x48] sm:$0xf]
    %v1811 = vld [vmem:[%s1791 + $0x4c] sm:$0xf]
    %v1812 = vld [vmem:[%s1791 + $0x50] sm:$0xf]
    %v1813 = vld [vmem:[%s1791 + $0x54] sm:$0xf]
    %v1814 = vld [vmem:[%s1791 + $0x58] sm:$0xf]
    %v1815 = vld [vmem:[%s1791 + $0x5c] sm:$0xf]
    %v1816 = vld [vmem:[%s1791 + $0x60] sm:$0xf]
    %v1817 = vld [vmem:[%s1791 + $0x64] sm:$0xf]
    %v1818 = vld [vmem:[%s1791 + $0x68] sm:$0xf]
    %v1819 = vld [vmem:[%s1791 + $0x6c] sm:$0xf]
    %v1820 = vld [vmem:[%s1791 + $0x70] sm:$0xf]
    %v1821 = vld [vmem:[%s1791 + $0x74] sm:$0xf]
    %v1822 = vld [vmem:[%s1791 + $0x78] sm:$0xf]
    %v1823 = vld [vmem:[%s1791 + $0x7c] sm:$0xf]
    %v1824 = vld [vmem:[%s1791 + $0x80] sm:$0xf]
    %v1825 = vld [vmem:[%s1791 + $0x84] sm:$0xf]
    %v1826 = vld [vmem:[%s1791 + $0x88] sm:$0xf]
    %v1827 = vld [vmem:[%s1791 + $0x8c] sm:$0xf]
    %v1828 = vld [vmem:[%s1791 + $0x90] sm:$0xf]
    %v1829 = vld [vmem:[%s1791 + $0x94] sm:$0xf]
    %v1830 = vld [vmem:[%s1791 + $0x98] sm:$0xf]
    %v1831 = vld [vmem:[%s1791 + $0x9c] sm:$0xf]
    %v1832 = vld [vmem:[%s1791 + $0xa0] sm:$0xf]
    %v1833 = vld [vmem:[%s1791 + $0xa4] sm:$0xf]
    %v1834 = vld [vmem:[%s1791 + $0xa8] sm:$0xf]
    %v1835 = vld [vmem:[%s1791 + $0xac] sm:$0xf]
    %v1836 = vld [vmem:[%s1791 + $0xb0] sm:$0xf]
    %v1837 = vld [vmem:[%s1791 + $0xb4] sm:$0xf]
    %v1838 = vld [vmem:[%s1791 + $0xb8] sm:$0xf]
    %v1839 = vld [vmem:[%s1791 + $0xbc] sm:$0xf]
    %v1840 = vld [vmem:[%s1791 + $0xc0] sm:$0xf]
    %v1841 = vld [vmem:[%s1791 + $0xc4] sm:$0xf]
    %v1842 = vld [vmem:[%s1791 + $0xc8] sm:$0xf]
    %v1843 = vld [vmem:[%s1791 + $0xcc] sm:$0xf]
    %v1844 = vld [vmem:[%s1791 + $0xd0] sm:$0xf]
    %v1845 = vld [vmem:[%s1791 + $0xd4] sm:$0xf]
    %v1846 = vld [vmem:[%s1791 + $0xd8] sm:$0xf]
    %v1847 = vld [vmem:[%s1791 + $0xdc] sm:$0xf]
    %v1848 = vld [vmem:[%s1791 + $0xe0] sm:$0xf]
    %v1849 = vld [vmem:[%s1791 + $0xe4] sm:$0xf]
    %v1850 = vld [vmem:[%s1791 + $0xe8] sm:$0xf]
    %v1851 = vld [vmem:[%s1791 + $0xec] sm:$0xf]
    %v1852 = vld [vmem:[%s1791 + $0xf0] sm:$0xf]
    %v1853 = vld [vmem:[%s1791 + $0xf4] sm:$0xf]
    %v1854 = vld [vmem:[%s1791 + $0xf8] sm:$0xf]
    %v1855 = vld [vmem:[%s1791 + $0xfc] sm:$0xf]
    %v1856 = vld [vmem:[%s1791 + $0x100] sm:$0xf]
    %v1857 = vld [vmem:[%s1791 + $0x104] sm:$0xf]
    %v1858 = vld [vmem:[%s1791 + $0x108] sm:$0xf]
    %v1859 = vld [vmem:[%s1791 + $0x10c] sm:$0xf]
    %v1860 = vld [vmem:[%s1791 + $0x110] sm:$0xf]
    %v1861 = vld [vmem:[%s1791 + $0x114] sm:$0xf]
    %v1862 = vld [vmem:[%s1791 + $0x118] sm:$0xf]
    %v1863 = vld [vmem:[%s1791 + $0x11c] sm:$0xf]
    %v1864 = vld [vmem:[%s1791 + $0x120] sm:$0xf]
    %v1865 = vld [vmem:[%s1791 + $0x124] sm:$0xf]
    %v1866 = vld [vmem:[%s1791 + $0x128] sm:$0xf]
    %v1867 = vld [vmem:[%s1791 + $0x12c] sm:$0xf]
    %v1868 = vld [vmem:[%s1791 + $0x130] sm:$0xf]
    %v1869 = vld [vmem:[%s1791 + $0x134] sm:$0xf]
    %v1870 = vld [vmem:[%s1791 + $0x138] sm:$0xf]
    %v1871 = vld [vmem:[%s1791 + $0x13c] sm:$0xf]
    %v1872 = vld [vmem:[%s1791 + $0x140] sm:$0xf]
    %v1873 = vld [vmem:[%s1791 + $0x144] sm:$0xf]
    %v1874 = vld [vmem:[%s1791 + $0x148] sm:$0xf]
    %v1875 = vld [vmem:[%s1791 + $0x14c] sm:$0xf]
    %v1876 = vld [vmem:[%s1791 + $0x150] sm:$0xf]
    %v1877 = vld [vmem:[%s1791 + $0x154] sm:$0xf]
    %v1878 = vld [vmem:[%s1791 + $0x158] sm:$0xf]
    %v1879 = vld [vmem:[%s1791 + $0x15c] sm:$0xf]
    %v1880 = vld [vmem:[%s1791 + $0x160] sm:$0xf]
    %v1881 = vld [vmem:[%s1791 + $0x164] sm:$0xf]
    %v1882 = vld [vmem:[%s1791 + $0x168] sm:$0xf]
    %v1883 = vld [vmem:[%s1791 + $0x16c] sm:$0xf]
    %v1884 = vld [vmem:[%s1791 + $0x170] sm:$0xf]
    %v1885 = vld [vmem:[%s1791 + $0x174] sm:$0xf]
    %v1886 = vld [vmem:[%s1791 + $0x178] sm:$0xf]
    %v1887 = vld [vmem:[%s1791 + $0x17c] sm:$0xf]
    %v1888 = vld [vmem:[%s3 + $0x3] sm:$0x1]
    %v1889 = vlaneseq
    %v1890 = vshrl.u32 %v1889, 7
    %v1891 = vsub.s32 0, %v1890
    %v1892 = vrot.slane %v1888, %v1891
    %v1896 = vunpack.c.l.b16 %v1788
    %v1897 = vunpack.c.h.b16 %v1788
    %v1898 = vunpack.c.l.b16 %v1789
    %v1899 = vunpack.c.h.b16 %v1789
    %v1900 = vunpack.c.l.b16 %v1790
    %v1901 = vunpack.c.h.b16 %v1790
    %v1902 = vpack.c.b16 %v1896, %v1896
    %v1903 = vpack.c.b16 %v1897, %v1897
    %v1904 = vpack.c.b16 %v1898, %v1898
    %v1905 = vpack.c.b16 %v1899, %v1899
    %v1906 = vpack.c.b16 %v1900, %v1900
    %v1907 = vpack.c.b16 %v1901, %v1901
    %v2010 = vunpack.c.l.b16 %v1792
    %v2011 = vunpack.c.l.b16 %v1793
    %v2012 = vunpack.c.l.b16 %v1794
    %v2013 = vunpack.c.l.b16 %v1795
    %v2014 = vunpack.c.l.b16 %v1796
    %v2015 = vunpack.c.l.b16 %v1797
    %v2016 = vunpack.c.l.b16 %v1798
    %v2017 = vunpack.c.l.b16 %v1799
    %v2018 = vunpack.c.l.b16 %v1800
    %v2019 = vunpack.c.l.b16 %v1801
    %v2020 = vunpack.c.l.b16 %v1802
    %v2021 = vunpack.c.l.b16 %v1803
    %v2022 = vunpack.c.l.b16 %v1804
    %v2023 = vunpack.c.l.b16 %v1805
    %v2024 = vunpack.c.l.b16 %v1806
    %v2025 = vunpack.c.l.b16 %v1807
    %v2026 = vunpack.c.l.b16 %v1808
    %v2027 = vunpack.c.l.b16 %v1809
    %v2028 = vunpack.c.l.b16 %v1810
    %v2029 = vunpack.c.l.b16 %v1811
    %v2030 = vunpack.c.l.b16 %v1812
    %v2031 = vunpack.c.l.b16 %v1813
    %v2032 = vunpack.c.l.b16 %v1814
    %v2033 = vunpack.c.l.b16 %v1815
    %v2034 = vunpack.c.l.b16 %v1816
    %v2035 = vunpack.c.l.b16 %v1817
    %v2036 = vunpack.c.l.b16 %v1818
    %v2037 = vunpack.c.l.b16 %v1819
    %v2038 = vunpack.c.l.b16 %v1820
    %v2039 = vunpack.c.l.b16 %v1821
    %v2040 = vunpack.c.l.b16 %v1822
    %v2041 = vunpack.c.l.b16 %v1823
    %v2042 = vunpack.c.l.b16 %v1824
    %v2043 = vunpack.c.l.b16 %v1825
    %v2044 = vunpack.c.l.b16 %v1826
    %v2045 = vunpack.c.l.b16 %v1827
    %v2046 = vunpack.c.l.b16 %v1828
    %v2047 = vunpack.c.l.b16 %v1829
    %v2048 = vunpack.c.l.b16 %v1830
    %v2049 = vunpack.c.l.b16 %v1831
    %v2050 = vunpack.c.l.b16 %v1832
    %v2051 = vunpack.c.l.b16 %v1833
    %v2052 = vunpack.c.l.b16 %v1834
    %v2053 = vunpack.c.l.b16 %v1835
    %v2054 = vunpack.c.l.b16 %v1836
    %v2055 = vunpack.c.l.b16 %v1837
    %v2056 = vunpack.c.l.b16 %v1838
    %v2057 = vunpack.c.l.b16 %v1839
    %v2058 = vunpack.c.l.b16 %v1840
    %v2059 = vunpack.c.l.b16 %v1841
    %v2060 = vunpack.c.l.b16 %v1842
    %v2061 = vunpack.c.l.b16 %v1843
    %v2062 = vunpack.c.l.b16 %v1844
    %v2063 = vunpack.c.l.b16 %v1845
    %v2064 = vunpack.c.l.b16 %v1846
    %v2065 = vunpack.c.l.b16 %v1847
    %v2066 = vunpack.c.l.b16 %v1848
    %v2067 = vunpack.c.l.b16 %v1849
    %v2068 = vunpack.c.l.b16 %v1850
    %v2069 = vunpack.c.l.b16 %v1851
    %v2070 = vunpack.c.l.b16 %v1852
    %v2071 = vunpack.c.l.b16 %v1853
    %v2072 = vunpack.c.l.b16 %v1854
    %v2073 = vunpack.c.l.b16 %v1855
    %v2074 = vunpack.c.l.b16 %v1856
    %v2075 = vunpack.c.l.b16 %v1857
    %v2076 = vunpack.c.l.b16 %v1858
    %v2077 = vunpack.c.l.b16 %v1859
    %v2078 = vunpack.c.l.b16 %v1860
    %v2079 = vunpack.c.l.b16 %v1861
    %v2080 = vunpack.c.l.b16 %v1862
    %v2081 = vunpack.c.l.b16 %v1863
    %v2082 = vunpack.c.l.b16 %v1864
    %v2083 = vunpack.c.l.b16 %v1865
    %v2084 = vunpack.c.l.b16 %v1866
    %v2085 = vunpack.c.l.b16 %v1867
    %v2086 = vunpack.c.l.b16 %v1868
    %v2087 = vunpack.c.l.b16 %v1869
    %v2088 = vunpack.c.l.b16 %v1870
    %v2089 = vunpack.c.l.b16 %v1871
    %v2090 = vunpack.c.l.b16 %v1872
    %v2091 = vunpack.c.l.b16 %v1873
    %v2092 = vunpack.c.l.b16 %v1874
    %v2093 = vunpack.c.l.b16 %v1875
    %v2094 = vunpack.c.l.b16 %v1876
    %v2095 = vunpack.c.l.b16 %v1877
    %v2096 = vunpack.c.l.b16 %v1878
    %v2097 = vunpack.c.l.b16 %v1879
    %v2098 = vunpack.c.l.b16 %v1880
    %v2099 = vunpack.c.l.b16 %v1881
    %v2100 = vunpack.c.l.b16 %v1882
    %v2101 = vunpack.c.l.b16 %v1883
    %v2102 = vunpack.c.l.b16 %v1884
    %v2103 = vunpack.c.l.b16 %v1885
    %v2104 = vunpack.c.l.b16 %v1886
    %v2105 = vunpack.c.l.b16 %v1887
    %v2106 = vpack.c.b16 %v2011, %v2010
    %v2107 = vpack.c.b16 %v2013, %v2012
    %v2108 = vpack.c.b16 %v2015, %v2014
    %v2109 = vpack.c.b16 %v2017, %v2016
    %v2110 = vpack.c.b16 %v2019, %v2018
    %v2111 = vpack.c.b16 %v2021, %v2020
    %v2112 = vpack.c.b16 %v2023, %v2022
    %v2113 = vpack.c.b16 %v2025, %v2024
    %v2114 = vpack.c.b16 %v2027, %v2026
    %v2115 = vpack.c.b16 %v2029, %v2028
    %v2116 = vpack.c.b16 %v2031, %v2030
    %v2117 = vpack.c.b16 %v2033, %v2032
    %v2118 = vpack.c.b16 %v2035, %v2034
    %v2119 = vpack.c.b16 %v2037, %v2036
    %v2120 = vpack.c.b16 %v2039, %v2038
    %v2121 = vpack.c.b16 %v2041, %v2040
    %v2122 = vpack.c.b16 %v2043, %v2042
    %v2123 = vpack.c.b16 %v2045, %v2044
    %v2124 = vpack.c.b16 %v2047, %v2046
    %v2125 = vpack.c.b16 %v2049, %v2048
    %v2126 = vpack.c.b16 %v2051, %v2050
    %v2127 = vpack.c.b16 %v2053, %v2052
    %v2128 = vpack.c.b16 %v2055, %v2054
    %v2129 = vpack.c.b16 %v2057, %v2056
    %v2130 = vpack.c.b16 %v2059, %v2058
    %v2131 = vpack.c.b16 %v2061, %v2060
    %v2132 = vpack.c.b16 %v2063, %v2062
    %v2133 = vpack.c.b16 %v2065, %v2064
    %v2134 = vpack.c.b16 %v2067, %v2066
    %v2135 = vpack.c.b16 %v2069, %v2068
    %v2136 = vpack.c.b16 %v2071, %v2070
    %v2137 = vpack.c.b16 %v2073, %v2072
    %v2138 = vpack.c.b16 %v2075, %v2074
    %v2139 = vpack.c.b16 %v2077, %v2076
    %v2140 = vpack.c.b16 %v2079, %v2078
    %v2141 = vpack.c.b16 %v2081, %v2080
    %v2142 = vpack.c.b16 %v2083, %v2082
    %v2143 = vpack.c.b16 %v2085, %v2084
    %v2144 = vpack.c.b16 %v2087, %v2086
    %v2145 = vpack.c.b16 %v2089, %v2088
    %v2146 = vpack.c.b16 %v2091, %v2090
    %v2147 = vpack.c.b16 %v2093, %v2092
    %v2148 = vpack.c.b16 %v2095, %v2094
    %v2149 = vpack.c.b16 %v2097, %v2096
    %v2150 = vpack.c.b16 %v2099, %v2098
    %v2151 = vpack.c.b16 %v2101, %v2100
    %v2152 = vpack.c.b16 %v2103, %v2102
    %v2153 = vpack.c.b16 %v2105, %v2104
    %2202 = vmatprep.subr.bf16.mxu0 0
    %2203 = vmatpush1.bf16.msra.mxu0 %v2113
    %2204 = vmatprep.subr.bf16.mxu0 0
    %2205 = vmatpush1.bf16.msra.mxu0 %v2112
    %2206 = vmatprep.subr.bf16.mxu0 0
    %2207 = vmatpush1.bf16.msra.mxu0 %v2111
    %2208 = vmatprep.subr.bf16.mxu0 0
    %2209 = vmatpush1.bf16.msra.mxu0 %v2110
    %2210 = vmatprep.subr.bf16.mxu0 0
    %2211 = vmatpush1.bf16.msra.mxu0 %v2109
    %2212 = vmatprep.subr.bf16.mxu0 0
    %2213 = vmatpush1.bf16.msra.mxu0 %v2108
    %2214 = vmatprep.subr.bf16.mxu0 0
    %2215 = vmatpush1.bf16.msra.mxu0 %v2107
    %2216 = vmatprep.subr.bf16.mxu0 0
    %2217 = vmatpush1.bf16.msra.mxu0 %v2106
    %2218 = vmatprep.subr.bf16.mxu0 0
    %2219 = vmatpush2.bf16.msra.mxu0 %v2121
    %2220 = vmatprep.subr.bf16.mxu0 0
    %2221 = vmatpush2.bf16.msra.mxu0 %v2120
    %2222 = vmatprep.subr.bf16.mxu0 0
    %2223 = vmatpush2.bf16.msra.mxu0 %v2119
    %2224 = vmatprep.subr.bf16.mxu0 0
    %2225 = vmatpush2.bf16.msra.mxu0 %v2118
    %2226 = vmatprep.subr.bf16.mxu0 0
    %2227 = vmatpush2.bf16.msra.mxu0 %v2117
    %2228 = vmatprep.subr.bf16.mxu0 0
    %2229 = vmatpush2.bf16.msra.mxu0 %v2116
    %2230 = vmatprep.subr.bf16.mxu0 0
    %2231 = vmatpush2.bf16.msra.mxu0 %v2115
    %2232 = vmatprep.subr.bf16.mxu0 0
    %2233 = vmatpush2.bf16.msra.mxu0 %v2114
    %2234 = vmatprep.mubr.bf16.mxu0 %v1903
    %2235 = vmatmul.mubr.bf16.gmra.mxu0 %v1902
    %v2236 = vpop.f32.mrf.mxu0
    %v2237 = vadd.f32 %v1892, %v2236
    %v2238 = vpop.f32.mrf.mxu0
    %v2239 = vpop.f32.mrf.mxu0
    %v2240 = vpop.f32.mrf.mxu0
    %2241 = vdwg.mxu0
    %2242 = vmatprep.subr.bf16.mxu0 0
    %2243 = vmatpush1.bf16.msra.mxu0 %v2129
    %2244 = vmatprep.subr.bf16.mxu0 0
    %2245 = vmatpush1.bf16.msra.mxu0 %v2128
    %2246 = vmatprep.subr.bf16.mxu0 0
    %2247 = vmatpush1.bf16.msra.mxu0 %v2127
    %2248 = vmatprep.subr.bf16.mxu0 0
    %2249 = vmatpush1.bf16.msra.mxu0 %v2126
    %2250 = vmatprep.subr.bf16.mxu0 0
    %2251 = vmatpush1.bf16.msra.mxu0 %v2125
    %2252 = vmatprep.subr.bf16.mxu0 0
    %2253 = vmatpush1.bf16.msra.mxu0 %v2124
    %2254 = vmatprep.subr.bf16.mxu0 0
    %2255 = vmatpush1.bf16.msra.mxu0 %v2123
    %2256 = vmatprep.subr.bf16.mxu0 0
    %2257 = vmatpush1.bf16.msra.mxu0 %v2122
    %2258 = vmatprep.subr.bf16.mxu0 0
    %2259 = vmatpush2.bf16.msra.mxu0 %v2137
    %2260 = vmatprep.subr.bf16.mxu0 0
    %2261 = vmatpush2.bf16.msra.mxu0 %v2136
    %2262 = vmatprep.subr.bf16.mxu0 0
    %2263 = vmatpush2.bf16.msra.mxu0 %v2135
    %2264 = vmatprep.subr.bf16.mxu0 0
    %2265 = vmatpush2.bf16.msra.mxu0 %v2134
    %2266 = vmatprep.subr.bf16.mxu0 0
    %2267 = vmatpush2.bf16.msra.mxu0 %v2133
    %2268 = vmatprep.subr.bf16.mxu0 0
    %2269 = vmatpush2.bf16.msra.mxu0 %v2132
    %2270 = vmatprep.subr.bf16.mxu0 0
    %2271 = vmatpush2.bf16.msra.mxu0 %v2131
    %2272 = vmatprep.subr.bf16.mxu0 0
    %2273 = vmatpush2.bf16.msra.mxu0 %v2130
    %2274 = vmatprep.mubr.bf16.mxu0 %v1905
    %2275 = vmatmul.mubr.bf16.gmra.mxu0 %v1904
    %v2276 = vpop.f32.mrf.mxu0
    %v2277 = vadd.f32 %v2237, %v2276
    %v2278 = vpop.f32.mrf.mxu0
    %v2279 = vpop.f32.mrf.mxu0
    %v2280 = vpop.f32.mrf.mxu0
    %2281 = vdwg.mxu0
    %2282 = vmatprep.subr.bf16.mxu0 0
    %2283 = vmatpush1.bf16.msra.mxu0 %v2145
    %2284 = vmatprep.subr.bf16.mxu0 0
    %2285 = vmatpush1.bf16.msra.mxu0 %v2144
    %2286 = vmatprep.subr.bf16.mxu0 0
    %2287 = vmatpush1.bf16.msra.mxu0 %v2143
    %2288 = vmatprep.subr.bf16.mxu0 0
    %2289 = vmatpush1.bf16.msra.mxu0 %v2142
    %2290 = vmatprep.subr.bf16.mxu0 0
    %2291 = vmatpush1.bf16.msra.mxu0 %v2141
    %2292 = vmatprep.subr.bf16.mxu0 0
    %2293 = vmatpush1.bf16.msra.mxu0 %v2140
    %2294 = vmatprep.subr.bf16.mxu0 0
    %2295 = vmatpush1.bf16.msra.mxu0 %v2139
    %2296 = vmatprep.subr.bf16.mxu0 0
    %2297 = vmatpush1.bf16.msra.mxu0 %v2138
    %2298 = vmatprep.subr.bf16.mxu0 0
    %2299 = vmatpush2.bf16.msra.mxu0 %v2153
    %2300 = vmatprep.subr.bf16.mxu0 0
    %2301 = vmatpush2.bf16.msra.mxu0 %v2152
    %2302 = vmatprep.subr.bf16.mxu0 0
    %2303 = vmatpush2.bf16.msra.mxu0 %v2151
    %2304 = vmatprep.subr.bf16.mxu0 0
    %2305 = vmatpush2.bf16.msra.mxu0 %v2150
    %2306 = vmatprep.subr.bf16.mxu0 0
    %2307 = vmatpush2.bf16.msra.mxu0 %v2149
    %2308 = vmatprep.subr.bf16.mxu0 0
    %2309 = vmatpush2.bf16.msra.mxu0 %v2148
    %2310 = vmatprep.subr.bf16.mxu0 0
    %2311 = vmatpush2.bf16.msra.mxu0 %v2147
    %2312 = vmatprep.subr.bf16.mxu0 0
    %2313 = vmatpush2.bf16.msra.mxu0 %v2146
    %2314 = vmatprep.mubr.bf16.mxu0 %v1907
    %2315 = vmatmul.mubr.bf16.gmra.mxu0 %v1906
    %v2316 = vpop.f32.mrf.mxu0
    %v2317 = vadd.f32 %v2277, %v2316
    %v2318 = vpop.f32.mrf.mxu0
    %v2319 = vpop.f32.mrf.mxu0
    %v2320 = vpop.f32.mrf.mxu0
    %2321 = vdwg.mxu0
    %v2322 = vld [vmem:[%s4 + $0x3] sm:$0x1]
    %v2323 = vld [vmem:[%s5] sm:$0xff]
    %v2324 = vld [vmem:[%s5 + $0x8] sm:$0xff]
    %v2325 = vld [vmem:[%s5 + $0x10] sm:$0xff]
    %v2326 = vld [vmem:[%s5 + $0x18] sm:$0xff]
    %v2327 = vadd.f32 %v2317, %v2322
    %v2328 = vxor.u32 %v2327, 2147483648
    %v2329 = vmul.f32 %v2328, 1.442695
    %v2330 = vpow.pop %v2329
    %v2331 = vadd.f32 %v2330, 1.0
    %v2332 = vrcp.pop %v2331
    %v2333 = vmul.f32 1.0, %v2332
    %2335 = vrot.lane.b32.xlu0 %v2322, 64
    %v2336 = vpop.permute.xlu0 %2335
    %v2338 = vmul.f32 %v2333, %v2336
    %2340 = vrot.lane.b32.xlu0 %v2338, 64
    %v2341 = vpop.permute.xlu0 %2340
    %v2343 = vadd.f32 %v2317, %v2341
    %v2344 = vtanh.pop %v2343
    %v2345 = vsub.f32 1.0, %v2333
    %2347 = vrot.lane.b32.xlu0 %v2344, 96
    %v2348 = vpop.permute.xlu0 %2347
    %v2350 = vmul.f32 %v2345, %v2348
    %2352 = vrot.lane.b32.xlu0 %v2350, 96
    %v2353 = vpop.permute.xlu0 %2352
    %vm2354 = vcmask 261120
    %v2355 = vsel %vm2354, %v2353, 0
    %2357 = vmatprep.subr.mxu0 0.0
    %2358 = vmatpush1.msra.mxu0 0.0
    %2359 = vmatprep.subr.mxu0 0.0
    %2360 = vmatpush1.msra.mxu0 0.0
    %2361 = vmatprep.subr.mxu0 0.0
    %2362 = vmatpush1.msra.mxu0 0.0
    %2363 = vmatprep.subr.mxu0 0.0
    %2364 = vmatpush1.msra.mxu0 0.0
    %2365 = vmatprep.subr.mxu0 0.0
    %2366 = vmatpush1.msra.mxu0 0.0
    %2367 = vmatprep.subr.mxu0 0.0
    %2368 = vmatpush1.msra.mxu0 0.0
    %2369 = vmatprep.subr.mxu0 0.0
    %2370 = vmatpush1.msra.mxu0 0.0
    %2371 = vmatprep.subr.mxu0 0.0
    %2372 = vmatpush1.msra.mxu0 0.0
    %2373 = vmatprep.subr.mxu0 0.0
    %2374 = vmatpush1.msra.mxu0 0.0
    %2375 = vmatprep.subr.mxu0 0.0
    %2376 = vmatpush1.msra.mxu0 0.0
    %2377 = vmatprep.subr.mxu0 0.0
    %2378 = vmatpush1.msra.mxu0 0.0
    %2379 = vmatprep.subr.mxu0 0.0
    %2380 = vmatpush1.msra.mxu0 0.0
    %2381 = vmatprep.subr.mxu0 0.0
    %2382 = vmatpush1.msra.mxu0 %v2326
    %2383 = vmatprep.subr.mxu0 0.0
    %2384 = vmatpush1.msra.mxu0 %v2325
    %2385 = vmatprep.subr.mxu0 0.0
    %2386 = vmatpush1.msra.mxu0 %v2324
    %2387 = vmatprep.subr.mxu0 0.0
    %2388 = vmatpush1.msra.mxu0 %v2323
    %2389 = vmatprep.subr.mxu0 0.0
    %2390 = vmatpush2.msra.mxu0 0.0
    %2391 = vmatprep.subr.mxu0 0.0
    %2392 = vmatpush2.msra.mxu0 0.0
    %2393 = vmatprep.subr.mxu0 0.0
    %2394 = vmatpush2.msra.mxu0 0.0
    %2395 = vmatprep.subr.mxu0 0.0
    %2396 = vmatpush2.msra.mxu0 0.0
    %2397 = vmatprep.subr.mxu0 0.0
    %2398 = vmatpush2.msra.mxu0 0.0
    %2399 = vmatprep.subr.mxu0 0.0
    %2400 = vmatpush2.msra.mxu0 0.0
    %2401 = vmatprep.subr.mxu0 0.0
    %2402 = vmatpush2.msra.mxu0 0.0
    %2403 = vmatprep.subr.mxu0 0.0
    %2404 = vmatpush2.msra.mxu0 0.0
    %2405 = vmatprep.subr.mxu0 0.0
    %2406 = vmatpush2.msra.mxu0 0.0
    %2407 = vmatprep.subr.mxu0 0.0
    %2408 = vmatpush2.msra.mxu0 0.0
    %2409 = vmatprep.subr.mxu0 0.0
    %2410 = vmatpush2.msra.mxu0 0.0
    %2411 = vmatprep.subr.mxu0 0.0
    %2412 = vmatpush2.msra.mxu0 0.0
    %2413 = vmatprep.subr.mxu0 0.0
    %2414 = vmatpush2.msra.mxu0 0.0
    %2415 = vmatprep.subr.mxu0 0.0
    %2416 = vmatpush2.msra.mxu0 0.0
    %2417 = vmatprep.subr.mxu0 0.0
    %2418 = vmatpush2.msra.mxu0 0.0
    %2419 = vmatprep.subr.mxu0 0.0
    %2420 = vmatpush2.msra.mxu0 0.0
    %2421 = vmatprep.mubr.f32.mxu0 0.0
    %2422 = vmatmul.mubr.f32.gmra.mxu0 %v2355
    %v2423 = vpop.f32.mrf.mxu0
    %v2424 = vadd.f32 %v2322, %v2423
    %v2425 = vpop.f32.mrf.mxu0
    %2426 = vdwg.mxu0
    %v2428 = vrot.slane %v2424, 7
    %v2430 = vadd.f32 %v2317, %v2428
    %v2431 = vxor.u32 %v2430, 2147483648
    %v2432 = vmul.f32 %v2431, 1.442695
    %v2433 = vpow.pop %v2432
    %v2434 = vadd.f32 %v2433, 1.0
    %v2435 = vrcp.pop %v2434
    %v2436 = vmul.f32 1.0, %v2435
    %2437 = vrot.lane.b32.xlu0 %v2428, 64
    %v2438 = vpop.permute.xlu0 %2437
    %v2440 = vmul.f32 %v2436, %v2438
    %2442 = vrot.lane.b32.xlu0 %v2440, 64
    %v2443 = vpop.permute.xlu0 %2442
    %v2445 = vadd.f32 %v2317, %v2443
    %v2446 = vtanh.pop %v2445
    %v2447 = vsub.f32 1.0, %v2436
    %2449 = vrot.lane.b32.xlu0 %v2446, 96
    %v2450 = vpop.permute.xlu0 %2449
    %v2452 = vmul.f32 %v2447, %v2450
    %v2453 = vrot.slane %v2350, 7
    %v2455 = vmul.f32 %v2436, %v2453
    %v2456 = vadd.f32 %v2452, %v2455
    %v2458 = vrot.slane %v2456, 1
    %2459 = vrot.lane.b32.xlu0 %v2458, 96
    %v2460 = vpop.permute.xlu0 %2459
    %v2461 = vsel %vm2354, %v2460, 0
    %2463 = vmatprep.subr.mxu0 0.0
    %2464 = vmatpush1.msra.mxu0 0.0
    %2465 = vmatprep.subr.mxu0 0.0
    %2466 = vmatpush1.msra.mxu0 0.0
    %2467 = vmatprep.subr.mxu0 0.0
    %2468 = vmatpush1.msra.mxu0 0.0
    %2469 = vmatprep.subr.mxu0 0.0
    %2470 = vmatpush1.msra.mxu0 0.0
    %2471 = vmatprep.subr.mxu0 0.0
    %2472 = vmatpush1.msra.mxu0 0.0
    %2473 = vmatprep.subr.mxu0 0.0
    %2474 = vmatpush1.msra.mxu0 0.0
    %2475 = vmatprep.subr.mxu0 0.0
    %2476 = vmatpush1.msra.mxu0 0.0
    %2477 = vmatprep.subr.mxu0 0.0
    %2478 = vmatpush1.msra.mxu0 0.0
    %2479 = vmatprep.subr.mxu0 0.0
    %2480 = vmatpush1.msra.mxu0 0.0
    %2481 = vmatprep.subr.mxu0 0.0
    %2482 = vmatpush1.msra.mxu0 0.0
    %2483 = vmatprep.subr.mxu0 0.0
    %2484 = vmatpush1.msra.mxu0 0.0
    %2485 = vmatprep.subr.mxu0 0.0
    %2486 = vmatpush1.msra.mxu0 0.0
    %2487 = vmatprep.subr.mxu0 0.0
    %2488 = vmatpush1.msra.mxu0 %v2326
    %2489 = vmatprep.subr.mxu0 0.0
    %2490 = vmatpush1.msra.mxu0 %v2325
    %2491 = vmatprep.subr.mxu0 0.0
    %2492 = vmatpush1.msra.mxu0 %v2324
    %2493 = vmatprep.subr.mxu0 0.0
    %2494 = vmatpush1.msra.mxu0 %v2323
    %2495 = vmatprep.subr.mxu0 0.0
    %2496 = vmatpush2.msra.mxu0 0.0
    %2497 = vmatprep.subr.mxu0 0.0
    %2498 = vmatpush2.msra.mxu0 0.0
    %2499 = vmatprep.subr.mxu0 0.0
    %2500 = vmatpush2.msra.mxu0 0.0
    %2501 = vmatprep.subr.mxu0 0.0
    %2502 = vmatpush2.msra.mxu0 0.0
    %2503 = vmatprep.subr.mxu0 0.0
    %2504 = vmatpush2.msra.mxu0 0.0
    %2505 = vmatprep.subr.mxu0 0.0
    %2506 = vmatpush2.msra.mxu0 0.0
    %2507 = vmatprep.subr.mxu0 0.0
    %2508 = vmatpush2.msra.mxu0 0.0
    %2509 = vmatprep.subr.mxu0 0.0
    %2510 = vmatpush2.msra.mxu0 0.0
    %2511 = vmatprep.subr.mxu0 0.0
    %2512 = vmatpush2.msra.mxu0 0.0
    %2513 = vmatprep.subr.mxu0 0.0
    %2514 = vmatpush2.msra.mxu0 0.0
    %2515 = vmatprep.subr.mxu0 0.0
    %2516 = vmatpush2.msra.mxu0 0.0
    %2517 = vmatprep.subr.mxu0 0.0
    %2518 = vmatpush2.msra.mxu0 0.0
    %2519 = vmatprep.subr.mxu0 0.0
    %2520 = vmatpush2.msra.mxu0 0.0
    %2521 = vmatprep.subr.mxu0 0.0
    %2522 = vmatpush2.msra.mxu0 0.0
    %2523 = vmatprep.subr.mxu0 0.0
    %2524 = vmatpush2.msra.mxu0 0.0
    %2525 = vmatprep.subr.mxu0 0.0
    %2526 = vmatpush2.msra.mxu0 0.0
    %2527 = vmatprep.mubr.f32.mxu0 0.0
    %2528 = vmatmul.mubr.f32.gmra.mxu0 %v2461
    %v2529 = vpop.f32.mrf.mxu0
    %v2530 = vadd.f32 %v2322, %v2529
    %v2531 = vpop.f32.mrf.mxu0
    %2532 = vdwg.mxu0
    %v2534 = vrot.slane %v2530, 6
    %v2536 = vadd.f32 %v2317, %v2534
    %v2537 = vxor.u32 %v2536, 2147483648
    %v2538 = vmul.f32 %v2537, 1.442695
    %v2539 = vpow.pop %v2538
    %v2540 = vadd.f32 %v2539, 1.0
    %v2541 = vrcp.pop %v2540
    %v2542 = vmul.f32 1.0, %v2541
    %2543 = vrot.lane.b32.xlu0 %v2534, 64
    %v2544 = vpop.permute.xlu0 %2543
    %v2546 = vmul.f32 %v2542, %v2544
    %2548 = vrot.lane.b32.xlu0 %v2546, 64
    %v2549 = vpop.permute.xlu0 %2548
    %v2551 = vadd.f32 %v2317, %v2549
    %v2552 = vtanh.pop %v2551
    %v2553 = vsub.f32 1.0, %v2542
    %2555 = vrot.lane.b32.xlu0 %v2552, 96
    %v2556 = vpop.permute.xlu0 %2555
    %v2558 = vmul.f32 %v2553, %v2556
    %v2559 = vrot.slane %v2456, 7
    %v2561 = vmul.f32 %v2542, %v2559
    %v2562 = vadd.f32 %v2558, %v2561
    %v2564 = vrot.slane %v2562, 2
    %2565 = vrot.lane.b32.xlu0 %v2564, 96
    %v2566 = vpop.permute.xlu0 %2565
    %v2567 = vsel %vm2354, %v2566, 0
    %2569 = vmatprep.subr.mxu0 0.0
    %2570 = vmatpush1.msra.mxu0 0.0
    %2571 = vmatprep.subr.mxu0 0.0
    %2572 = vmatpush1.msra.mxu0 0.0
    %2573 = vmatprep.subr.mxu0 0.0
    %2574 = vmatpush1.msra.mxu0 0.0
    %2575 = vmatprep.subr.mxu0 0.0
    %2576 = vmatpush1.msra.mxu0 0.0
    %2577 = vmatprep.subr.mxu0 0.0
    %2578 = vmatpush1.msra.mxu0 0.0
    %2579 = vmatprep.subr.mxu0 0.0
    %2580 = vmatpush1.msra.mxu0 0.0
    %2581 = vmatprep.subr.mxu0 0.0
    %2582 = vmatpush1.msra.mxu0 0.0
    %2583 = vmatprep.subr.mxu0 0.0
    %2584 = vmatpush1.msra.mxu0 0.0
    %2585 = vmatprep.subr.mxu0 0.0
    %2586 = vmatpush1.msra.mxu0 0.0
    %2587 = vmatprep.subr.mxu0 0.0
    %2588 = vmatpush1.msra.mxu0 0.0
    %2589 = vmatprep.subr.mxu0 0.0
    %2590 = vmatpush1.msra.mxu0 0.0
    %2591 = vmatprep.subr.mxu0 0.0
    %2592 = vmatpush1.msra.mxu0 0.0
    %2593 = vmatprep.subr.mxu0 0.0
    %2594 = vmatpush1.msra.mxu0 %v2326
    %2595 = vmatprep.subr.mxu0 0.0
    %2596 = vmatpush1.msra.mxu0 %v2325
    %2597 = vmatprep.subr.mxu0 0.0
    %2598 = vmatpush1.msra.mxu0 %v2324
    %2599 = vmatprep.subr.mxu0 0.0
    %2600 = vmatpush1.msra.mxu0 %v2323
    %2601 = vmatprep.subr.mxu0 0.0
    %2602 = vmatpush2.msra.mxu0 0.0
    %2603 = vmatprep.subr.mxu0 0.0
    %2604 = vmatpush2.msra.mxu0 0.0
    %2605 = vmatprep.subr.mxu0 0.0
    %2606 = vmatpush2.msra.mxu0 0.0
    %2607 = vmatprep.subr.mxu0 0.0
    %2608 = vmatpush2.msra.mxu0 0.0
    %2609 = vmatprep.subr.mxu0 0.0
    %2610 = vmatpush2.msra.mxu0 0.0
    %2611 = vmatprep.subr.mxu0 0.0
    %2612 = vmatpush2.msra.mxu0 0.0
    %2613 = vmatprep.subr.mxu0 0.0
    %2614 = vmatpush2.msra.mxu0 0.0
    %2615 = vmatprep.subr.mxu0 0.0
    %2616 = vmatpush2.msra.mxu0 0.0
    %2617 = vmatprep.subr.mxu0 0.0
    %2618 = vmatpush2.msra.mxu0 0.0
    %2619 = vmatprep.subr.mxu0 0.0
    %2620 = vmatpush2.msra.mxu0 0.0
    %2621 = vmatprep.subr.mxu0 0.0
    %2622 = vmatpush2.msra.mxu0 0.0
    %2623 = vmatprep.subr.mxu0 0.0
    %2624 = vmatpush2.msra.mxu0 0.0
    %2625 = vmatprep.subr.mxu0 0.0
    %2626 = vmatpush2.msra.mxu0 0.0
    %2627 = vmatprep.subr.mxu0 0.0
    %2628 = vmatpush2.msra.mxu0 0.0
    %2629 = vmatprep.subr.mxu0 0.0
    %2630 = vmatpush2.msra.mxu0 0.0
    %2631 = vmatprep.subr.mxu0 0.0
    %2632 = vmatpush2.msra.mxu0 0.0
    %2633 = vmatprep.mubr.f32.mxu0 0.0
    %2634 = vmatmul.mubr.f32.gmra.mxu0 %v2567
    %v2635 = vpop.f32.mrf.mxu0
    %v2636 = vadd.f32 %v2322, %v2635
    %v2637 = vpop.f32.mrf.mxu0
    %2638 = vdwg.mxu0
    %v2640 = vrot.slane %v2636, 5
    %v2642 = vadd.f32 %v2317, %v2640
    %v2643 = vxor.u32 %v2642, 2147483648
    %v2644 = vmul.f32 %v2643, 1.442695
    %v2645 = vpow.pop %v2644
    %v2646 = vadd.f32 %v2645, 1.0
    %v2647 = vrcp.pop %v2646
    %v2648 = vmul.f32 1.0, %v2647
    %2649 = vrot.lane.b32.xlu0 %v2640, 64
    %v2650 = vpop.permute.xlu0 %2649
    %v2652 = vmul.f32 %v2648, %v2650
    %2654 = vrot.lane.b32.xlu0 %v2652, 64
    %v2655 = vpop.permute.xlu0 %2654
    %v2657 = vadd.f32 %v2317, %v2655
    %v2658 = vtanh.pop %v2657
    %v2659 = vsub.f32 1.0, %v2648
    %2661 = vrot.lane.b32.xlu0 %v2658, 96
    %v2662 = vpop.permute.xlu0 %2661
    %v2664 = vmul.f32 %v2659, %v2662
    %v2665 = vrot.slane %v2562, 7
    %v2667 = vmul.f32 %v2648, %v2665
    %v2668 = vadd.f32 %v2664, %v2667
    %v2670 = vrot.slane %v2668, 3
    %2671 = vrot.lane.b32.xlu0 %v2670, 96
    %v2672 = vpop.permute.xlu0 %2671
    %v2673 = vsel %vm2354, %v2672, 0
    %2675 = vmatprep.subr.mxu0 0.0
    %2676 = vmatpush1.msra.mxu0 0.0
    %2677 = vmatprep.subr.mxu0 0.0
    %2678 = vmatpush1.msra.mxu0 0.0
    %2679 = vmatprep.subr.mxu0 0.0
    %2680 = vmatpush1.msra.mxu0 0.0
    %2681 = vmatprep.subr.mxu0 0.0
    %2682 = vmatpush1.msra.mxu0 0.0
    %2683 = vmatprep.subr.mxu0 0.0
    %2684 = vmatpush1.msra.mxu0 0.0
    %2685 = vmatprep.subr.mxu0 0.0
    %2686 = vmatpush1.msra.mxu0 0.0
    %2687 = vmatprep.subr.mxu0 0.0
    %2688 = vmatpush1.msra.mxu0 0.0
    %2689 = vmatprep.subr.mxu0 0.0
    %2690 = vmatpush1.msra.mxu0 0.0
    %2691 = vmatprep.subr.mxu0 0.0
    %2692 = vmatpush1.msra.mxu0 0.0
    %2693 = vmatprep.subr.mxu0 0.0
    %2694 = vmatpush1.msra.mxu0 0.0
    %2695 = vmatprep.subr.mxu0 0.0
    %2696 = vmatpush1.msra.mxu0 0.0
    %2697 = vmatprep.subr.mxu0 0.0
    %2698 = vmatpush1.msra.mxu0 0.0
    %2699 = vmatprep.subr.mxu0 0.0
    %2700 = vmatpush1.msra.mxu0 %v2326
    %2701 = vmatprep.subr.mxu0 0.0
    %2702 = vmatpush1.msra.mxu0 %v2325
    %2703 = vmatprep.subr.mxu0 0.0
    %2704 = vmatpush1.msra.mxu0 %v2324
    %2705 = vmatprep.subr.mxu0 0.0
    %2706 = vmatpush1.msra.mxu0 %v2323
    %2707 = vmatprep.subr.mxu0 0.0
    %2708 = vmatpush2.msra.mxu0 0.0
    %2709 = vmatprep.subr.mxu0 0.0
    %2710 = vmatpush2.msra.mxu0 0.0
    %2711 = vmatprep.subr.mxu0 0.0
    %2712 = vmatpush2.msra.mxu0 0.0
    %2713 = vmatprep.subr.mxu0 0.0
    %2714 = vmatpush2.msra.mxu0 0.0
    %2715 = vmatprep.subr.mxu0 0.0
    %2716 = vmatpush2.msra.mxu0 0.0
    %2717 = vmatprep.subr.mxu0 0.0
    %2718 = vmatpush2.msra.mxu0 0.0
    %2719 = vmatprep.subr.mxu0 0.0
    %2720 = vmatpush2.msra.mxu0 0.0
    %2721 = vmatprep.subr.mxu0 0.0
    %2722 = vmatpush2.msra.mxu0 0.0
    %2723 = vmatprep.subr.mxu0 0.0
    %2724 = vmatpush2.msra.mxu0 0.0
    %2725 = vmatprep.subr.mxu0 0.0
    %2726 = vmatpush2.msra.mxu0 0.0
    %2727 = vmatprep.subr.mxu0 0.0
    %2728 = vmatpush2.msra.mxu0 0.0
    %2729 = vmatprep.subr.mxu0 0.0
    %2730 = vmatpush2.msra.mxu0 0.0
    %2731 = vmatprep.subr.mxu0 0.0
    %2732 = vmatpush2.msra.mxu0 0.0
    %2733 = vmatprep.subr.mxu0 0.0
    %2734 = vmatpush2.msra.mxu0 0.0
    %2735 = vmatprep.subr.mxu0 0.0
    %2736 = vmatpush2.msra.mxu0 0.0
    %2737 = vmatprep.subr.mxu0 0.0
    %2738 = vmatpush2.msra.mxu0 0.0
    %2739 = vmatprep.mubr.f32.mxu0 0.0
    %2740 = vmatmul.mubr.f32.gmra.mxu0 %v2673
    %v2741 = vpop.f32.mrf.mxu0
    %v2742 = vadd.f32 %v2322, %v2741
    %v2743 = vpop.f32.mrf.mxu0
    %2744 = vdwg.mxu0
    %v2746 = vrot.slane %v2742, 4
    %v2748 = vadd.f32 %v2317, %v2746
    %v2749 = vxor.u32 %v2748, 2147483648
    %v2750 = vmul.f32 %v2749, 1.442695
    %v2751 = vpow.pop %v2750
    %v2752 = vadd.f32 %v2751, 1.0
    %v2753 = vrcp.pop %v2752
    %v2754 = vmul.f32 1.0, %v2753
    %2755 = vrot.lane.b32.xlu0 %v2746, 64
    %v2756 = vpop.permute.xlu0 %2755
    %v2758 = vmul.f32 %v2754, %v2756
    %2760 = vrot.lane.b32.xlu0 %v2758, 64
    %v2761 = vpop.permute.xlu0 %2760
    %v2763 = vadd.f32 %v2317, %v2761
    %v2764 = vtanh.pop %v2763
    %v2765 = vsub.f32 1.0, %v2754
    %2767 = vrot.lane.b32.xlu0 %v2764, 96
    %v2768 = vpop.permute.xlu0 %2767
    %v2770 = vmul.f32 %v2765, %v2768
    %v2771 = vrot.slane %v2668, 7
    %v2773 = vmul.f32 %v2754, %v2771
    %v2774 = vadd.f32 %v2770, %v2773
    %v2776 = vrot.slane %v2774, 4
    %2777 = vrot.lane.b32.xlu0 %v2776, 96
    %v2778 = vpop.permute.xlu0 %2777
    %v2779 = vsel %vm2354, %v2778, 0
    %2781 = vmatprep.subr.mxu0 0.0
    %2782 = vmatpush1.msra.mxu0 0.0
    %2783 = vmatprep.subr.mxu0 0.0
    %2784 = vmatpush1.msra.mxu0 0.0
    %2785 = vmatprep.subr.mxu0 0.0
    %2786 = vmatpush1.msra.mxu0 0.0
    %2787 = vmatprep.subr.mxu0 0.0
    %2788 = vmatpush1.msra.mxu0 0.0
    %2789 = vmatprep.subr.mxu0 0.0
    %2790 = vmatpush1.msra.mxu0 0.0
    %2791 = vmatprep.subr.mxu0 0.0
    %2792 = vmatpush1.msra.mxu0 0.0
    %2793 = vmatprep.subr.mxu0 0.0
    %2794 = vmatpush1.msra.mxu0 0.0
    %2795 = vmatprep.subr.mxu0 0.0
    %2796 = vmatpush1.msra.mxu0 0.0
    %2797 = vmatprep.subr.mxu0 0.0
    %2798 = vmatpush1.msra.mxu0 0.0
    %2799 = vmatprep.subr.mxu0 0.0
    %2800 = vmatpush1.msra.mxu0 0.0
    %2801 = vmatprep.subr.mxu0 0.0
    %2802 = vmatpush1.msra.mxu0 0.0
    %2803 = vmatprep.subr.mxu0 0.0
    %2804 = vmatpush1.msra.mxu0 0.0
    %2805 = vmatprep.subr.mxu0 0.0
    %2806 = vmatpush1.msra.mxu0 %v2326
    %2807 = vmatprep.subr.mxu0 0.0
    %2808 = vmatpush1.msra.mxu0 %v2325
    %2809 = vmatprep.subr.mxu0 0.0
    %2810 = vmatpush1.msra.mxu0 %v2324
    %2811 = vmatprep.subr.mxu0 0.0
    %2812 = vmatpush1.msra.mxu0 %v2323
    %2813 = vmatprep.subr.mxu0 0.0
    %2814 = vmatpush2.msra.mxu0 0.0
    %2815 = vmatprep.subr.mxu0 0.0
    %2816 = vmatpush2.msra.mxu0 0.0
    %2817 = vmatprep.subr.mxu0 0.0
    %2818 = vmatpush2.msra.mxu0 0.0
    %2819 = vmatprep.subr.mxu0 0.0
    %2820 = vmatpush2.msra.mxu0 0.0
    %2821 = vmatprep.subr.mxu0 0.0
    %2822 = vmatpush2.msra.mxu0 0.0
    %2823 = vmatprep.subr.mxu0 0.0
    %2824 = vmatpush2.msra.mxu0 0.0
    %2825 = vmatprep.subr.mxu0 0.0
    %2826 = vmatpush2.msra.mxu0 0.0
    %2827 = vmatprep.subr.mxu0 0.0
    %2828 = vmatpush2.msra.mxu0 0.0
    %2829 = vmatprep.subr.mxu0 0.0
    %2830 = vmatpush2.msra.mxu0 0.0
    %2831 = vmatprep.subr.mxu0 0.0
    %2832 = vmatpush2.msra.mxu0 0.0
    %2833 = vmatprep.subr.mxu0 0.0
    %2834 = vmatpush2.msra.mxu0 0.0
    %2835 = vmatprep.subr.mxu0 0.0
    %2836 = vmatpush2.msra.mxu0 0.0
    %2837 = vmatprep.subr.mxu0 0.0
    %2838 = vmatpush2.msra.mxu0 0.0
    %2839 = vmatprep.subr.mxu0 0.0
    %2840 = vmatpush2.msra.mxu0 0.0
    %2841 = vmatprep.subr.mxu0 0.0
    %2842 = vmatpush2.msra.mxu0 0.0
    %2843 = vmatprep.subr.mxu0 0.0
    %2844 = vmatpush2.msra.mxu0 0.0
    %2845 = vmatprep.mubr.f32.mxu0 0.0
    %2846 = vmatmul.mubr.f32.gmra.mxu0 %v2779
    %v2847 = vpop.f32.mrf.mxu0
    %v2848 = vadd.f32 %v2322, %v2847
    %v2849 = vpop.f32.mrf.mxu0
    %2850 = vdwg.mxu0
    %v2852 = vrot.slane %v2848, 3
    %v2854 = vadd.f32 %v2317, %v2852
    %v2855 = vxor.u32 %v2854, 2147483648
    %v2856 = vmul.f32 %v2855, 1.442695
    %v2857 = vpow.pop %v2856
    %v2858 = vadd.f32 %v2857, 1.0
    %v2859 = vrcp.pop %v2858
    %v2860 = vmul.f32 1.0, %v2859
    %2861 = vrot.lane.b32.xlu0 %v2852, 64
    %v2862 = vpop.permute.xlu0 %2861
    %v2864 = vmul.f32 %v2860, %v2862
    %2866 = vrot.lane.b32.xlu0 %v2864, 64
    %v2867 = vpop.permute.xlu0 %2866
    %v2869 = vadd.f32 %v2317, %v2867
    %v2870 = vtanh.pop %v2869
    %v2871 = vsub.f32 1.0, %v2860
    %2873 = vrot.lane.b32.xlu0 %v2870, 96
    %v2874 = vpop.permute.xlu0 %2873
    %v2876 = vmul.f32 %v2871, %v2874
    %v2877 = vrot.slane %v2774, 7
    %v2879 = vmul.f32 %v2860, %v2877
    %v2880 = vadd.f32 %v2876, %v2879
    %v2882 = vrot.slane %v2880, 5
    %2883 = vrot.lane.b32.xlu0 %v2882, 96
    %v2884 = vpop.permute.xlu0 %2883
    %v2885 = vsel %vm2354, %v2884, 0
    %2887 = vmatprep.subr.mxu0 0.0
    %2888 = vmatpush1.msra.mxu0 0.0
    %2889 = vmatprep.subr.mxu0 0.0
    %2890 = vmatpush1.msra.mxu0 0.0
    %2891 = vmatprep.subr.mxu0 0.0
    %2892 = vmatpush1.msra.mxu0 0.0
    %2893 = vmatprep.subr.mxu0 0.0
    %2894 = vmatpush1.msra.mxu0 0.0
    %2895 = vmatprep.subr.mxu0 0.0
    %2896 = vmatpush1.msra.mxu0 0.0
    %2897 = vmatprep.subr.mxu0 0.0
    %2898 = vmatpush1.msra.mxu0 0.0
    %2899 = vmatprep.subr.mxu0 0.0
    %2900 = vmatpush1.msra.mxu0 0.0
    %2901 = vmatprep.subr.mxu0 0.0
    %2902 = vmatpush1.msra.mxu0 0.0
    %2903 = vmatprep.subr.mxu0 0.0
    %2904 = vmatpush1.msra.mxu0 0.0
    %2905 = vmatprep.subr.mxu0 0.0
    %2906 = vmatpush1.msra.mxu0 0.0
    %2907 = vmatprep.subr.mxu0 0.0
    %2908 = vmatpush1.msra.mxu0 0.0
    %2909 = vmatprep.subr.mxu0 0.0
    %2910 = vmatpush1.msra.mxu0 0.0
    %2911 = vmatprep.subr.mxu0 0.0
    %2912 = vmatpush1.msra.mxu0 %v2326
    %2913 = vmatprep.subr.mxu0 0.0
    %2914 = vmatpush1.msra.mxu0 %v2325
    %2915 = vmatprep.subr.mxu0 0.0
    %2916 = vmatpush1.msra.mxu0 %v2324
    %2917 = vmatprep.subr.mxu0 0.0
    %2918 = vmatpush1.msra.mxu0 %v2323
    %2919 = vmatprep.subr.mxu0 0.0
    %2920 = vmatpush2.msra.mxu0 0.0
    %2921 = vmatprep.subr.mxu0 0.0
    %2922 = vmatpush2.msra.mxu0 0.0
    %2923 = vmatprep.subr.mxu0 0.0
    %2924 = vmatpush2.msra.mxu0 0.0
    %2925 = vmatprep.subr.mxu0 0.0
    %2926 = vmatpush2.msra.mxu0 0.0
    %2927 = vmatprep.subr.mxu0 0.0
    %2928 = vmatpush2.msra.mxu0 0.0
    %2929 = vmatprep.subr.mxu0 0.0
    %2930 = vmatpush2.msra.mxu0 0.0
    %2931 = vmatprep.subr.mxu0 0.0
    %2932 = vmatpush2.msra.mxu0 0.0
    %2933 = vmatprep.subr.mxu0 0.0
    %2934 = vmatpush2.msra.mxu0 0.0
    %2935 = vmatprep.subr.mxu0 0.0
    %2936 = vmatpush2.msra.mxu0 0.0
    %2937 = vmatprep.subr.mxu0 0.0
    %2938 = vmatpush2.msra.mxu0 0.0
    %2939 = vmatprep.subr.mxu0 0.0
    %2940 = vmatpush2.msra.mxu0 0.0
    %2941 = vmatprep.subr.mxu0 0.0
    %2942 = vmatpush2.msra.mxu0 0.0
    %2943 = vmatprep.subr.mxu0 0.0
    %2944 = vmatpush2.msra.mxu0 0.0
    %2945 = vmatprep.subr.mxu0 0.0
    %2946 = vmatpush2.msra.mxu0 0.0
    %2947 = vmatprep.subr.mxu0 0.0
    %2948 = vmatpush2.msra.mxu0 0.0
    %2949 = vmatprep.subr.mxu0 0.0
    %2950 = vmatpush2.msra.mxu0 0.0
    %2951 = vmatprep.mubr.f32.mxu0 0.0
    %2952 = vmatmul.mubr.f32.gmra.mxu0 %v2885
    %v2953 = vpop.f32.mrf.mxu0
    %v2954 = vadd.f32 %v2322, %v2953
    %v2955 = vpop.f32.mrf.mxu0
    %2956 = vdwg.mxu0
    %v2958 = vrot.slane %v2954, 2
    %v2960 = vadd.f32 %v2317, %v2958
    %v2961 = vxor.u32 %v2960, 2147483648
    %v2962 = vmul.f32 %v2961, 1.442695
    %v2963 = vpow.pop %v2962
    %v2964 = vadd.f32 %v2963, 1.0
    %v2965 = vrcp.pop %v2964
    %v2966 = vmul.f32 1.0, %v2965
    %2967 = vrot.lane.b32.xlu0 %v2958, 64
    %v2968 = vpop.permute.xlu0 %2967
    %v2970 = vmul.f32 %v2966, %v2968
    %2972 = vrot.lane.b32.xlu0 %v2970, 64
    %v2973 = vpop.permute.xlu0 %2972
    %v2975 = vadd.f32 %v2317, %v2973
    %v2976 = vtanh.pop %v2975
    %v2977 = vsub.f32 1.0, %v2966
    %2979 = vrot.lane.b32.xlu0 %v2976, 96
    %v2980 = vpop.permute.xlu0 %2979
    %v2982 = vmul.f32 %v2977, %v2980
    %v2983 = vrot.slane %v2880, 7
    %v2985 = vmul.f32 %v2966, %v2983
    %v2986 = vadd.f32 %v2982, %v2985
    %v2988 = vrot.slane %v2986, 6
    %2989 = vrot.lane.b32.xlu0 %v2988, 96
    %v2990 = vpop.permute.xlu0 %2989
    %v2991 = vsel %vm2354, %v2990, 0
    %2993 = vmatprep.subr.mxu0 0.0
    %2994 = vmatpush1.msra.mxu0 0.0
    %2995 = vmatprep.subr.mxu0 0.0
    %2996 = vmatpush1.msra.mxu0 0.0
    %2997 = vmatprep.subr.mxu0 0.0
    %2998 = vmatpush1.msra.mxu0 0.0
    %2999 = vmatprep.subr.mxu0 0.0
    %3000 = vmatpush1.msra.mxu0 0.0
    %3001 = vmatprep.subr.mxu0 0.0
    %3002 = vmatpush1.msra.mxu0 0.0
    %3003 = vmatprep.subr.mxu0 0.0
    %3004 = vmatpush1.msra.mxu0 0.0
    %3005 = vmatprep.subr.mxu0 0.0
    %3006 = vmatpush1.msra.mxu0 0.0
    %3007 = vmatprep.subr.mxu0 0.0
    %3008 = vmatpush1.msra.mxu0 0.0
    %3009 = vmatprep.subr.mxu0 0.0
    %3010 = vmatpush1.msra.mxu0 0.0
    %3011 = vmatprep.subr.mxu0 0.0
    %3012 = vmatpush1.msra.mxu0 0.0
    %3013 = vmatprep.subr.mxu0 0.0
    %3014 = vmatpush1.msra.mxu0 0.0
    %3015 = vmatprep.subr.mxu0 0.0
    %3016 = vmatpush1.msra.mxu0 0.0
    %3017 = vmatprep.subr.mxu0 0.0
    %3018 = vmatpush1.msra.mxu0 %v2326
    %3019 = vmatprep.subr.mxu0 0.0
    %3020 = vmatpush1.msra.mxu0 %v2325
    %3021 = vmatprep.subr.mxu0 0.0
    %3022 = vmatpush1.msra.mxu0 %v2324
    %3023 = vmatprep.subr.mxu0 0.0
    %3024 = vmatpush1.msra.mxu0 %v2323
    %3025 = vmatprep.subr.mxu0 0.0
    %3026 = vmatpush2.msra.mxu0 0.0
    %3027 = vmatprep.subr.mxu0 0.0
    %3028 = vmatpush2.msra.mxu0 0.0
    %3029 = vmatprep.subr.mxu0 0.0
    %3030 = vmatpush2.msra.mxu0 0.0
    %3031 = vmatprep.subr.mxu0 0.0
    %3032 = vmatpush2.msra.mxu0 0.0
    %3033 = vmatprep.subr.mxu0 0.0
    %3034 = vmatpush2.msra.mxu0 0.0
    %3035 = vmatprep.subr.mxu0 0.0
    %3036 = vmatpush2.msra.mxu0 0.0
    %3037 = vmatprep.subr.mxu0 0.0
    %3038 = vmatpush2.msra.mxu0 0.0
    %3039 = vmatprep.subr.mxu0 0.0
    %3040 = vmatpush2.msra.mxu0 0.0
    %3041 = vmatprep.subr.mxu0 0.0
    %3042 = vmatpush2.msra.mxu0 0.0
    %3043 = vmatprep.subr.mxu0 0.0
    %3044 = vmatpush2.msra.mxu0 0.0
    %3045 = vmatprep.subr.mxu0 0.0
    %3046 = vmatpush2.msra.mxu0 0.0
    %3047 = vmatprep.subr.mxu0 0.0
    %3048 = vmatpush2.msra.mxu0 0.0
    %3049 = vmatprep.subr.mxu0 0.0
    %3050 = vmatpush2.msra.mxu0 0.0
    %3051 = vmatprep.subr.mxu0 0.0
    %3052 = vmatpush2.msra.mxu0 0.0
    %3053 = vmatprep.subr.mxu0 0.0
    %3054 = vmatpush2.msra.mxu0 0.0
    %3055 = vmatprep.subr.mxu0 0.0
    %3056 = vmatpush2.msra.mxu0 0.0
    %3057 = vmatprep.mubr.f32.mxu0 0.0
    %3058 = vmatmul.mubr.f32.gmra.mxu0 %v2991
    %v3059 = vpop.f32.mrf.mxu0
    %v3060 = vadd.f32 %v2322, %v3059
    %v3061 = vpop.f32.mrf.mxu0
    %3062 = vdwg.mxu0
    %v3064 = vrot.slane %v3060, 1
    %v3066 = vadd.f32 %v2317, %v3064
    %v3067 = vxor.u32 %v3066, 2147483648
    %v3068 = vmul.f32 %v3067, 1.442695
    %v3069 = vpow.pop %v3068
    %v3070 = vadd.f32 %v3069, 1.0
    %v3071 = vrcp.pop %v3070
    %v3072 = vmul.f32 1.0, %v3071
    %3073 = vrot.lane.b32.xlu0 %v3064, 64
    %v3074 = vpop.permute.xlu0 %3073
    %v3076 = vmul.f32 %v3072, %v3074
    %3078 = vrot.lane.b32.xlu0 %v3076, 64
    %v3079 = vpop.permute.xlu0 %3078
    %v3081 = vadd.f32 %v2317, %v3079
    %v3082 = vtanh.pop %v3081
    %v3083 = vsub.f32 1.0, %v3072
    %3085 = vrot.lane.b32.xlu0 %v3082, 96
    %v3086 = vpop.permute.xlu0 %3085
    %v3088 = vmul.f32 %v3083, %v3086
    %v3089 = vrot.slane %v2986, 7
    %v3091 = vmul.f32 %v3072, %v3089
    %v3092 = vadd.f32 %v3088, %v3091
    %vm3093 = vcmask 1040384
    %v3094 = vsel %vm3093, %v2350, %v2456
    %vm3095 = vcmask 1041408
    %v3096 = vsel %vm3095, %v3094, %v2562
    %vm3097 = vcmask 1042432
    %v3098 = vsel %vm3097, %v3096, %v2668
    %vm3099 = vcmask 1043456
    %v3100 = vsel %vm3099, %v3098, %v2774
    %vm3101 = vcmask 1044480
    %v3102 = vsel %vm3101, %v3100, %v2880
    %vm3103 = vcmask 1045504
    %v3104 = vsel %vm3103, %v3102, %v2986
    %vm3105 = vcmask 1046528
    %v3106 = vsel %vm3105, %v3104, %v3092
    %3108 = vrot.lane.b32.xlu0 %v631, 96
    %v3109 = vpop.permute.xlu0 %3108
    %3112 = vrot.lane.b32.xlu0 %v1787, 32
    %v3113 = vpop.permute.xlu0 %3112
    %v3115 = vsel %vm2354, %v3109, %v1215
    %vm3116 = vcmask 523264
    %v3117 = vsel %vm3116, %v3115, %v3113
    %v3118 = vld [vmem:[%s6] sm:$0xff]
    %v3119 = vld [vmem:[%s6 + $0x8] sm:$0xff]
    %v3120 = vld [vmem:[%s6 + $0x10] sm:$0xff]
    %v3121 = vld [vmem:[%s6 + $0x18] sm:$0xff]
    %v3122 = vld [vmem:[%s6 + $0x20] sm:$0xff]
    %v3123 = vld [vmem:[%s6 + $0x28] sm:$0xff]
    %v3124 = vld [vmem:[%s6 + $0x30] sm:$0xff]
    %v3125 = vld [vmem:[%s6 + $0x38] sm:$0xff]
    %v3126 = vld [vmem:[%s6 + $0x40] sm:$0xff]
    %v3127 = vld [vmem:[%s6 + $0x48] sm:$0xff]
    %v3128 = vld [vmem:[%s6 + $0x50] sm:$0xff]
    %v3129 = vld [vmem:[%s6 + $0x58] sm:$0xff]
    %v3130 = vld [vmem:[#allocation2] sm:$0x1]
    %vm3131 = vcmask 785408
    %v3133 = vsel %vm3131, %v3117, 0
    %3135 = vmatprep.subr.mxu0 0.0
    %3136 = vmatpush1.msra.mxu0 0.0
    %3137 = vmatprep.subr.mxu0 0.0
    %3138 = vmatpush1.msra.mxu0 0.0
    %3139 = vmatprep.subr.mxu0 0.0
    %3140 = vmatpush1.msra.mxu0 0.0
    %3141 = vmatprep.subr.mxu0 0.0
    %3142 = vmatpush1.msra.mxu0 0.0
    %3143 = vmatprep.subr.mxu0 0.0
    %3144 = vmatpush1.msra.mxu0 %v3129
    %3145 = vmatprep.subr.mxu0 0.0
    %3146 = vmatpush1.msra.mxu0 %v3128
    %3147 = vmatprep.subr.mxu0 0.0
    %3148 = vmatpush1.msra.mxu0 %v3127
    %3149 = vmatprep.subr.mxu0 0.0
    %3150 = vmatpush1.msra.mxu0 %v3126
    %3151 = vmatprep.subr.mxu0 0.0
    %3152 = vmatpush1.msra.mxu0 %v3125
    %3153 = vmatprep.subr.mxu0 0.0
    %3154 = vmatpush1.msra.mxu0 %v3124
    %3155 = vmatprep.subr.mxu0 0.0
    %3156 = vmatpush1.msra.mxu0 %v3123
    %3157 = vmatprep.subr.mxu0 0.0
    %3158 = vmatpush1.msra.mxu0 %v3122
    %3159 = vmatprep.subr.mxu0 0.0
    %3160 = vmatpush1.msra.mxu0 %v3121
    %3161 = vmatprep.subr.mxu0 0.0
    %3162 = vmatpush1.msra.mxu0 %v3120
    %3163 = vmatprep.subr.mxu0 0.0
    %3164 = vmatpush1.msra.mxu0 %v3119
    %3165 = vmatprep.subr.mxu0 0.0
    %3166 = vmatpush1.msra.mxu0 %v3118
    %3167 = vmatprep.subr.mxu0 0.0
    %3168 = vmatpush2.msra.mxu0 0.0
    %3169 = vmatprep.subr.mxu0 0.0
    %3170 = vmatpush2.msra.mxu0 0.0
    %3171 = vmatprep.subr.mxu0 0.0
    %3172 = vmatpush2.msra.mxu0 0.0
    %3173 = vmatprep.subr.mxu0 0.0
    %3174 = vmatpush2.msra.mxu0 0.0
    %3175 = vmatprep.subr.mxu0 0.0
    %3176 = vmatpush2.msra.mxu0 0.0
    %3177 = vmatprep.subr.mxu0 0.0
    %3178 = vmatpush2.msra.mxu0 0.0
    %3179 = vmatprep.subr.mxu0 0.0
    %3180 = vmatpush2.msra.mxu0 0.0
    %3181 = vmatprep.subr.mxu0 0.0
    %3182 = vmatpush2.msra.mxu0 0.0
    %3183 = vmatprep.subr.mxu0 0.0
    %3184 = vmatpush2.msra.mxu0 0.0
    %3185 = vmatprep.subr.mxu0 0.0
    %3186 = vmatpush2.msra.mxu0 0.0
    %3187 = vmatprep.subr.mxu0 0.0
    %3188 = vmatpush2.msra.mxu0 0.0
    %3189 = vmatprep.subr.mxu0 0.0
    %3190 = vmatpush2.msra.mxu0 0.0
    %3191 = vmatprep.subr.mxu0 0.0
    %3192 = vmatpush2.msra.mxu0 0.0
    %3193 = vmatprep.subr.mxu0 0.0
    %3194 = vmatpush2.msra.mxu0 0.0
    %3195 = vmatprep.subr.mxu0 0.0
    %3196 = vmatpush2.msra.mxu0 0.0
    %3197 = vmatprep.subr.mxu0 0.0
    %3198 = vmatpush2.msra.mxu0 0.0
    %3199 = vmatprep.mubr.f32.mxu0 0.0
    %3200 = vmatmul.mubr.f32.gmra.mxu0 %v3133
    %v3201 = vpop.f32.mrf.mxu0
    %v3202 = vadd.f32 %v3130, %v3201
    %v3203 = vpop.f32.mrf.mxu0
    %3204 = vdwg.mxu0
    %vm3205 = vcmask 0
    %3206 = vst.msk [vmem:[#allocation7] sm:$0x1] %vm3205, %v3202
    %v3207 = vld [vmem:[%s8] sm:$0xff]
    %v3208 = vld [vmem:[%s8 + $0x8] sm:$0xff]
    %v3209 = vld [vmem:[%s8 + $0x10] sm:$0xff]
    %v3210 = vld [vmem:[%s8 + $0x18] sm:$0xff]
    %v3211 = vld [vmem:[%s8 + $0x20] sm:$0xff]
    %v3212 = vld [vmem:[%s8 + $0x28] sm:$0xff]
    %v3213 = vld [vmem:[%s8 + $0x30] sm:$0xff]
    %v3214 = vld [vmem:[%s8 + $0x38] sm:$0xff]
    %v3215 = vld [vmem:[%s8 + $0x40] sm:$0xff]
    %v3216 = vld [vmem:[%s8 + $0x48] sm:$0xff]
    %v3217 = vld [vmem:[%s8 + $0x50] sm:$0xff]
    %v3218 = vld [vmem:[%s8 + $0x58] sm:$0xff]
    %v3219 = vld [vmem:[%s10] sm:$0x1]
    %3220 = vmatprep.subr.mxu0 0.0
    %3221 = vmatpush1.msra.mxu0 0.0
    %3222 = vmatprep.subr.mxu0 0.0
    %3223 = vmatpush1.msra.mxu0 0.0
    %3224 = vmatprep.subr.mxu0 0.0
    %3225 = vmatpush1.msra.mxu0 0.0
    %3226 = vmatprep.subr.mxu0 0.0
    %3227 = vmatpush1.msra.mxu0 0.0
    %3228 = vmatprep.subr.mxu0 0.0
    %3229 = vmatpush1.msra.mxu0 %v3218
    %3230 = vmatprep.subr.mxu0 0.0
    %3231 = vmatpush1.msra.mxu0 %v3217
    %3232 = vmatprep.subr.mxu0 0.0
    %3233 = vmatpush1.msra.mxu0 %v3216
    %3234 = vmatprep.subr.mxu0 0.0
    %3235 = vmatpush1.msra.mxu0 %v3215
    %3236 = vmatprep.subr.mxu0 0.0
    %3237 = vmatpush1.msra.mxu0 %v3214
    %3238 = vmatprep.subr.mxu0 0.0
    %3239 = vmatpush1.msra.mxu0 %v3213
    %3240 = vmatprep.subr.mxu0 0.0
    %3241 = vmatpush1.msra.mxu0 %v3212
    %3242 = vmatprep.subr.mxu0 0.0
    %3243 = vmatpush1.msra.mxu0 %v3211
    %3244 = vmatprep.subr.mxu0 0.0
    %3245 = vmatpush1.msra.mxu0 %v3210
    %3246 = vmatprep.subr.mxu0 0.0
    %3247 = vmatpush1.msra.mxu0 %v3209
    %3248 = vmatprep.subr.mxu0 0.0
    %3249 = vmatpush1.msra.mxu0 %v3208
    %3250 = vmatprep.subr.mxu0 0.0
    %3251 = vmatpush1.msra.mxu0 %v3207
    %3252 = vmatprep.subr.mxu0 0.0
    %3253 = vmatpush2.msra.mxu0 0.0
    %3254 = vmatprep.subr.mxu0 0.0
    %3255 = vmatpush2.msra.mxu0 0.0
    %3256 = vmatprep.subr.mxu0 0.0
    %3257 = vmatpush2.msra.mxu0 0.0
    %3258 = vmatprep.subr.mxu0 0.0
    %3259 = vmatpush2.msra.mxu0 0.0
    %3260 = vmatprep.subr.mxu0 0.0
    %3261 = vmatpush2.msra.mxu0 0.0
    %3262 = vmatprep.subr.mxu0 0.0
    %3263 = vmatpush2.msra.mxu0 0.0
    %3264 = vmatprep.subr.mxu0 0.0
    %3265 = vmatpush2.msra.mxu0 0.0
    %3266 = vmatprep.subr.mxu0 0.0
    %3267 = vmatpush2.msra.mxu0 0.0
    %3268 = vmatprep.subr.mxu0 0.0
    %3269 = vmatpush2.msra.mxu0 0.0
    %3270 = vmatprep.subr.mxu0 0.0
    %3271 = vmatpush2.msra.mxu0 0.0
    %3272 = vmatprep.subr.mxu0 0.0
    %3273 = vmatpush2.msra.mxu0 0.0
    %3274 = vmatprep.subr.mxu0 0.0
    %3275 = vmatpush2.msra.mxu0 0.0
    %3276 = vmatprep.subr.mxu0 0.0
    %3277 = vmatpush2.msra.mxu0 0.0
    %3278 = vmatprep.subr.mxu0 0.0
    %3279 = vmatpush2.msra.mxu0 0.0
    %3280 = vmatprep.subr.mxu0 0.0
    %3281 = vmatpush2.msra.mxu0 0.0
    %3282 = vmatprep.subr.mxu0 0.0
    %3283 = vmatpush2.msra.mxu0 0.0
    %3284 = vmatprep.mubr.f32.mxu0 0.0
    %3285 = vmatmul.mubr.f32.gmra.mxu0 %v3133
    %v3286 = vpop.f32.mrf.mxu0
    %v3287 = vadd.f32 %v3219, %v3286
    %v3288 = vpop.f32.mrf.mxu0
    %3289 = vdwg.mxu0
    %v3290 = vld [vmem:[%s9] sm:$0xff]
    %v3291 = vld [vmem:[%s9 + $0x8] sm:$0xff]
    %v3292 = vld [vmem:[%s9 + $0x10] sm:$0xff]
    %v3293 = vld [vmem:[%s9 + $0x18] sm:$0xff]
    %3295 = vrot.lane.b32.xlu0 %v3106, 96
    %v3296 = vpop.permute.xlu0 %3295
    %v3297 = vsel %vm2354, %v3296, 0
    %3299 = vmatprep.subr.mxu0 0.0
    %3300 = vmatpush1.msra.mxu0 0.0
    %3301 = vmatprep.subr.mxu0 0.0
    %3302 = vmatpush1.msra.mxu0 0.0
    %3303 = vmatprep.subr.mxu0 0.0
    %3304 = vmatpush1.msra.mxu0 0.0
    %3305 = vmatprep.subr.mxu0 0.0
    %3306 = vmatpush1.msra.mxu0 0.0
    %3307 = vmatprep.subr.mxu0 0.0
    %3308 = vmatpush1.msra.mxu0 0.0
    %3309 = vmatprep.subr.mxu0 0.0
    %3310 = vmatpush1.msra.mxu0 0.0
    %3311 = vmatprep.subr.mxu0 0.0
    %3312 = vmatpush1.msra.mxu0 0.0
    %3313 = vmatprep.subr.mxu0 0.0
    %3314 = vmatpush1.msra.mxu0 0.0
    %3315 = vmatprep.subr.mxu0 0.0
    %3316 = vmatpush1.msra.mxu0 0.0
    %3317 = vmatprep.subr.mxu0 0.0
    %3318 = vmatpush1.msra.mxu0 0.0
    %3319 = vmatprep.subr.mxu0 0.0
    %3320 = vmatpush1.msra.mxu0 0.0
    %3321 = vmatprep.subr.mxu0 0.0
    %3322 = vmatpush1.msra.mxu0 0.0
    %3323 = vmatprep.subr.mxu0 0.0
    %3324 = vmatpush1.msra.mxu0 %v3293
    %3325 = vmatprep.subr.mxu0 0.0
    %3326 = vmatpush1.msra.mxu0 %v3292
    %3327 = vmatprep.subr.mxu0 0.0
    %3328 = vmatpush1.msra.mxu0 %v3291
    %3329 = vmatprep.subr.mxu0 0.0
    %3330 = vmatpush1.msra.mxu0 %v3290
    %3331 = vmatprep.subr.mxu0 0.0
    %3332 = vmatpush2.msra.mxu0 0.0
    %3333 = vmatprep.subr.mxu0 0.0
    %3334 = vmatpush2.msra.mxu0 0.0
    %3335 = vmatprep.subr.mxu0 0.0
    %3336 = vmatpush2.msra.mxu0 0.0
    %3337 = vmatprep.subr.mxu0 0.0
    %3338 = vmatpush2.msra.mxu0 0.0
    %3339 = vmatprep.subr.mxu0 0.0
    %3340 = vmatpush2.msra.mxu0 0.0
    %3341 = vmatprep.subr.mxu0 0.0
    %3342 = vmatpush2.msra.mxu0 0.0
    %3343 = vmatprep.subr.mxu0 0.0
    %3344 = vmatpush2.msra.mxu0 0.0
    %3345 = vmatprep.subr.mxu0 0.0
    %3346 = vmatpush2.msra.mxu0 0.0
    %3347 = vmatprep.subr.mxu0 0.0
    %3348 = vmatpush2.msra.mxu0 0.0
    %3349 = vmatprep.subr.mxu0 0.0
    %3350 = vmatpush2.msra.mxu0 0.0
    %3351 = vmatprep.subr.mxu0 0.0
    %3352 = vmatpush2.msra.mxu0 0.0
    %3353 = vmatprep.subr.mxu0 0.0
    %3354 = vmatpush2.msra.mxu0 0.0
    %3355 = vmatprep.subr.mxu0 0.0
    %3356 = vmatpush2.msra.mxu0 0.0
    %3357 = vmatprep.subr.mxu0 0.0
    %3358 = vmatpush2.msra.mxu0 0.0
    %3359 = vmatprep.subr.mxu0 0.0
    %3360 = vmatpush2.msra.mxu0 0.0
    %3361 = vmatprep.subr.mxu0 0.0
    %3362 = vmatpush2.msra.mxu0 0.0
    %3363 = vmatprep.mubr.f32.mxu0 0.0
    %3364 = vmatmul.mubr.f32.gmra.mxu0 %v3297
    %v3365 = vpop.f32.mrf.mxu0
    %v3366 = vadd.f32 0.0, %v3365
    %v3367 = vpop.f32.mrf.mxu0
    %3368 = vdwg.mxu0
    %v3369 = vlaneseq
    %v3370 = vshrl.u32 %v3369, 7
    %v3371 = vsub.s32 0, %v3370
    %v3372 = vrot.slane %v3287, %v3371
    %v3373 = vadd.f32 %v3372, %v3366
    %v3374 = vmax.f32 %v3373, 0.0
    %v3375 = vld [vmem:[%s11] sm:$0xff]
    %v3376 = vld [vmem:[%s11 + $0x8] sm:$0xff]
    %v3377 = vld [vmem:[%s11 + $0x10] sm:$0xff]
    %v3378 = vld [vmem:[%s11 + $0x18] sm:$0xff]
    %v3379 = vld [vmem:[%s11 + $0x20] sm:$0xff]
    %v3380 = vld [vmem:[%s11 + $0x28] sm:$0xff]
    %v3381 = vld [vmem:[%s11 + $0x30] sm:$0xff]
    %v3382 = vld [vmem:[%s11 + $0x38] sm:$0xff]
    %v3383 = vld [vmem:[%s11 + $0x40] sm:$0xff]
    %v3384 = vld [vmem:[%s11 + $0x48] sm:$0xff]
    %v3385 = vld [vmem:[%s11 + $0x50] sm:$0xff]
    %v3386 = vld [vmem:[%s11 + $0x58] sm:$0xff]
    %v3387 = vld [vmem:[%s11 + $0x60] sm:$0xff]
    %v3388 = vld [vmem:[%s11 + $0x68] sm:$0xff]
    %v3389 = vld [vmem:[%s11 + $0x70] sm:$0xff]
    %v3390 = vld [vmem:[%s11 + $0x78] sm:$0xff]
    %v3391 = vld [vmem:[#allocation3] sm:$0x1]
    %v3393 = vlaneseq
    %v3394 = vshrl.u32 %v3393, 7
    %v3395 = vsub.s32 0, %v3394
    %v3396 = vrot.slane %v3391, %v3395
    %3398 = vmatprep.subr.mxu0 0.0
    %3399 = vmatpush1.msra.mxu0 %v3390
    %3400 = vmatprep.subr.mxu0 0.0
    %3401 = vmatpush1.msra.mxu0 %v3389
    %3402 = vmatprep.subr.mxu0 0.0
    %3403 = vmatpush1.msra.mxu0 %v3388
    %3404 = vmatprep.subr.mxu0 0.0
    %3405 = vmatpush1.msra.mxu0 %v3387
    %3406 = vmatprep.subr.mxu0 0.0
    %3407 = vmatpush1.msra.mxu0 %v3386
    %3408 = vmatprep.subr.mxu0 0.0
    %3409 = vmatpush1.msra.mxu0 %v3385
    %3410 = vmatprep.subr.mxu0 0.0
    %3411 = vmatpush1.msra.mxu0 %v3384
    %3412 = vmatprep.subr.mxu0 0.0
    %3413 = vmatpush1.msra.mxu0 %v3383
    %3414 = vmatprep.subr.mxu0 0.0
    %3415 = vmatpush1.msra.mxu0 %v3382
    %3416 = vmatprep.subr.mxu0 0.0
    %3417 = vmatpush1.msra.mxu0 %v3381
    %3418 = vmatprep.subr.mxu0 0.0
    %3419 = vmatpush1.msra.mxu0 %v3380
    %3420 = vmatprep.subr.mxu0 0.0
    %3421 = vmatpush1.msra.mxu0 %v3379
    %3422 = vmatprep.subr.mxu0 0.0
    %3423 = vmatpush1.msra.mxu0 %v3378
    %3424 = vmatprep.subr.mxu0 0.0
    %3425 = vmatpush1.msra.mxu0 %v3377
    %3426 = vmatprep.subr.mxu0 0.0
    %3427 = vmatpush1.msra.mxu0 %v3376
    %3428 = vmatprep.subr.mxu0 0.0
    %3429 = vmatpush1.msra.mxu0 %v3375
    %3430 = vmatprep.subr.mxu0 0.0
    %3431 = vmatpush2.msra.mxu0 0.0
    %3432 = vmatprep.subr.mxu0 0.0
    %3433 = vmatpush2.msra.mxu0 0.0
    %3434 = vmatprep.subr.mxu0 0.0
    %3435 = vmatpush2.msra.mxu0 0.0
    %3436 = vmatprep.subr.mxu0 0.0
    %3437 = vmatpush2.msra.mxu0 0.0
    %3438 = vmatprep.subr.mxu0 0.0
    %3439 = vmatpush2.msra.mxu0 0.0
    %3440 = vmatprep.subr.mxu0 0.0
    %3441 = vmatpush2.msra.mxu0 0.0
    %3442 = vmatprep.subr.mxu0 0.0
    %3443 = vmatpush2.msra.mxu0 0.0
    %3444 = vmatprep.subr.mxu0 0.0
    %3445 = vmatpush2.msra.mxu0 0.0
    %3446 = vmatprep.subr.mxu0 0.0
    %3447 = vmatpush2.msra.mxu0 0.0
    %3448 = vmatprep.subr.mxu0 0.0
    %3449 = vmatpush2.msra.mxu0 0.0
    %3450 = vmatprep.subr.mxu0 0.0
    %3451 = vmatpush2.msra.mxu0 0.0
    %3452 = vmatprep.subr.mxu0 0.0
    %3453 = vmatpush2.msra.mxu0 0.0
    %3454 = vmatprep.subr.mxu0 0.0
    %3455 = vmatpush2.msra.mxu0 0.0
    %3456 = vmatprep.subr.mxu0 0.0
    %3457 = vmatpush2.msra.mxu0 0.0
    %3458 = vmatprep.subr.mxu0 0.0
    %3459 = vmatpush2.msra.mxu0 0.0
    %3460 = vmatprep.subr.mxu0 0.0
    %3461 = vmatpush2.msra.mxu0 0.0
    %3462 = vmatprep.mubr.f32.mxu0 0.0
    %3463 = vmatmul.mubr.f32.gmra.mxu0 %v3374
    %v3464 = vpop.f32.mrf.mxu0
    %v3465 = vadd.f32 %v3396, %v3464
    %v3466 = vpop.f32.mrf.mxu0
    %3467 = vdwg.mxu0
    %vm3468 = vcmask 7168
    %3469 = vst.msk [vmem:[%s14] sm:$0xff] %vm3468, %v3465
    %v3470 = vsel %vm3468, %v3465, -inf
    %v3471 = vrot.slane %v3470, 4
    %v3472 = vmax.f32 %v3470, %v3471
    %v3473 = vrot.slane %v3472, 2
    %v3474 = vmax.f32 %v3472, %v3473
    %v3475 = vrot.slane %v3474, 1
    %v3476 = vmax.f32 %v3474, %v3475
    %v3477 = vsub.f32 %v3465, %v3476
    %v3478 = vmul.f32 %v3477, 1.442695
    %v3479 = vpow.pop %v3478
    %v3480 = vsel %vm3468, %v3479, 0.0
    %v3481 = vrot.slane %v3480, 4
    %v3482 = vadd.f32 %v3480, %v3481
    %v3483 = vrot.slane %v3482, 2
    %v3484 = vadd.f32 %v3482, %v3483
    %v3485 = vrot.slane %v3484, 1
    %v3486 = vadd.f32 %v3484, %v3485
    %v3487 = vrcp.pop %v3486
    %v3488 = vmul.f32 %v3479, %v3487
    %3489 = vst.msk [vmem:[%s15] sm:$0xff] %vm3468, %v3488
    // Predicated region
    $region58: #{bert_gru_forward.1} parent=1 // pred_check
      _
    $region59: #{bert_gru_forward.1} parent=1 // pred_check_branch
      %3491 = sbr.rel (0) target = $region61
    $region60: #{bert_gru_forward.1} parent=1 // pred_region
      %s3493 = ssub.s32 16, 16
      %3494 = vsyncadd [#allocation6], %s3493
      %s3496 = sshll.u32 [#allocation7], 4
      %s3497 = int_to_ptr.vmem [resolvable:$true] %s3496
      %3499 = dma.vmem_to_hbm [thread:$0]  %s3497, 16, %s13, [#allocation6]
    $region61: #{bert_gru_forward.1} parent=1 // pred_fallthru
      _
    // Predicated region
    $region62: #{bert_gru_forward.1} parent=1 // pred_check
      _
    $region63: #{bert_gru_forward.1} parent=1 // pred_check_branch
      %3501 = sbr.rel (0) target = $region65
    $region64: #{bert_gru_forward.1} parent=1 // pred_region
      _
    $region65: #{bert_gru_forward.1} parent=1 // pred_fallthru
      _
    // Predicated region
    $region66: #{bert_gru_forward.1} parent=1 // pred_check
      _
    $region67: #{bert_gru_forward.1} parent=1 // pred_check_branch
      %3503 = sbr.rel (0) target = $region69
    $region68: #{bert_gru_forward.1} parent=1 // pred_region
      _
    $region69: #{bert_gru_forward.1} parent=1 // pred_fallthru
      _
    // Predicated region
    $region70: #{bert_gru_forward.1} parent=1 // pred_check
      _
    $region71: #{bert_gru_forward.1} parent=1 // pred_check_branch
      %3505 = sbr.rel (0) target = $region73
    $region72: #{bert_gru_forward.1} parent=1 // pred_region
      %3506 = dma.done [#allocation6], 16
    $region73: #{bert_gru_forward.1} parent=1 // pred_fallthru
      _
    // Predicated region
    $region74: #{bert_gru_forward.1} parent=1 // pred_check
      _
    $region75: #{bert_gru_forward.1} parent=1 // pred_check_branch
      %3508 = sbr.rel (0) target = $region77
    $region76: #{bert_gru_forward.1} parent=1 // pred_region
      _
    $region77: #{bert_gru_forward.1} parent=1 // pred_fallthru
      _
    // Predicated region
    $region78: #{bert_gru_forward.1} parent=1 // pred_check
      _
    $region79: #{bert_gru_forward.1} parent=1 // pred_check_branch
      %3510 = sbr.rel (0) target = $region81
    $region80: #{bert_gru_forward.1} parent=1 // pred_region
      _
    $region81: #{bert_gru_forward.1} parent=1 // pred_fallthru
      _
    %3511 = vsyncpa [#allocation5], 1
    %3512 = vsyncpa [#allocation6], 1

</llo_original>
